<compile_context>
chip_gen: v7x
topology: tpu7x:2x2x1
jax: 0.10.0
libtpu: 0.0.40
codegen_flags: <defaults>
</compile_context>

<pallas_src>
import jax
import jax.numpy as jnp
from jax import lax
from jax.experimental import pallas as pl
from jax.experimental.pallas import tpu as pltpu

EPS = 1e-5  # BatchNorm eps

# Hidden (stage-1 output) columns are stored in "evens then odds" order so that the
# stage-2 im2col producer only needs contiguous static slices.
_H = (0, 2, 4, 6, 8, 10, 1, 3, 5, 7, 9, 11)
# Stage-1 conv columns (24 of them) are permuted in the wrapper so that
#   position p      holds conv column 2*_H[p]
#   position 12 + p holds conv column 2*_H[p] + 1
# -> width pooling = max(first 12 positions, last 12 positions), result in _H order.
_PERM = tuple(2 * h for h in _H) + tuple(2 * h + 1 for h in _H)
# Producer slice starts (into the _H-ordered pooled columns) for the stage-2 im2col:
# even conv cols {0,2,4,6} + kw  and  odd conv cols {1,3,5,7} + kw, kw = 0..4.
_E_START = (0, 6, 1, 7, 2)
_O_START = (6, 1, 7, 2, 8)


def _man_kernel(x_ref, w1_ref, b1_ref, w2_ref, b2_ref, out_ref, h1_ref):
    B = x_ref.shape[0]
    w1v = w1_ref[...]                                        # (90, 64) bf16
    # Hoisted bias broadcasts (JAX does not CSE broadcast_in_dim inside unrolled loops).
    b1b = jnp.broadcast_to(b1_ref[...], (B, 2, 12, 32))      # folded conv-bias + BN shift
    b2b = jnp.broadcast_to(b2_ref[...], (B, 4, 48))

    # ----- stage 1: conv1(3->32, k5; kh+kw folded -> K=90, paired conv rows -> N=64)
    #       + BN1 + maxpool2 + ReLU, then the stage-2 im2col into the bf16 scratch.
    for t in range(6):                                       # pooled-row pairs, unrolled
        lhs = x_ref[:, t].reshape(B * 48, 90)                # bf16, 48 rows per image
        acc = jnp.dot(lhs, w1v, preferred_element_type=jnp.float32)   # (B*48, 64)
        rowmax = jnp.maximum(acc[:, :32], acc[:, 32:])       # pool over H (paired rows)
        r4 = rowmax.reshape(B, 2, 24, 32)
        pooled = jnp.maximum(r4[:, :, :12, :], r4[:, :, 12:, :])  # pool over W (perm halves)
        pooled = jnp.maximum(pooled + b1b, 0.0)              # bias + ReLU, (B, 2, 12, 32)
        for h in range(2):                                   # the two pooled rows of the pair
            prow = pooled[:, h]                              # (B, 12, 32), cols in _H order
            # stage-2 im2col rows = conv2 cols [0,2,4,6, 1,3,5,7]; lanes = kw*32 + c.
            even = jnp.concatenate([prow[:, s:s + 4, :] for s in _E_START], axis=-1)
            odd = jnp.concatenate([prow[:, s:s + 4, :] for s in _O_START], axis=-1)
            blk = jnp.concatenate([even, odd], axis=1)       # (B, 8, 160)
            h1_ref[2 * t + h] = blk.reshape(B * 8, 160).astype(jnp.bfloat16)

    # ----- stage 2: conv2(32->48, k5; kw folded -> K=160, paired rows -> N=96) + BN2
    #       + Dropout2d(identity at eval) + maxpool2 + ReLU.  One full-block store.
    blocks = []
    for i in range(4):                                       # paired conv2 output rows
        acc = jnp.dot(h1_ref[2 * i], w2_ref[0], preferred_element_type=jnp.float32)
        for j in range(1, 6):                                # hidden rows 2i .. 2i+5
            acc = acc + jnp.dot(h1_ref[2 * i + j], w2_ref[j],
                                preferred_element_type=jnp.float32)    # (B*8, 96)
        rowmax = jnp.maximum(acc[:, :48], acc[:, 48:])       # pool over H
        r3 = rowmax.reshape(B, 8, 48)
        pooled = jnp.maximum(r3[:, :4, :], r3[:, 4:, :])     # pool over W (perm halves)
        blocks.append(jnp.maximum(pooled + b2b, 0.0))        # (B, 4, 48)
    out_ref[...] = jnp.concatenate(blocks, axis=1)           # (B, 16, 48), single store


def fold_params(raw):
    """Fold conv bias + BatchNorm running stats into the weights / a per-channel bias,
    reshape to matmul layout, and pair consecutive conv rows along the output axis."""
    w1, bc1, g1, be1, rm1, rv1, w2, bc2, g2, be2, rm2, rv2 = raw
    s1 = g1 / jnp.sqrt(rv1 + EPS)
    b1 = be1 + (bc1 - rm1) * s1
    s2 = g2 / jnp.sqrt(rv2 + EPS)
    b2 = be2 + (bc2 - rm2) * s2
    # (O, I, KH, KW) -> (KH, KW*I, O); fold BN scale into the output channels.
    w1r = jnp.transpose(w1, (2, 3, 1, 0)).reshape(5, 15, 32) * s1[None, None, :]
    w2r = jnp.transpose(w2, (2, 3, 1, 0)).reshape(5, 160, 48) * s2[None, None, :]

    def pair(w):
        z = jnp.zeros_like(w[:1])
        lo = jnp.concatenate([w, z], axis=0)          # j -> W[j]   (j <= 4) else 0
        hi = jnp.concatenate([z, w], axis=0)          # j -> W[j-1] (j >= 1) else 0
        return jnp.concatenate([lo, hi], axis=-1)     # (6, K, 2*Cout)

    w1p = pair(w1r).reshape(90, 64).astype(jnp.bfloat16)     # kh folded into K
    w2p = pair(w2r).astype(jnp.bfloat16)                     # (6, 160, 96)
    return (w1p, b1.reshape(1, 1, 32).astype(jnp.float32),
            w2p, b2.reshape(1, 1, 48).astype(jnp.float32))


def man_feature_forward(x_nchw, folded, b_tile=32):
    w1p, b1, w2p, b2 = folded
    n = x_nchw.shape[0]
    # Keep at least 2 grid steps when possible (v7x has 2 TensorCores on the parallel axis).
    if n >= 2 * b_tile:
        bt = b_tile
    else:
        bt = max(1, (n + 1) // 2)
    n_pad = ((n + bt - 1) // bt) * bt

    # NCHW -> NHWC, full kh/kw-folded im2col for the row-paired conv (K = 6*5*3 = 90),
    # with the width-pool column permutation baked in, shipped to the kernel in bf16.
    x_nhwc = jnp.transpose(x_nchw, (0, 2, 3, 1)).astype(jnp.float32)        # (n, 28, 28, 3)
    win = jnp.concatenate([x_nhwc[:, :, kw:kw + 24, :] for kw in range(5)], axis=-1)
    x_cat = win[:, :, jnp.array(_PERM), :]                                  # (n, 28, 24, 15)
    row_idx = 2 * jnp.arange(12)[:, None] + jnp.arange(6)[None, :]          # (12, 6)
    x6 = x_cat[:, row_idx]                                                  # (n, 12, 6, 24, 15)
    x_flat = jnp.transpose(x6, (0, 1, 3, 2, 4)).reshape(n, 12, 24, 90)
    x_flat = x_flat.reshape(n, 6, 48, 90).astype(jnp.bfloat16)              # pooled-row pairs
    if n_pad != n:
        x_flat = jnp.concatenate(
            [x_flat, jnp.zeros((n_pad - n, 6, 48, 90), jnp.bfloat16)], axis=0)

    out = pl.pallas_call(
        _man_kernel,
        out_shape=jax.ShapeDtypeStruct((n_pad, 16, 48), jnp.float32),
        grid=(n_pad // bt,),
        in_specs=[
            pl.BlockSpec((bt, 6, 48, 90), lambda g: (g, 0, 0, 0)),  # bf16 im2col'd images
            pl.BlockSpec((90, 64), lambda g: (0, 0)),               # paired conv1 weights
            pl.BlockSpec((1, 1, 32), lambda g: (0, 0, 0)),          # folded bias 1 (f32)
            pl.BlockSpec((6, 160, 96), lambda g: (0, 0, 0)),        # paired conv2 weights
            pl.BlockSpec((1, 1, 48), lambda g: (0, 0, 0)),          # folded bias 2 (f32)
        ],
        out_specs=pl.BlockSpec((bt, 16, 48), lambda g: (g, 0, 0)),
        scratch_shapes=[pltpu.VMEM((12, bt * 8, 160), jnp.bfloat16)],  # stage-2 im2col
        compiler_params=pltpu.CompilerParams(
            dimension_semantics=("parallel",),
            vmem_limit_bytes=40 * 1024 * 1024),
    )(x_flat, w1p, b1, w2p, b2)

    out = out[:n]
    # (N, 4*4, 48) [HWC order] -> PyTorch view(-1, 48*4*4) which flattens CHW.
    return jnp.transpose(out.reshape(n, 4, 4, 48), (0, 3, 1, 2)).reshape(n, 48 * 4 * 4)


def reference(x_nchw, raw):
    """Pure-JAX reference matching the PyTorch module (eval mode)."""
    w1, bc1, g1, be1, rm1, rv1, w2, bc2, g2, be2, rm2, rv2 = raw
    dn = ("NCHW", "OIHW", "NCHW")

    def bn(y, g, be, rm, rv):
        return (y - rm[None, :, None, None]) / jnp.sqrt(rv[None, :, None, None] + EPS) \
            * g[None, :, None, None] + be[None, :, None, None]

    def pool(y):
        return lax.reduce_window(y, -jnp.inf, lax.max, (1, 1, 2, 2), (1, 1, 2, 2), "VALID")

    y = lax.conv_general_dilated(x_nchw, w1, (1, 1), "VALID", dimension_numbers=dn)
    y = y + bc1[None, :, None, None]
    y = jnp.maximum(pool(bn(y, g1, be1, rm1, rv1)), 0.0)
    y = lax.conv_general_dilated(y, w2, (1, 1), "VALID", dimension_numbers=dn)
    y = y + bc2[None, :, None, None]
    y = jnp.maximum(pool(bn(y, g2, be2, rm2, rv2)), 0.0)
    return y.reshape(x_nchw.shape[0], 48 * 4 * 4)


if __name__ == "__main__":
    key = jax.random.PRNGKey(0)
    keys = jax.random.split(key, 13)
    (kx, k1, k2, k3, k4, k5, k6, k7, k8, k9, k10, k11, k12) = keys

    # Input consistent with the module's "digits" branch: (N, 3, 28, 28).
    x = jax.random.normal(kx, (4, 3, 28, 28), jnp.float32)

    # Deterministic parameter init (shapes from the module __init__), non-trivial BN stats.
    w1 = jax.random.normal(k1, (32, 3, 5, 5), jnp.float32) * 0.1
    bc1 = jax.random.normal(k2, (32,), jnp.float32) * 0.1
    w2 = jax.random.normal(k3, (48, 32, 5, 5), jnp.float32) * 0.05
    bc2 = jax.random.normal(k4, (48,), jnp.float32) * 0.05
    g1 = 1.0 + 0.1 * jax.random.normal(k5, (32,), jnp.float32)
    be1 = 0.1 * jax.random.normal(k6, (32,), jnp.float32)
    rm1 = 0.1 * jax.random.normal(k7, (32,), jnp.float32)
    rv1 = 1.0 + 0.5 * jax.random.uniform(k8, (32,), jnp.float32)
    g2 = 1.0 + 0.1 * jax.random.normal(k9, (48,), jnp.float32)
    be2 = 0.1 * jax.random.normal(k10, (48,), jnp.float32)
    rm2 = 0.1 * jax.random.normal(k11, (48,), jnp.float32)
    rv2 = 1.0 + 0.5 * jax.random.uniform(k12, (48,), jnp.float32)
    raw = (w1, bc1, g1, be1, rm1, rv1, w2, bc2, g2, be2, rm2, rv2)

    feat = man_feature_forward(x, fold_params(raw))
    feat = jax.block_until_ready(feat)
    assert feat.shape == (4, 48 * 4 * 4), feat.shape

    ref = jax.block_until_ready(reference(x, raw))
    max_err = float(jnp.max(jnp.abs(feat - ref)))
    assert jnp.allclose(feat, ref, atol=5e-2, rtol=5e-2), f"max abs err = {max_err}"

    print("KERNEL_OK")
</pallas_src>

<mosaic_0001>
module attributes {stable_mosaic.version = 11 : i64} {
  func.func @_man_kernel(%arg0: i32, %arg1: memref<2x6x48x90xbf16, #tpu.memory_space<vmem>>, %arg2: memref<90x64xbf16, #tpu.memory_space<vmem>>, %arg3: memref<1x1x32xf32, #tpu.memory_space<vmem>>, %arg4: memref<6x160x96xbf16, #tpu.memory_space<vmem>>, %arg5: memref<1x1x48xf32, #tpu.memory_space<vmem>>, %arg6: memref<2x16x48xf32, #tpu.memory_space<vmem>>, %arg7: memref<12x16x160xbf16, #tpu.memory_space<vmem>>) attributes {dimension_semantics = [#tpu.dimension_semantics<parallel>], iteration_bounds = array<i64: 2>, scalar_prefetch = 0 : i64, scratch_operands = 1 : i64, tpu.core_type = #tpu.core_type<tc>, window_params = [{transform_indices = @transform_0, window_bounds = array<i64: 2, 6, 48, 90>}, {pipeline_mode = #tpu.pipeline_mode<synchronous>, transform_indices = @transform_1, window_bounds = array<i64: 90, 64>}, {pipeline_mode = #tpu.pipeline_mode<synchronous>, transform_indices = @transform_2, window_bounds = array<i64: 1, 1, 32>}, {pipeline_mode = #tpu.pipeline_mode<synchronous>, transform_indices = @transform_3, window_bounds = array<i64: 6, 160, 96>}, {pipeline_mode = #tpu.pipeline_mode<synchronous>, transform_indices = @transform_4, window_bounds = array<i64: 1, 1, 48>}, {transform_indices = @transform_5, window_bounds = array<i64: 2, 16, 48>}]} {
    %c0 = arith.constant 0 : index
    %c0_0 = arith.constant 0 : index
    %0 = vector.load %arg2[%c0, %c0_0] : memref<90x64xbf16, #tpu.memory_space<vmem>>, vector<90x64xbf16>
    %c0_1 = arith.constant 0 : index
    %c0_2 = arith.constant 0 : index
    %c0_3 = arith.constant 0 : index
    %1 = vector.load %arg3[%c0_1, %c0_2, %c0_3] : memref<1x1x32xf32, #tpu.memory_space<vmem>>, vector<1x1x32xf32>
    %2 = vector.shape_cast %1 : vector<1x1x32xf32> to vector<1x1x1x32xf32>
    %3 = vector.broadcast %2 : vector<1x1x1x32xf32> to vector<2x2x12x32xf32>
    %c0_4 = arith.constant 0 : index
    %c0_5 = arith.constant 0 : index
    %c0_6 = arith.constant 0 : index
    %4 = vector.load %arg5[%c0_4, %c0_5, %c0_6] : memref<1x1x48xf32, #tpu.memory_space<vmem>>, vector<1x1x48xf32>
    %5 = vector.shape_cast %4 : vector<1x1x48xf32> to vector<1x1x48xf32>
    %6 = vector.broadcast %5 : vector<1x1x48xf32> to vector<2x4x48xf32>
    %c0_7 = arith.constant 0 : index
    %c0_8 = arith.constant 0 : index
    %c0_9 = arith.constant 0 : index
    %c0_10 = arith.constant 0 : index
    %7 = vector.load %arg1[%c0_7, %c0_8, %c0_9, %c0_10] : memref<2x6x48x90xbf16, #tpu.memory_space<vmem>>, vector<2x1x48x90xbf16>
    %8 = vector.shape_cast %7 : vector<2x1x48x90xbf16> to vector<2x48x90xbf16>
    %9 = vector.shape_cast %8 : vector<2x48x90xbf16> to vector<96x90xbf16>
    %cst = arith.constant dense<0.000000e+00> : vector<96x64xf32>
    %10 = tpu.matmul %9, %0, %cst {dimension_numbers = #tpu.dot_dimension_numbers<[1], [0], [0], [1], [0, 0, 1, 1], [], []>} : vector<96x90xbf16>, vector<90x64xbf16>, vector<96x64xf32> -> vector<96x64xf32>
    %11 = vector.extract_strided_slice %10 {offsets = [0, 0], sizes = [96, 32], strides = [1, 1]} : vector<96x64xf32> to vector<96x32xf32>
    %12 = vector.extract_strided_slice %10 {offsets = [0, 32], sizes = [96, 32], strides = [1, 1]} : vector<96x64xf32> to vector<96x32xf32>
    %13 = arith.maximumf %11, %12 : vector<96x32xf32>
    %14 = vector.shape_cast %13 : vector<96x32xf32> to vector<2x2x24x32xf32>
    %15 = vector.extract_strided_slice %14 {offsets = [0, 0, 0, 0], sizes = [2, 2, 12, 32], strides = [1, 1, 1, 1]} : vector<2x2x24x32xf32> to vector<2x2x12x32xf32>
    %16 = vector.extract_strided_slice %14 {offsets = [0, 0, 12, 0], sizes = [2, 2, 12, 32], strides = [1, 1, 1, 1]} : vector<2x2x24x32xf32> to vector<2x2x12x32xf32>
    %17 = arith.maximumf %15, %16 : vector<2x2x12x32xf32>
    %18 = arith.addf %17, %3 : vector<2x2x12x32xf32>
    %cst_11 = arith.constant 0.000000e+00 : f32
    %19 = vector.broadcast %cst_11 : f32 to vector<2x2x12x32xf32>
    %20 = arith.maximumf %18, %19 : vector<2x2x12x32xf32>
    %21 = vector.extract_strided_slice %20 {offsets = [0, 0, 0, 0], sizes = [2, 1, 12, 32], strides = [1, 1, 1, 1]} : vector<2x2x12x32xf32> to vector<2x1x12x32xf32>
    %22 = vector.shape_cast %21 : vector<2x1x12x32xf32> to vector<2x12x32xf32>
    %23 = vector.extract_strided_slice %22 {offsets = [0, 0, 0], sizes = [2, 4, 32], strides = [1, 1, 1]} : vector<2x12x32xf32> to vector<2x4x32xf32>
    %24 = vector.extract_strided_slice %22 {offsets = [0, 6, 0], sizes = [2, 4, 32], strides = [1, 1, 1]} : vector<2x12x32xf32> to vector<2x4x32xf32>
    %25 = vector.extract_strided_slice %22 {offsets = [0, 1, 0], sizes = [2, 4, 32], strides = [1, 1, 1]} : vector<2x12x32xf32> to vector<2x4x32xf32>
    %26 = vector.extract_strided_slice %22 {offsets = [0, 7, 0], sizes = [2, 4, 32], strides = [1, 1, 1]} : vector<2x12x32xf32> to vector<2x4x32xf32>
    %27 = vector.extract_strided_slice %22 {offsets = [0, 2, 0], sizes = [2, 4, 32], strides = [1, 1, 1]} : vector<2x12x32xf32> to vector<2x4x32xf32>
    %28 = tpu.concatenate %23, %24, %25, %26, %27 in 2 : vector<2x4x32xf32>, vector<2x4x32xf32>, vector<2x4x32xf32>, vector<2x4x32xf32>, vector<2x4x32xf32> -> vector<2x4x160xf32>
    %29 = vector.extract_strided_slice %22 {offsets = [0, 6, 0], sizes = [2, 4, 32], strides = [1, 1, 1]} : vector<2x12x32xf32> to vector<2x4x32xf32>
    %30 = vector.extract_strided_slice %22 {offsets = [0, 1, 0], sizes = [2, 4, 32], strides = [1, 1, 1]} : vector<2x12x32xf32> to vector<2x4x32xf32>
    %31 = vector.extract_strided_slice %22 {offsets = [0, 7, 0], sizes = [2, 4, 32], strides = [1, 1, 1]} : vector<2x12x32xf32> to vector<2x4x32xf32>
    %32 = vector.extract_strided_slice %22 {offsets = [0, 2, 0], sizes = [2, 4, 32], strides = [1, 1, 1]} : vector<2x12x32xf32> to vector<2x4x32xf32>
    %33 = vector.extract_strided_slice %22 {offsets = [0, 8, 0], sizes = [2, 4, 32], strides = [1, 1, 1]} : vector<2x12x32xf32> to vector<2x4x32xf32>
    %34 = tpu.concatenate %29, %30, %31, %32, %33 in 2 : vector<2x4x32xf32>, vector<2x4x32xf32>, vector<2x4x32xf32>, vector<2x4x32xf32>, vector<2x4x32xf32> -> vector<2x4x160xf32>
    %35 = tpu.concatenate %28, %34 in 1 : vector<2x4x160xf32>, vector<2x4x160xf32> -> vector<2x8x160xf32>
    %36 = vector.shape_cast %35 : vector<2x8x160xf32> to vector<16x160xf32>
    %37 = arith.truncf %36 : vector<16x160xf32> to vector<16x160xbf16>
    %c0_12 = arith.constant 0 : index
    %c0_13 = arith.constant 0 : index
    %c0_14 = arith.constant 0 : index
    %38 = vector.load %arg7[%c0_12, %c0_13, %c0_14] : memref<12x16x160xbf16, #tpu.memory_space<vmem>>, vector<1x16x160xbf16>
    %39 = vector.shape_cast %38 : vector<1x16x160xbf16> to vector<16x160xbf16>
    %40 = vector.shape_cast %37 : vector<16x160xbf16> to vector<1x16x160xbf16>
    tpu.vector_store %arg7[%c0_12, %c0_13, %c0_14], %40 {strides = array<i32>} : memref<12x16x160xbf16, #tpu.memory_space<vmem>>, vector<1x16x160xbf16>,
    %41 = vector.extract_strided_slice %20 {offsets = [0, 1, 0, 0], sizes = [2, 1, 12, 32], strides = [1, 1, 1, 1]} : vector<2x2x12x32xf32> to vector<2x1x12x32xf32>
    %42 = vector.shape_cast %41 : vector<2x1x12x32xf32> to vector<2x12x32xf32>
    %43 = vector.extract_strided_slice %42 {offsets = [0, 0, 0], sizes = [2, 4, 32], strides = [1, 1, 1]} : vector<2x12x32xf32> to vector<2x4x32xf32>
    %44 = vector.extract_strided_slice %42 {offsets = [0, 6, 0], sizes = [2, 4, 32], strides = [1, 1, 1]} : vector<2x12x32xf32> to vector<2x4x32xf32>
    %45 = vector.extract_strided_slice %42 {offsets = [0, 1, 0], sizes = [2, 4, 32], strides = [1, 1, 1]} : vector<2x12x32xf32> to vector<2x4x32xf32>
    %46 = vector.extract_strided_slice %42 {offsets = [0, 7, 0], sizes = [2, 4, 32], strides = [1, 1, 1]} : vector<2x12x32xf32> to vector<2x4x32xf32>
    %47 = vector.extract_strided_slice %42 {offsets = [0, 2, 0], sizes = [2, 4, 32], strides = [1, 1, 1]} : vector<2x12x32xf32> to vector<2x4x32xf32>
    %48 = tpu.concatenate %43, %44, %45, %46, %47 in 2 : vector<2x4x32xf32>, vector<2x4x32xf32>, vector<2x4x32xf32>, vector<2x4x32xf32>, vector<2x4x32xf32> -> vector<2x4x160xf32>
    %49 = vector.extract_strided_slice %42 {offsets = [0, 6, 0], sizes = [2, 4, 32], strides = [1, 1, 1]} : vector<2x12x32xf32> to vector<2x4x32xf32>
    %50 = vector.extract_strided_slice %42 {offsets = [0, 1, 0], sizes = [2, 4, 32], strides = [1, 1, 1]} : vector<2x12x32xf32> to vector<2x4x32xf32>
    %51 = vector.extract_strided_slice %42 {offsets = [0, 7, 0], sizes = [2, 4, 32], strides = [1, 1, 1]} : vector<2x12x32xf32> to vector<2x4x32xf32>
    %52 = vector.extract_strided_slice %42 {offsets = [0, 2, 0], sizes = [2, 4, 32], strides = [1, 1, 1]} : vector<2x12x32xf32> to vector<2x4x32xf32>
    %53 = vector.extract_strided_slice %42 {offsets = [0, 8, 0], sizes = [2, 4, 32], strides = [1, 1, 1]} : vector<2x12x32xf32> to vector<2x4x32xf32>
    %54 = tpu.concatenate %49, %50, %51, %52, %53 in 2 : vector<2x4x32xf32>, vector<2x4x32xf32>, vector<2x4x32xf32>, vector<2x4x32xf32>, vector<2x4x32xf32> -> vector<2x4x160xf32>
    %55 = tpu.concatenate %48, %54 in 1 : vector<2x4x160xf32>, vector<2x4x160xf32> -> vector<2x8x160xf32>
    %56 = vector.shape_cast %55 : vector<2x8x160xf32> to vector<16x160xf32>
    %57 = arith.truncf %56 : vector<16x160xf32> to vector<16x160xbf16>
    %c1 = arith.constant 1 : index
    %c0_15 = arith.constant 0 : index
    %c0_16 = arith.constant 0 : index
    %58 = vector.load %arg7[%c1, %c0_15, %c0_16] : memref<12x16x160xbf16, #tpu.memory_space<vmem>>, vector<1x16x160xbf16>
    %59 = vector.shape_cast %58 : vector<1x16x160xbf16> to vector<16x160xbf16>
    %60 = vector.shape_cast %57 : vector<16x160xbf16> to vector<1x16x160xbf16>
    tpu.vector_store %arg7[%c1, %c0_15, %c0_16], %60 {strides = array<i32>} : memref<12x16x160xbf16, #tpu.memory_space<vmem>>, vector<1x16x160xbf16>,
    %c0_17 = arith.constant 0 : index
    %c1_18 = arith.constant 1 : index
    %c0_19 = arith.constant 0 : index
    %c0_20 = arith.constant 0 : index
    %61 = vector.load %arg1[%c0_17, %c1_18, %c0_19, %c0_20] : memref<2x6x48x90xbf16, #tpu.memory_space<vmem>>, vector<2x1x48x90xbf16>
    %62 = vector.shape_cast %61 : vector<2x1x48x90xbf16> to vector<2x48x90xbf16>
    %63 = vector.shape_cast %62 : vector<2x48x90xbf16> to vector<96x90xbf16>
    %cst_21 = arith.constant dense<0.000000e+00> : vector<96x64xf32>
    %64 = tpu.matmul %63, %0, %cst_21 {dimension_numbers = #tpu.dot_dimension_numbers<[1], [0], [0], [1], [0, 0, 1, 1], [], []>} : vector<96x90xbf16>, vector<90x64xbf16>, vector<96x64xf32> -> vector<96x64xf32>
    %65 = vector.extract_strided_slice %64 {offsets = [0, 0], sizes = [96, 32], strides = [1, 1]} : vector<96x64xf32> to vector<96x32xf32>
    %66 = vector.extract_strided_slice %64 {offsets = [0, 32], sizes = [96, 32], strides = [1, 1]} : vector<96x64xf32> to vector<96x32xf32>
    %67 = arith.maximumf %65, %66 : vector<96x32xf32>
    %68 = vector.shape_cast %67 : vector<96x32xf32> to vector<2x2x24x32xf32>
    %69 = vector.extract_strided_slice %68 {offsets = [0, 0, 0, 0], sizes = [2, 2, 12, 32], strides = [1, 1, 1, 1]} : vector<2x2x24x32xf32> to vector<2x2x12x32xf32>
    %70 = vector.extract_strided_slice %68 {offsets = [0, 0, 12, 0], sizes = [2, 2, 12, 32], strides = [1, 1, 1, 1]} : vector<2x2x24x32xf32> to vector<2x2x12x32xf32>
    %71 = arith.maximumf %69, %70 : vector<2x2x12x32xf32>
    %72 = arith.addf %71, %3 : vector<2x2x12x32xf32>
    %cst_22 = arith.constant 0.000000e+00 : f32
    %73 = vector.broadcast %cst_22 : f32 to vector<2x2x12x32xf32>
    %74 = arith.maximumf %72, %73 : vector<2x2x12x32xf32>
    %75 = vector.extract_strided_slice %74 {offsets = [0, 0, 0, 0], sizes = [2, 1, 12, 32], strides = [1, 1, 1, 1]} : vector<2x2x12x32xf32> to vector<2x1x12x32xf32>
    %76 = vector.shape_cast %75 : vector<2x1x12x32xf32> to vector<2x12x32xf32>
    %77 = vector.extract_strided_slice %76 {offsets = [0, 0, 0], sizes = [2, 4, 32], strides = [1, 1, 1]} : vector<2x12x32xf32> to vector<2x4x32xf32>
    %78 = vector.extract_strided_slice %76 {offsets = [0, 6, 0], sizes = [2, 4, 32], strides = [1, 1, 1]} : vector<2x12x32xf32> to vector<2x4x32xf32>
    %79 = vector.extract_strided_slice %76 {offsets = [0, 1, 0], sizes = [2, 4, 32], strides = [1, 1, 1]} : vector<2x12x32xf32> to vector<2x4x32xf32>
    %80 = vector.extract_strided_slice %76 {offsets = [0, 7, 0], sizes = [2, 4, 32], strides = [1, 1, 1]} : vector<2x12x32xf32> to vector<2x4x32xf32>
    %81 = vector.extract_strided_slice %76 {offsets = [0, 2, 0], sizes = [2, 4, 32], strides = [1, 1, 1]} : vector<2x12x32xf32> to vector<2x4x32xf32>
    %82 = tpu.concatenate %77, %78, %79, %80, %81 in 2 : vector<2x4x32xf32>, vector<2x4x32xf32>, vector<2x4x32xf32>, vector<2x4x32xf32>, vector<2x4x32xf32> -> vector<2x4x160xf32>
    %83 = vector.extract_strided_slice %76 {offsets = [0, 6, 0], sizes = [2, 4, 32], strides = [1, 1, 1]} : vector<2x12x32xf32> to vector<2x4x32xf32>
    %84 = vector.extract_strided_slice %76 {offsets = [0, 1, 0], sizes = [2, 4, 32], strides = [1, 1, 1]} : vector<2x12x32xf32> to vector<2x4x32xf32>
    %85 = vector.extract_strided_slice %76 {offsets = [0, 7, 0], sizes = [2, 4, 32], strides = [1, 1, 1]} : vector<2x12x32xf32> to vector<2x4x32xf32>
    %86 = vector.extract_strided_slice %76 {offsets = [0, 2, 0], sizes = [2, 4, 32], strides = [1, 1, 1]} : vector<2x12x32xf32> to vector<2x4x32xf32>
    %87 = vector.extract_strided_slice %76 {offsets = [0, 8, 0], sizes = [2, 4, 32], strides = [1, 1, 1]} : vector<2x12x32xf32> to vector<2x4x32xf32>
    %88 = tpu.concatenate %83, %84, %85, %86, %87 in 2 : vector<2x4x32xf32>, vector<2x4x32xf32>, vector<2x4x32xf32>, vector<2x4x32xf32>, vector<2x4x32xf32> -> vector<2x4x160xf32>
    %89 = tpu.concatenate %82, %88 in 1 : vector<2x4x160xf32>, vector<2x4x160xf32> -> vector<2x8x160xf32>
    %90 = vector.shape_cast %89 : vector<2x8x160xf32> to vector<16x160xf32>
    %91 = arith.truncf %90 : vector<16x160xf32> to vector<16x160xbf16>
    %c2 = arith.constant 2 : index
    %c0_23 = arith.constant 0 : index
    %c0_24 = arith.constant 0 : index
    %92 = vector.load %arg7[%c2, %c0_23, %c0_24] : memref<12x16x160xbf16, #tpu.memory_space<vmem>>, vector<1x16x160xbf16>
    %93 = vector.shape_cast %92 : vector<1x16x160xbf16> to vector<16x160xbf16>
    %94 = vector.shape_cast %91 : vector<16x160xbf16> to vector<1x16x160xbf16>
    tpu.vector_store %arg7[%c2, %c0_23, %c0_24], %94 {strides = array<i32>} : memref<12x16x160xbf16, #tpu.memory_space<vmem>>, vector<1x16x160xbf16>,
    %95 = vector.extract_strided_slice %74 {offsets = [0, 1, 0, 0], sizes = [2, 1, 12, 32], strides = [1, 1, 1, 1]} : vector<2x2x12x32xf32> to vector<2x1x12x32xf32>
    %96 = vector.shape_cast %95 : vector<2x1x12x32xf32> to vector<2x12x32xf32>
    %97 = vector.extract_strided_slice %96 {offsets = [0, 0, 0], sizes = [2, 4, 32], strides = [1, 1, 1]} : vector<2x12x32xf32> to vector<2x4x32xf32>
    %98 = vector.extract_strided_slice %96 {offsets = [0, 6, 0], sizes = [2, 4, 32], strides = [1, 1, 1]} : vector<2x12x32xf32> to vector<2x4x32xf32>
    %99 = vector.extract_strided_slice %96 {offsets = [0, 1, 0], sizes = [2, 4, 32], strides = [1, 1, 1]} : vector<2x12x32xf32> to vector<2x4x32xf32>
    %100 = vector.extract_strided_slice %96 {offsets = [0, 7, 0], sizes = [2, 4, 32], strides = [1, 1, 1]} : vector<2x12x32xf32> to vector<2x4x32xf32>
    %101 = vector.extract_strided_slice %96 {offsets = [0, 2, 0], sizes = [2, 4, 32], strides = [1, 1, 1]} : vector<2x12x32xf32> to vector<2x4x32xf32>
    %102 = tpu.concatenate %97, %98, %99, %100, %101 in 2 : vector<2x4x32xf32>, vector<2x4x32xf32>, vector<2x4x32xf32>, vector<2x4x32xf32>, vector<2x4x32xf32> -> vector<2x4x160xf32>
    %103 = vector.extract_strided_slice %96 {offsets = [0, 6, 0], sizes = [2, 4, 32], strides = [1, 1, 1]} : vector<2x12x32xf32> to vector<2x4x32xf32>
    %104 = vector.extract_strided_slice %96 {offsets = [0, 1, 0], sizes = [2, 4, 32], strides = [1, 1, 1]} : vector<2x12x32xf32> to vector<2x4x32xf32>
    %105 = vector.extract_strided_slice %96 {offsets = [0, 7, 0], sizes = [2, 4, 32], strides = [1, 1, 1]} : vector<2x12x32xf32> to vector<2x4x32xf32>
    %106 = vector.extract_strided_slice %96 {offsets = [0, 2, 0], sizes = [2, 4, 32], strides = [1, 1, 1]} : vector<2x12x32xf32> to vector<2x4x32xf32>
    %107 = vector.extract_strided_slice %96 {offsets = [0, 8, 0], sizes = [2, 4, 32], strides = [1, 1, 1]} : vector<2x12x32xf32> to vector<2x4x32xf32>
    %108 = tpu.concatenate %103, %104, %105, %106, %107 in 2 : vector<2x4x32xf32>, vector<2x4x32xf32>, vector<2x4x32xf32>, vector<2x4x32xf32>, vector<2x4x32xf32> -> vector<2x4x160xf32>
    %109 = tpu.concatenate %102, %108 in 1 : vector<2x4x160xf32>, vector<2x4x160xf32> -> vector<2x8x160xf32>
    %110 = vector.shape_cast %109 : vector<2x8x160xf32> to vector<16x160xf32>
    %111 = arith.truncf %110 : vector<16x160xf32> to vector<16x160xbf16>
    %c3 = arith.constant 3 : index
    %c0_25 = arith.constant 0 : index
    %c0_26 = arith.constant 0 : index
    %112 = vector.load %arg7[%c3, %c0_25, %c0_26] : memref<12x16x160xbf16, #tpu.memory_space<vmem>>, vector<1x16x160xbf16>
    %113 = vector.shape_cast %112 : vector<1x16x160xbf16> to vector<16x160xbf16>
    %114 = vector.shape_cast %111 : vector<16x160xbf16> to vector<1x16x160xbf16>
    tpu.vector_store %arg7[%c3, %c0_25, %c0_26], %114 {strides = array<i32>} : memref<12x16x160xbf16, #tpu.memory_space<vmem>>, vector<1x16x160xbf16>,
    %c0_27 = arith.constant 0 : index
    %c2_28 = arith.constant 2 : index
    %c0_29 = arith.constant 0 : index
    %c0_30 = arith.constant 0 : index
    %115 = vector.load %arg1[%c0_27, %c2_28, %c0_29, %c0_30] : memref<2x6x48x90xbf16, #tpu.memory_space<vmem>>, vector<2x1x48x90xbf16>
    %116 = vector.shape_cast %115 : vector<2x1x48x90xbf16> to vector<2x48x90xbf16>
    %117 = vector.shape_cast %116 : vector<2x48x90xbf16> to vector<96x90xbf16>
    %cst_31 = arith.constant dense<0.000000e+00> : vector<96x64xf32>
    %118 = tpu.matmul %117, %0, %cst_31 {dimension_numbers = #tpu.dot_dimension_numbers<[1], [0], [0], [1], [0, 0, 1, 1], [], []>} : vector<96x90xbf16>, vector<90x64xbf16>, vector<96x64xf32> -> vector<96x64xf32>
    %119 = vector.extract_strided_slice %118 {offsets = [0, 0], sizes = [96, 32], strides = [1, 1]} : vector<96x64xf32> to vector<96x32xf32>
    %120 = vector.extract_strided_slice %118 {offsets = [0, 32], sizes = [96, 32], strides = [1, 1]} : vector<96x64xf32> to vector<96x32xf32>
    %121 = arith.maximumf %119, %120 : vector<96x32xf32>
    %122 = vector.shape_cast %121 : vector<96x32xf32> to vector<2x2x24x32xf32>
    %123 = vector.extract_strided_slice %122 {offsets = [0, 0, 0, 0], sizes = [2, 2, 12, 32], strides = [1, 1, 1, 1]} : vector<2x2x24x32xf32> to vector<2x2x12x32xf32>
    %124 = vector.extract_strided_slice %122 {offsets = [0, 0, 12, 0], sizes = [2, 2, 12, 32], strides = [1, 1, 1, 1]} : vector<2x2x24x32xf32> to vector<2x2x12x32xf32>
    %125 = arith.maximumf %123, %124 : vector<2x2x12x32xf32>
    %126 = arith.addf %125, %3 : vector<2x2x12x32xf32>
    %cst_32 = arith.constant 0.000000e+00 : f32
    %127 = vector.broadcast %cst_32 : f32 to vector<2x2x12x32xf32>
    %128 = arith.maximumf %126, %127 : vector<2x2x12x32xf32>
    %129 = vector.extract_strided_slice %128 {offsets = [0, 0, 0, 0], sizes = [2, 1, 12, 32], strides = [1, 1, 1, 1]} : vector<2x2x12x32xf32> to vector<2x1x12x32xf32>
    %130 = vector.shape_cast %129 : vector<2x1x12x32xf32> to vector<2x12x32xf32>
    %131 = vector.extract_strided_slice %130 {offsets = [0, 0, 0], sizes = [2, 4, 32], strides = [1, 1, 1]} : vector<2x12x32xf32> to vector<2x4x32xf32>
    %132 = vector.extract_strided_slice %130 {offsets = [0, 6, 0], sizes = [2, 4, 32], strides = [1, 1, 1]} : vector<2x12x32xf32> to vector<2x4x32xf32>
    %133 = vector.extract_strided_slice %130 {offsets = [0, 1, 0], sizes = [2, 4, 32], strides = [1, 1, 1]} : vector<2x12x32xf32> to vector<2x4x32xf32>
    %134 = vector.extract_strided_slice %130 {offsets = [0, 7, 0], sizes = [2, 4, 32], strides = [1, 1, 1]} : vector<2x12x32xf32> to vector<2x4x32xf32>
    %135 = vector.extract_strided_slice %130 {offsets = [0, 2, 0], sizes = [2, 4, 32], strides = [1, 1, 1]} : vector<2x12x32xf32> to vector<2x4x32xf32>
    %136 = tpu.concatenate %131, %132, %133, %134, %135 in 2 : vector<2x4x32xf32>, vector<2x4x32xf32>, vector<2x4x32xf32>, vector<2x4x32xf32>, vector<2x4x32xf32> -> vector<2x4x160xf32>
    %137 = vector.extract_strided_slice %130 {offsets = [0, 6, 0], sizes = [2, 4, 32], strides = [1, 1, 1]} : vector<2x12x32xf32> to vector<2x4x32xf32>
    %138 = vector.extract_strided_slice %130 {offsets = [0, 1, 0], sizes = [2, 4, 32], strides = [1, 1, 1]} : vector<2x12x32xf32> to vector<2x4x32xf32>
    %139 = vector.extract_strided_slice %130 {offsets = [0, 7, 0], sizes = [2, 4, 32], strides = [1, 1, 1]} : vector<2x12x32xf32> to vector<2x4x32xf32>
    %140 = vector.extract_strided_slice %130 {offsets = [0, 2, 0], sizes = [2, 4, 32], strides = [1, 1, 1]} : vector<2x12x32xf32> to vector<2x4x32xf32>
    %141 = vector.extract_strided_slice %130 {offsets = [0, 8, 0], sizes = [2, 4, 32], strides = [1, 1, 1]} : vector<2x12x32xf32> to vector<2x4x32xf32>
    %142 = tpu.concatenate %137, %138, %139, %140, %141 in 2 : vector<2x4x32xf32>, vector<2x4x32xf32>, vector<2x4x32xf32>, vector<2x4x32xf32>, vector<2x4x32xf32> -> vector<2x4x160xf32>
    %143 = tpu.concatenate %136, %142 in 1 : vector<2x4x160xf32>, vector<2x4x160xf32> -> vector<2x8x160xf32>
    %144 = vector.shape_cast %143 : vector<2x8x160xf32> to vector<16x160xf32>
    %145 = arith.truncf %144 : vector<16x160xf32> to vector<16x160xbf16>
    %c4 = arith.constant 4 : index
    %c0_33 = arith.constant 0 : index
    %c0_34 = arith.constant 0 : index
    %146 = vector.load %arg7[%c4, %c0_33, %c0_34] : memref<12x16x160xbf16, #tpu.memory_space<vmem>>, vector<1x16x160xbf16>
    %147 = vector.shape_cast %146 : vector<1x16x160xbf16> to vector<16x160xbf16>
    %148 = vector.shape_cast %145 : vector<16x160xbf16> to vector<1x16x160xbf16>
    tpu.vector_store %arg7[%c4, %c0_33, %c0_34], %148 {strides = array<i32>} : memref<12x16x160xbf16, #tpu.memory_space<vmem>>, vector<1x16x160xbf16>,
    %149 = vector.extract_strided_slice %128 {offsets = [0, 1, 0, 0], sizes = [2, 1, 12, 32], strides = [1, 1, 1, 1]} : vector<2x2x12x32xf32> to vector<2x1x12x32xf32>
    %150 = vector.shape_cast %149 : vector<2x1x12x32xf32> to vector<2x12x32xf32>
    %151 = vector.extract_strided_slice %150 {offsets = [0, 0, 0], sizes = [2, 4, 32], strides = [1, 1, 1]} : vector<2x12x32xf32> to vector<2x4x32xf32>
    %152 = vector.extract_strided_slice %150 {offsets = [0, 6, 0], sizes = [2, 4, 32], strides = [1, 1, 1]} : vector<2x12x32xf32> to vector<2x4x32xf32>
    %153 = vector.extract_strided_slice %150 {offsets = [0, 1, 0], sizes = [2, 4, 32], strides = [1, 1, 1]} : vector<2x12x32xf32> to vector<2x4x32xf32>
    %154 = vector.extract_strided_slice %150 {offsets = [0, 7, 0], sizes = [2, 4, 32], strides = [1, 1, 1]} : vector<2x12x32xf32> to vector<2x4x32xf32>
    %155 = vector.extract_strided_slice %150 {offsets = [0, 2, 0], sizes = [2, 4, 32], strides = [1, 1, 1]} : vector<2x12x32xf32> to vector<2x4x32xf32>
    %156 = tpu.concatenate %151, %152, %153, %154, %155 in 2 : vector<2x4x32xf32>, vector<2x4x32xf32>, vector<2x4x32xf32>, vector<2x4x32xf32>, vector<2x4x32xf32> -> vector<2x4x160xf32>
    %157 = vector.extract_strided_slice %150 {offsets = [0, 6, 0], sizes = [2, 4, 32], strides = [1, 1, 1]} : vector<2x12x32xf32> to vector<2x4x32xf32>
    %158 = vector.extract_strided_slice %150 {offsets = [0, 1, 0], sizes = [2, 4, 32], strides = [1, 1, 1]} : vector<2x12x32xf32> to vector<2x4x32xf32>
    %159 = vector.extract_strided_slice %150 {offsets = [0, 7, 0], sizes = [2, 4, 32], strides = [1, 1, 1]} : vector<2x12x32xf32> to vector<2x4x32xf32>
    %160 = vector.extract_strided_slice %150 {offsets = [0, 2, 0], sizes = [2, 4, 32], strides = [1, 1, 1]} : vector<2x12x32xf32> to vector<2x4x32xf32>
    %161 = vector.extract_strided_slice %150 {offsets = [0, 8, 0], sizes = [2, 4, 32], strides = [1, 1, 1]} : vector<2x12x32xf32> to vector<2x4x32xf32>
    %162 = tpu.concatenate %157, %158, %159, %160, %161 in 2 : vector<2x4x32xf32>, vector<2x4x32xf32>, vector<2x4x32xf32>, vector<2x4x32xf32>, vector<2x4x32xf32> -> vector<2x4x160xf32>
    %163 = tpu.concatenate %156, %162 in 1 : vector<2x4x160xf32>, vector<2x4x160xf32> -> vector<2x8x160xf32>
    %164 = vector.shape_cast %163 : vector<2x8x160xf32> to vector<16x160xf32>
    %165 = arith.truncf %164 : vector<16x160xf32> to vector<16x160xbf16>
    %c5 = arith.constant 5 : index
    %c0_35 = arith.constant 0 : index
    %c0_36 = arith.constant 0 : index
    %166 = vector.load %arg7[%c5, %c0_35, %c0_36] : memref<12x16x160xbf16, #tpu.memory_space<vmem>>, vector<1x16x160xbf16>
    %167 = vector.shape_cast %166 : vector<1x16x160xbf16> to vector<16x160xbf16>
    %168 = vector.shape_cast %165 : vector<16x160xbf16> to vector<1x16x160xbf16>
    tpu.vector_store %arg7[%c5, %c0_35, %c0_36], %168 {strides = array<i32>} : memref<12x16x160xbf16, #tpu.memory_space<vmem>>, vector<1x16x160xbf16>,
    %c0_37 = arith.constant 0 : index
    %c3_38 = arith.constant 3 : index
    %c0_39 = arith.constant 0 : index
    %c0_40 = arith.constant 0 : index
    %169 = vector.load %arg1[%c0_37, %c3_38, %c0_39, %c0_40] : memref<2x6x48x90xbf16, #tpu.memory_space<vmem>>, vector<2x1x48x90xbf16>
    %170 = vector.shape_cast %169 : vector<2x1x48x90xbf16> to vector<2x48x90xbf16>
    %171 = vector.shape_cast %170 : vector<2x48x90xbf16> to vector<96x90xbf16>
    %cst_41 = arith.constant dense<0.000000e+00> : vector<96x64xf32>
    %172 = tpu.matmul %171, %0, %cst_41 {dimension_numbers = #tpu.dot_dimension_numbers<[1], [0], [0], [1], [0, 0, 1, 1], [], []>} : vector<96x90xbf16>, vector<90x64xbf16>, vector<96x64xf32> -> vector<96x64xf32>
    %173 = vector.extract_strided_slice %172 {offsets = [0, 0], sizes = [96, 32], strides = [1, 1]} : vector<96x64xf32> to vector<96x32xf32>
    %174 = vector.extract_strided_slice %172 {offsets = [0, 32], sizes = [96, 32], strides = [1, 1]} : vector<96x64xf32> to vector<96x32xf32>
    %175 = arith.maximumf %173, %174 : vector<96x32xf32>
    %176 = vector.shape_cast %175 : vector<96x32xf32> to vector<2x2x24x32xf32>
    %177 = vector.extract_strided_slice %176 {offsets = [0, 0, 0, 0], sizes = [2, 2, 12, 32], strides = [1, 1, 1, 1]} : vector<2x2x24x32xf32> to vector<2x2x12x32xf32>
    %178 = vector.extract_strided_slice %176 {offsets = [0, 0, 12, 0], sizes = [2, 2, 12, 32], strides = [1, 1, 1, 1]} : vector<2x2x24x32xf32> to vector<2x2x12x32xf32>
    %179 = arith.maximumf %177, %178 : vector<2x2x12x32xf32>
    %180 = arith.addf %179, %3 : vector<2x2x12x32xf32>
    %cst_42 = arith.constant 0.000000e+00 : f32
    %181 = vector.broadcast %cst_42 : f32 to vector<2x2x12x32xf32>
    %182 = arith.maximumf %180, %181 : vector<2x2x12x32xf32>
    %183 = vector.extract_strided_slice %182 {offsets = [0, 0, 0, 0], sizes = [2, 1, 12, 32], strides = [1, 1, 1, 1]} : vector<2x2x12x32xf32> to vector<2x1x12x32xf32>
    %184 = vector.shape_cast %183 : vector<2x1x12x32xf32> to vector<2x12x32xf32>
    %185 = vector.extract_strided_slice %184 {offsets = [0, 0, 0], sizes = [2, 4, 32], strides = [1, 1, 1]} : vector<2x12x32xf32> to vector<2x4x32xf32>
    %186 = vector.extract_strided_slice %184 {offsets = [0, 6, 0], sizes = [2, 4, 32], strides = [1, 1, 1]} : vector<2x12x32xf32> to vector<2x4x32xf32>
    %187 = vector.extract_strided_slice %184 {offsets = [0, 1, 0], sizes = [2, 4, 32], strides = [1, 1, 1]} : vector<2x12x32xf32> to vector<2x4x32xf32>
    %188 = vector.extract_strided_slice %184 {offsets = [0, 7, 0], sizes = [2, 4, 32], strides = [1, 1, 1]} : vector<2x12x32xf32> to vector<2x4x32xf32>
    %189 = vector.extract_strided_slice %184 {offsets = [0, 2, 0], sizes = [2, 4, 32], strides = [1, 1, 1]} : vector<2x12x32xf32> to vector<2x4x32xf32>
    %190 = tpu.concatenate %185, %186, %187, %188, %189 in 2 : vector<2x4x32xf32>, vector<2x4x32xf32>, vector<2x4x32xf32>, vector<2x4x32xf32>, vector<2x4x32xf32> -> vector<2x4x160xf32>
    %191 = vector.extract_strided_slice %184 {offsets = [0, 6, 0], sizes = [2, 4, 32], strides = [1, 1, 1]} : vector<2x12x32xf32> to vector<2x4x32xf32>
    %192 = vector.extract_strided_slice %184 {offsets = [0, 1, 0], sizes = [2, 4, 32], strides = [1, 1, 1]} : vector<2x12x32xf32> to vector<2x4x32xf32>
    %193 = vector.extract_strided_slice %184 {offsets = [0, 7, 0], sizes = [2, 4, 32], strides = [1, 1, 1]} : vector<2x12x32xf32> to vector<2x4x32xf32>
    %194 = vector.extract_strided_slice %184 {offsets = [0, 2, 0], sizes = [2, 4, 32], strides = [1, 1, 1]} : vector<2x12x32xf32> to vector<2x4x32xf32>
    %195 = vector.extract_strided_slice %184 {offsets = [0, 8, 0], sizes = [2, 4, 32], strides = [1, 1, 1]} : vector<2x12x32xf32> to vector<2x4x32xf32>
    %196 = tpu.concatenate %191, %192, %193, %194, %195 in 2 : vector<2x4x32xf32>, vector<2x4x32xf32>, vector<2x4x32xf32>, vector<2x4x32xf32>, vector<2x4x32xf32> -> vector<2x4x160xf32>
    %197 = tpu.concatenate %190, %196 in 1 : vector<2x4x160xf32>, vector<2x4x160xf32> -> vector<2x8x160xf32>
    %198 = vector.shape_cast %197 : vector<2x8x160xf32> to vector<16x160xf32>
    %199 = arith.truncf %198 : vector<16x160xf32> to vector<16x160xbf16>
    %c6 = arith.constant 6 : index
    %c0_43 = arith.constant 0 : index
    %c0_44 = arith.constant 0 : index
    %200 = vector.load %arg7[%c6, %c0_43, %c0_44] : memref<12x16x160xbf16, #tpu.memory_space<vmem>>, vector<1x16x160xbf16>
    %201 = vector.shape_cast %200 : vector<1x16x160xbf16> to vector<16x160xbf16>
    %202 = vector.shape_cast %199 : vector<16x160xbf16> to vector<1x16x160xbf16>
    tpu.vector_store %arg7[%c6, %c0_43, %c0_44], %202 {strides = array<i32>} : memref<12x16x160xbf16, #tpu.memory_space<vmem>>, vector<1x16x160xbf16>,
    %203 = vector.extract_strided_slice %182 {offsets = [0, 1, 0, 0], sizes = [2, 1, 12, 32], strides = [1, 1, 1, 1]} : vector<2x2x12x32xf32> to vector<2x1x12x32xf32>
    %204 = vector.shape_cast %203 : vector<2x1x12x32xf32> to vector<2x12x32xf32>
    %205 = vector.extract_strided_slice %204 {offsets = [0, 0, 0], sizes = [2, 4, 32], strides = [1, 1, 1]} : vector<2x12x32xf32> to vector<2x4x32xf32>
    %206 = vector.extract_strided_slice %204 {offsets = [0, 6, 0], sizes = [2, 4, 32], strides = [1, 1, 1]} : vector<2x12x32xf32> to vector<2x4x32xf32>
    %207 = vector.extract_strided_slice %204 {offsets = [0, 1, 0], sizes = [2, 4, 32], strides = [1, 1, 1]} : vector<2x12x32xf32> to vector<2x4x32xf32>
    %208 = vector.extract_strided_slice %204 {offsets = [0, 7, 0], sizes = [2, 4, 32], strides = [1, 1, 1]} : vector<2x12x32xf32> to vector<2x4x32xf32>
    %209 = vector.extract_strided_slice %204 {offsets = [0, 2, 0], sizes = [2, 4, 32], strides = [1, 1, 1]} : vector<2x12x32xf32> to vector<2x4x32xf32>
    %210 = tpu.concatenate %205, %206, %207, %208, %209 in 2 : vector<2x4x32xf32>, vector<2x4x32xf32>, vector<2x4x32xf32>, vector<2x4x32xf32>, vector<2x4x32xf32> -> vector<2x4x160xf32>
    %211 = vector.extract_strided_slice %204 {offsets = [0, 6, 0], sizes = [2, 4, 32], strides = [1, 1, 1]} : vector<2x12x32xf32> to vector<2x4x32xf32>
    %212 = vector.extract_strided_slice %204 {offsets = [0, 1, 0], sizes = [2, 4, 32], strides = [1, 1, 1]} : vector<2x12x32xf32> to vector<2x4x32xf32>
    %213 = vector.extract_strided_slice %204 {offsets = [0, 7, 0], sizes = [2, 4, 32], strides = [1, 1, 1]} : vector<2x12x32xf32> to vector<2x4x32xf32>
    %214 = vector.extract_strided_slice %204 {offsets = [0, 2, 0], sizes = [2, 4, 32], strides = [1, 1, 1]} : vector<2x12x32xf32> to vector<2x4x32xf32>
    %215 = vector.extract_strided_slice %204 {offsets = [0, 8, 0], sizes = [2, 4, 32], strides = [1, 1, 1]} : vector<2x12x32xf32> to vector<2x4x32xf32>
    %216 = tpu.concatenate %211, %212, %213, %214, %215 in 2 : vector<2x4x32xf32>, vector<2x4x32xf32>, vector<2x4x32xf32>, vector<2x4x32xf32>, vector<2x4x32xf32> -> vector<2x4x160xf32>
    %217 = tpu.concatenate %210, %216 in 1 : vector<2x4x160xf32>, vector<2x4x160xf32> -> vector<2x8x160xf32>
    %218 = vector.shape_cast %217 : vector<2x8x160xf32> to vector<16x160xf32>
    %219 = arith.truncf %218 : vector<16x160xf32> to vector<16x160xbf16>
    %c7 = arith.constant 7 : index
    %c0_45 = arith.constant 0 : index
    %c0_46 = arith.constant 0 : index
    %220 = vector.load %arg7[%c7, %c0_45, %c0_46] : memref<12x16x160xbf16, #tpu.memory_space<vmem>>, vector<1x16x160xbf16>
    %221 = vector.shape_cast %220 : vector<1x16x160xbf16> to vector<16x160xbf16>
    %222 = vector.shape_cast %219 : vector<16x160xbf16> to vector<1x16x160xbf16>
    tpu.vector_store %arg7[%c7, %c0_45, %c0_46], %222 {strides = array<i32>} : memref<12x16x160xbf16, #tpu.memory_space<vmem>>, vector<1x16x160xbf16>,
    %c0_47 = arith.constant 0 : index
    %c4_48 = arith.constant 4 : index
    %c0_49 = arith.constant 0 : index
    %c0_50 = arith.constant 0 : index
    %223 = vector.load %arg1[%c0_47, %c4_48, %c0_49, %c0_50] : memref<2x6x48x90xbf16, #tpu.memory_space<vmem>>, vector<2x1x48x90xbf16>
    %224 = vector.shape_cast %223 : vector<2x1x48x90xbf16> to vector<2x48x90xbf16>
    %225 = vector.shape_cast %224 : vector<2x48x90xbf16> to vector<96x90xbf16>
    %cst_51 = arith.constant dense<0.000000e+00> : vector<96x64xf32>
    %226 = tpu.matmul %225, %0, %cst_51 {dimension_numbers = #tpu.dot_dimension_numbers<[1], [0], [0], [1], [0, 0, 1, 1], [], []>} : vector<96x90xbf16>, vector<90x64xbf16>, vector<96x64xf32> -> vector<96x64xf32>
    %227 = vector.extract_strided_slice %226 {offsets = [0, 0], sizes = [96, 32], strides = [1, 1]} : vector<96x64xf32> to vector<96x32xf32>
    %228 = vector.extract_strided_slice %226 {offsets = [0, 32], sizes = [96, 32], strides = [1, 1]} : vector<96x64xf32> to vector<96x32xf32>
    %229 = arith.maximumf %227, %228 : vector<96x32xf32>
    %230 = vector.shape_cast %229 : vector<96x32xf32> to vector<2x2x24x32xf32>
    %231 = vector.extract_strided_slice %230 {offsets = [0, 0, 0, 0], sizes = [2, 2, 12, 32], strides = [1, 1, 1, 1]} : vector<2x2x24x32xf32> to vector<2x2x12x32xf32>
    %232 = vector.extract_strided_slice %230 {offsets = [0, 0, 12, 0], sizes = [2, 2, 12, 32], strides = [1, 1, 1, 1]} : vector<2x2x24x32xf32> to vector<2x2x12x32xf32>
    %233 = arith.maximumf %231, %232 : vector<2x2x12x32xf32>
    %234 = arith.addf %233, %3 : vector<2x2x12x32xf32>
    %cst_52 = arith.constant 0.000000e+00 : f32
    %235 = vector.broadcast %cst_52 : f32 to vector<2x2x12x32xf32>
    %236 = arith.maximumf %234, %235 : vector<2x2x12x32xf32>
    %237 = vector.extract_strided_slice %236 {offsets = [0, 0, 0, 0], sizes = [2, 1, 12, 32], strides = [1, 1, 1, 1]} : vector<2x2x12x32xf32> to vector<2x1x12x32xf32>
    %238 = vector.shape_cast %237 : vector<2x1x12x32xf32> to vector<2x12x32xf32>
    %239 = vector.extract_strided_slice %238 {offsets = [0, 0, 0], sizes = [2, 4, 32], strides = [1, 1, 1]} : vector<2x12x32xf32> to vector<2x4x32xf32>
    %240 = vector.extract_strided_slice %238 {offsets = [0, 6, 0], sizes = [2, 4, 32], strides = [1, 1, 1]} : vector<2x12x32xf32> to vector<2x4x32xf32>
    %241 = vector.extract_strided_slice %238 {offsets = [0, 1, 0], sizes = [2, 4, 32], strides = [1, 1, 1]} : vector<2x12x32xf32> to vector<2x4x32xf32>
    %242 = vector.extract_strided_slice %238 {offsets = [0, 7, 0], sizes = [2, 4, 32], strides = [1, 1, 1]} : vector<2x12x32xf32> to vector<2x4x32xf32>
    %243 = vector.extract_strided_slice %238 {offsets = [0, 2, 0], sizes = [2, 4, 32], strides = [1, 1, 1]} : vector<2x12x32xf32> to vector<2x4x32xf32>
    %244 = tpu.concatenate %239, %240, %241, %242, %243 in 2 : vector<2x4x32xf32>, vector<2x4x32xf32>, vector<2x4x32xf32>, vector<2x4x32xf32>, vector<2x4x32xf32> -> vector<2x4x160xf32>
    %245 = vector.extract_strided_slice %238 {offsets = [0, 6, 0], sizes = [2, 4, 32], strides = [1, 1, 1]} : vector<2x12x32xf32> to vector<2x4x32xf32>
    %246 = vector.extract_strided_slice %238 {offsets = [0, 1, 0], sizes = [2, 4, 32], strides = [1, 1, 1]} : vector<2x12x32xf32> to vector<2x4x32xf32>
    %247 = vector.extract_strided_slice %238 {offsets = [0, 7, 0], sizes = [2, 4, 32], strides = [1, 1, 1]} : vector<2x12x32xf32> to vector<2x4x32xf32>
    %248 = vector.extract_strided_slice %238 {offsets = [0, 2, 0], sizes = [2, 4, 32], strides = [1, 1, 1]} : vector<2x12x32xf32> to vector<2x4x32xf32>
    %249 = vector.extract_strided_slice %238 {offsets = [0, 8, 0], sizes = [2, 4, 32], strides = [1, 1, 1]} : vector<2x12x32xf32> to vector<2x4x32xf32>
    %250 = tpu.concatenate %245, %246, %247, %248, %249 in 2 : vector<2x4x32xf32>, vector<2x4x32xf32>, vector<2x4x32xf32>, vector<2x4x32xf32>, vector<2x4x32xf32> -> vector<2x4x160xf32>
    %251 = tpu.concatenate %244, %250 in 1 : vector<2x4x160xf32>, vector<2x4x160xf32> -> vector<2x8x160xf32>
    %252 = vector.shape_cast %251 : vector<2x8x160xf32> to vector<16x160xf32>
    %253 = arith.truncf %252 : vector<16x160xf32> to vector<16x160xbf16>
    %c8 = arith.constant 8 : index
    %c0_53 = arith.constant 0 : index
    %c0_54 = arith.constant 0 : index
    %254 = vector.load %arg7[%c8, %c0_53, %c0_54] : memref<12x16x160xbf16, #tpu.memory_space<vmem>>, vector<1x16x160xbf16>
    %255 = vector.shape_cast %254 : vector<1x16x160xbf16> to vector<16x160xbf16>
    %256 = vector.shape_cast %253 : vector<16x160xbf16> to vector<1x16x160xbf16>
    tpu.vector_store %arg7[%c8, %c0_53, %c0_54], %256 {strides = array<i32>} : memref<12x16x160xbf16, #tpu.memory_space<vmem>>, vector<1x16x160xbf16>,
    %257 = vector.extract_strided_slice %236 {offsets = [0, 1, 0, 0], sizes = [2, 1, 12, 32], strides = [1, 1, 1, 1]} : vector<2x2x12x32xf32> to vector<2x1x12x32xf32>
    %258 = vector.shape_cast %257 : vector<2x1x12x32xf32> to vector<2x12x32xf32>
    %259 = vector.extract_strided_slice %258 {offsets = [0, 0, 0], sizes = [2, 4, 32], strides = [1, 1, 1]} : vector<2x12x32xf32> to vector<2x4x32xf32>
    %260 = vector.extract_strided_slice %258 {offsets = [0, 6, 0], sizes = [2, 4, 32], strides = [1, 1, 1]} : vector<2x12x32xf32> to vector<2x4x32xf32>
    %261 = vector.extract_strided_slice %258 {offsets = [0, 1, 0], sizes = [2, 4, 32], strides = [1, 1, 1]} : vector<2x12x32xf32> to vector<2x4x32xf32>
    %262 = vector.extract_strided_slice %258 {offsets = [0, 7, 0], sizes = [2, 4, 32], strides = [1, 1, 1]} : vector<2x12x32xf32> to vector<2x4x32xf32>
    %263 = vector.extract_strided_slice %258 {offsets = [0, 2, 0], sizes = [2, 4, 32], strides = [1, 1, 1]} : vector<2x12x32xf32> to vector<2x4x32xf32>
    %264 = tpu.concatenate %259, %260, %261, %262, %263 in 2 : vector<2x4x32xf32>, vector<2x4x32xf32>, vector<2x4x32xf32>, vector<2x4x32xf32>, vector<2x4x32xf32> -> vector<2x4x160xf32>
    %265 = vector.extract_strided_slice %258 {offsets = [0, 6, 0], sizes = [2, 4, 32], strides = [1, 1, 1]} : vector<2x12x32xf32> to vector<2x4x32xf32>
    %266 = vector.extract_strided_slice %258 {offsets = [0, 1, 0], sizes = [2, 4, 32], strides = [1, 1, 1]} : vector<2x12x32xf32> to vector<2x4x32xf32>
    %267 = vector.extract_strided_slice %258 {offsets = [0, 7, 0], sizes = [2, 4, 32], strides = [1, 1, 1]} : vector<2x12x32xf32> to vector<2x4x32xf32>
    %268 = vector.extract_strided_slice %258 {offsets = [0, 2, 0], sizes = [2, 4, 32], strides = [1, 1, 1]} : vector<2x12x32xf32> to vector<2x4x32xf32>
    %269 = vector.extract_strided_slice %258 {offsets = [0, 8, 0], sizes = [2, 4, 32], strides = [1, 1, 1]} : vector<2x12x32xf32> to vector<2x4x32xf32>
    %270 = tpu.concatenate %265, %266, %267, %268, %269 in 2 : vector<2x4x32xf32>, vector<2x4x32xf32>, vector<2x4x32xf32>, vector<2x4x32xf32>, vector<2x4x32xf32> -> vector<2x4x160xf32>
    %271 = tpu.concatenate %264, %270 in 1 : vector<2x4x160xf32>, vector<2x4x160xf32> -> vector<2x8x160xf32>
    %272 = vector.shape_cast %271 : vector<2x8x160xf32> to vector<16x160xf32>
    %273 = arith.truncf %272 : vector<16x160xf32> to vector<16x160xbf16>
    %c9 = arith.constant 9 : index
    %c0_55 = arith.constant 0 : index
    %c0_56 = arith.constant 0 : index
    %274 = vector.load %arg7[%c9, %c0_55, %c0_56] : memref<12x16x160xbf16, #tpu.memory_space<vmem>>, vector<1x16x160xbf16>
    %275 = vector.shape_cast %274 : vector<1x16x160xbf16> to vector<16x160xbf16>
    %276 = vector.shape_cast %273 : vector<16x160xbf16> to vector<1x16x160xbf16>
    tpu.vector_store %arg7[%c9, %c0_55, %c0_56], %276 {strides = array<i32>} : memref<12x16x160xbf16, #tpu.memory_space<vmem>>, vector<1x16x160xbf16>,
    %c0_57 = arith.constant 0 : index
    %c5_58 = arith.constant 5 : index
    %c0_59 = arith.constant 0 : index
    %c0_60 = arith.constant 0 : index
    %277 = vector.load %arg1[%c0_57, %c5_58, %c0_59, %c0_60] : memref<2x6x48x90xbf16, #tpu.memory_space<vmem>>, vector<2x1x48x90xbf16>
    %278 = vector.shape_cast %277 : vector<2x1x48x90xbf16> to vector<2x48x90xbf16>
    %279 = vector.shape_cast %278 : vector<2x48x90xbf16> to vector<96x90xbf16>
    %cst_61 = arith.constant dense<0.000000e+00> : vector<96x64xf32>
    %280 = tpu.matmul %279, %0, %cst_61 {dimension_numbers = #tpu.dot_dimension_numbers<[1], [0], [0], [1], [0, 0, 1, 1], [], []>} : vector<96x90xbf16>, vector<90x64xbf16>, vector<96x64xf32> -> vector<96x64xf32>
    %281 = vector.extract_strided_slice %280 {offsets = [0, 0], sizes = [96, 32], strides = [1, 1]} : vector<96x64xf32> to vector<96x32xf32>
    %282 = vector.extract_strided_slice %280 {offsets = [0, 32], sizes = [96, 32], strides = [1, 1]} : vector<96x64xf32> to vector<96x32xf32>
    %283 = arith.maximumf %281, %282 : vector<96x32xf32>
    %284 = vector.shape_cast %283 : vector<96x32xf32> to vector<2x2x24x32xf32>
    %285 = vector.extract_strided_slice %284 {offsets = [0, 0, 0, 0], sizes = [2, 2, 12, 32], strides = [1, 1, 1, 1]} : vector<2x2x24x32xf32> to vector<2x2x12x32xf32>
    %286 = vector.extract_strided_slice %284 {offsets = [0, 0, 12, 0], sizes = [2, 2, 12, 32], strides = [1, 1, 1, 1]} : vector<2x2x24x32xf32> to vector<2x2x12x32xf32>
    %287 = arith.maximumf %285, %286 : vector<2x2x12x32xf32>
    %288 = arith.addf %287, %3 : vector<2x2x12x32xf32>
    %cst_62 = arith.constant 0.000000e+00 : f32
    %289 = vector.broadcast %cst_62 : f32 to vector<2x2x12x32xf32>
    %290 = arith.maximumf %288, %289 : vector<2x2x12x32xf32>
    %291 = vector.extract_strided_slice %290 {offsets = [0, 0, 0, 0], sizes = [2, 1, 12, 32], strides = [1, 1, 1, 1]} : vector<2x2x12x32xf32> to vector<2x1x12x32xf32>
    %292 = vector.shape_cast %291 : vector<2x1x12x32xf32> to vector<2x12x32xf32>
    %293 = vector.extract_strided_slice %292 {offsets = [0, 0, 0], sizes = [2, 4, 32], strides = [1, 1, 1]} : vector<2x12x32xf32> to vector<2x4x32xf32>
    %294 = vector.extract_strided_slice %292 {offsets = [0, 6, 0], sizes = [2, 4, 32], strides = [1, 1, 1]} : vector<2x12x32xf32> to vector<2x4x32xf32>
    %295 = vector.extract_strided_slice %292 {offsets = [0, 1, 0], sizes = [2, 4, 32], strides = [1, 1, 1]} : vector<2x12x32xf32> to vector<2x4x32xf32>
    %296 = vector.extract_strided_slice %292 {offsets = [0, 7, 0], sizes = [2, 4, 32], strides = [1, 1, 1]} : vector<2x12x32xf32> to vector<2x4x32xf32>
    %297 = vector.extract_strided_slice %292 {offsets = [0, 2, 0], sizes = [2, 4, 32], strides = [1, 1, 1]} : vector<2x12x32xf32> to vector<2x4x32xf32>
    %298 = tpu.concatenate %293, %294, %295, %296, %297 in 2 : vector<2x4x32xf32>, vector<2x4x32xf32>, vector<2x4x32xf32>, vector<2x4x32xf32>, vector<2x4x32xf32> -> vector<2x4x160xf32>
    %299 = vector.extract_strided_slice %292 {offsets = [0, 6, 0], sizes = [2, 4, 32], strides = [1, 1, 1]} : vector<2x12x32xf32> to vector<2x4x32xf32>
    %300 = vector.extract_strided_slice %292 {offsets = [0, 1, 0], sizes = [2, 4, 32], strides = [1, 1, 1]} : vector<2x12x32xf32> to vector<2x4x32xf32>
    %301 = vector.extract_strided_slice %292 {offsets = [0, 7, 0], sizes = [2, 4, 32], strides = [1, 1, 1]} : vector<2x12x32xf32> to vector<2x4x32xf32>
    %302 = vector.extract_strided_slice %292 {offsets = [0, 2, 0], sizes = [2, 4, 32], strides = [1, 1, 1]} : vector<2x12x32xf32> to vector<2x4x32xf32>
    %303 = vector.extract_strided_slice %292 {offsets = [0, 8, 0], sizes = [2, 4, 32], strides = [1, 1, 1]} : vector<2x12x32xf32> to vector<2x4x32xf32>
    %304 = tpu.concatenate %299, %300, %301, %302, %303 in 2 : vector<2x4x32xf32>, vector<2x4x32xf32>, vector<2x4x32xf32>, vector<2x4x32xf32>, vector<2x4x32xf32> -> vector<2x4x160xf32>
    %305 = tpu.concatenate %298, %304 in 1 : vector<2x4x160xf32>, vector<2x4x160xf32> -> vector<2x8x160xf32>
    %306 = vector.shape_cast %305 : vector<2x8x160xf32> to vector<16x160xf32>
    %307 = arith.truncf %306 : vector<16x160xf32> to vector<16x160xbf16>
    %c10 = arith.constant 10 : index
    %c0_63 = arith.constant 0 : index
    %c0_64 = arith.constant 0 : index
    %308 = vector.load %arg7[%c10, %c0_63, %c0_64] : memref<12x16x160xbf16, #tpu.memory_space<vmem>>, vector<1x16x160xbf16>
    %309 = vector.shape_cast %308 : vector<1x16x160xbf16> to vector<16x160xbf16>
    %310 = vector.shape_cast %307 : vector<16x160xbf16> to vector<1x16x160xbf16>
    tpu.vector_store %arg7[%c10, %c0_63, %c0_64], %310 {strides = array<i32>} : memref<12x16x160xbf16, #tpu.memory_space<vmem>>, vector<1x16x160xbf16>,
    %311 = vector.extract_strided_slice %290 {offsets = [0, 1, 0, 0], sizes = [2, 1, 12, 32], strides = [1, 1, 1, 1]} : vector<2x2x12x32xf32> to vector<2x1x12x32xf32>
    %312 = vector.shape_cast %311 : vector<2x1x12x32xf32> to vector<2x12x32xf32>
    %313 = vector.extract_strided_slice %312 {offsets = [0, 0, 0], sizes = [2, 4, 32], strides = [1, 1, 1]} : vector<2x12x32xf32> to vector<2x4x32xf32>
    %314 = vector.extract_strided_slice %312 {offsets = [0, 6, 0], sizes = [2, 4, 32], strides = [1, 1, 1]} : vector<2x12x32xf32> to vector<2x4x32xf32>
    %315 = vector.extract_strided_slice %312 {offsets = [0, 1, 0], sizes = [2, 4, 32], strides = [1, 1, 1]} : vector<2x12x32xf32> to vector<2x4x32xf32>
    %316 = vector.extract_strided_slice %312 {offsets = [0, 7, 0], sizes = [2, 4, 32], strides = [1, 1, 1]} : vector<2x12x32xf32> to vector<2x4x32xf32>
    %317 = vector.extract_strided_slice %312 {offsets = [0, 2, 0], sizes = [2, 4, 32], strides = [1, 1, 1]} : vector<2x12x32xf32> to vector<2x4x32xf32>
    %318 = tpu.concatenate %313, %314, %315, %316, %317 in 2 : vector<2x4x32xf32>, vector<2x4x32xf32>, vector<2x4x32xf32>, vector<2x4x32xf32>, vector<2x4x32xf32> -> vector<2x4x160xf32>
    %319 = vector.extract_strided_slice %312 {offsets = [0, 6, 0], sizes = [2, 4, 32], strides = [1, 1, 1]} : vector<2x12x32xf32> to vector<2x4x32xf32>
    %320 = vector.extract_strided_slice %312 {offsets = [0, 1, 0], sizes = [2, 4, 32], strides = [1, 1, 1]} : vector<2x12x32xf32> to vector<2x4x32xf32>
    %321 = vector.extract_strided_slice %312 {offsets = [0, 7, 0], sizes = [2, 4, 32], strides = [1, 1, 1]} : vector<2x12x32xf32> to vector<2x4x32xf32>
    %322 = vector.extract_strided_slice %312 {offsets = [0, 2, 0], sizes = [2, 4, 32], strides = [1, 1, 1]} : vector<2x12x32xf32> to vector<2x4x32xf32>
    %323 = vector.extract_strided_slice %312 {offsets = [0, 8, 0], sizes = [2, 4, 32], strides = [1, 1, 1]} : vector<2x12x32xf32> to vector<2x4x32xf32>
    %324 = tpu.concatenate %319, %320, %321, %322, %323 in 2 : vector<2x4x32xf32>, vector<2x4x32xf32>, vector<2x4x32xf32>, vector<2x4x32xf32>, vector<2x4x32xf32> -> vector<2x4x160xf32>
    %325 = tpu.concatenate %318, %324 in 1 : vector<2x4x160xf32>, vector<2x4x160xf32> -> vector<2x8x160xf32>
    %326 = vector.shape_cast %325 : vector<2x8x160xf32> to vector<16x160xf32>
    %327 = arith.truncf %326 : vector<16x160xf32> to vector<16x160xbf16>
    %c11 = arith.constant 11 : index
    %c0_65 = arith.constant 0 : index
    %c0_66 = arith.constant 0 : index
    %328 = vector.load %arg7[%c11, %c0_65, %c0_66] : memref<12x16x160xbf16, #tpu.memory_space<vmem>>, vector<1x16x160xbf16>
    %329 = vector.shape_cast %328 : vector<1x16x160xbf16> to vector<16x160xbf16>
    %330 = vector.shape_cast %327 : vector<16x160xbf16> to vector<1x16x160xbf16>
    tpu.vector_store %arg7[%c11, %c0_65, %c0_66], %330 {strides = array<i32>} : memref<12x16x160xbf16, #tpu.memory_space<vmem>>, vector<1x16x160xbf16>,
    %c0_67 = arith.constant 0 : index
    %c0_68 = arith.constant 0 : index
    %c0_69 = arith.constant 0 : index
    %331 = vector.load %arg7[%c0_67, %c0_68, %c0_69] : memref<12x16x160xbf16, #tpu.memory_space<vmem>>, vector<1x16x160xbf16>
    %332 = vector.shape_cast %331 : vector<1x16x160xbf16> to vector<16x160xbf16>
    %c0_70 = arith.constant 0 : index
    %c0_71 = arith.constant 0 : index
    %c0_72 = arith.constant 0 : index
    %333 = vector.load %arg4[%c0_70, %c0_71, %c0_72] : memref<6x160x96xbf16, #tpu.memory_space<vmem>>, vector<1x160x96xbf16>
    %334 = vector.shape_cast %333 : vector<1x160x96xbf16> to vector<160x96xbf16>
    %cst_73 = arith.constant dense<0.000000e+00> : vector<16x96xf32>
    %335 = tpu.matmul %332, %334, %cst_73 {dimension_numbers = #tpu.dot_dimension_numbers<[1], [0], [0], [1], [0, 0, 1, 1], [], []>} : vector<16x160xbf16>, vector<160x96xbf16>, vector<16x96xf32> -> vector<16x96xf32>
    %c1_74 = arith.constant 1 : index
    %c0_75 = arith.constant 0 : index
    %c0_76 = arith.constant 0 : index
    %336 = vector.load %arg7[%c1_74, %c0_75, %c0_76] : memref<12x16x160xbf16, #tpu.memory_space<vmem>>, vector<1x16x160xbf16>
    %337 = vector.shape_cast %336 : vector<1x16x160xbf16> to vector<16x160xbf16>
    %c1_77 = arith.constant 1 : index
    %c0_78 = arith.constant 0 : index
    %c0_79 = arith.constant 0 : index
    %338 = vector.load %arg4[%c1_77, %c0_78, %c0_79] : memref<6x160x96xbf16, #tpu.memory_space<vmem>>, vector<1x160x96xbf16>
    %339 = vector.shape_cast %338 : vector<1x160x96xbf16> to vector<160x96xbf16>
    %cst_80 = arith.constant dense<0.000000e+00> : vector<16x96xf32>
    %340 = tpu.matmul %337, %339, %cst_80 {dimension_numbers = #tpu.dot_dimension_numbers<[1], [0], [0], [1], [0, 0, 1, 1], [], []>} : vector<16x160xbf16>, vector<160x96xbf16>, vector<16x96xf32> -> vector<16x96xf32>
    %341 = arith.addf %335, %340 : vector<16x96xf32>
    %c2_81 = arith.constant 2 : index
    %c0_82 = arith.constant 0 : index
    %c0_83 = arith.constant 0 : index
    %342 = vector.load %arg7[%c2_81, %c0_82, %c0_83] : memref<12x16x160xbf16, #tpu.memory_space<vmem>>, vector<1x16x160xbf16>
    %343 = vector.shape_cast %342 : vector<1x16x160xbf16> to vector<16x160xbf16>
    %c2_84 = arith.constant 2 : index
    %c0_85 = arith.constant 0 : index
    %c0_86 = arith.constant 0 : index
    %344 = vector.load %arg4[%c2_84, %c0_85, %c0_86] : memref<6x160x96xbf16, #tpu.memory_space<vmem>>, vector<1x160x96xbf16>
    %345 = vector.shape_cast %344 : vector<1x160x96xbf16> to vector<160x96xbf16>
    %cst_87 = arith.constant dense<0.000000e+00> : vector<16x96xf32>
    %346 = tpu.matmul %343, %345, %cst_87 {dimension_numbers = #tpu.dot_dimension_numbers<[1], [0], [0], [1], [0, 0, 1, 1], [], []>} : vector<16x160xbf16>, vector<160x96xbf16>, vector<16x96xf32> -> vector<16x96xf32>
    %347 = arith.addf %341, %346 : vector<16x96xf32>
    %c3_88 = arith.constant 3 : index
    %c0_89 = arith.constant 0 : index
    %c0_90 = arith.constant 0 : index
    %348 = vector.load %arg7[%c3_88, %c0_89, %c0_90] : memref<12x16x160xbf16, #tpu.memory_space<vmem>>, vector<1x16x160xbf16>
    %349 = vector.shape_cast %348 : vector<1x16x160xbf16> to vector<16x160xbf16>
    %c3_91 = arith.constant 3 : index
    %c0_92 = arith.constant 0 : index
    %c0_93 = arith.constant 0 : index
    %350 = vector.load %arg4[%c3_91, %c0_92, %c0_93] : memref<6x160x96xbf16, #tpu.memory_space<vmem>>, vector<1x160x96xbf16>
    %351 = vector.shape_cast %350 : vector<1x160x96xbf16> to vector<160x96xbf16>
    %cst_94 = arith.constant dense<0.000000e+00> : vector<16x96xf32>
    %352 = tpu.matmul %349, %351, %cst_94 {dimension_numbers = #tpu.dot_dimension_numbers<[1], [0], [0], [1], [0, 0, 1, 1], [], []>} : vector<16x160xbf16>, vector<160x96xbf16>, vector<16x96xf32> -> vector<16x96xf32>
    %353 = arith.addf %347, %352 : vector<16x96xf32>
    %c4_95 = arith.constant 4 : index
    %c0_96 = arith.constant 0 : index
    %c0_97 = arith.constant 0 : index
    %354 = vector.load %arg7[%c4_95, %c0_96, %c0_97] : memref<12x16x160xbf16, #tpu.memory_space<vmem>>, vector<1x16x160xbf16>
    %355 = vector.shape_cast %354 : vector<1x16x160xbf16> to vector<16x160xbf16>
    %c4_98 = arith.constant 4 : index
    %c0_99 = arith.constant 0 : index
    %c0_100 = arith.constant 0 : index
    %356 = vector.load %arg4[%c4_98, %c0_99, %c0_100] : memref<6x160x96xbf16, #tpu.memory_space<vmem>>, vector<1x160x96xbf16>
    %357 = vector.shape_cast %356 : vector<1x160x96xbf16> to vector<160x96xbf16>
    %cst_101 = arith.constant dense<0.000000e+00> : vector<16x96xf32>
    %358 = tpu.matmul %355, %357, %cst_101 {dimension_numbers = #tpu.dot_dimension_numbers<[1], [0], [0], [1], [0, 0, 1, 1], [], []>} : vector<16x160xbf16>, vector<160x96xbf16>, vector<16x96xf32> -> vector<16x96xf32>
    %359 = arith.addf %353, %358 : vector<16x96xf32>
    %c5_102 = arith.constant 5 : index
    %c0_103 = arith.constant 0 : index
    %c0_104 = arith.constant 0 : index
    %360 = vector.load %arg7[%c5_102, %c0_103, %c0_104] : memref<12x16x160xbf16, #tpu.memory_space<vmem>>, vector<1x16x160xbf16>
    %361 = vector.shape_cast %360 : vector<1x16x160xbf16> to vector<16x160xbf16>
    %c5_105 = arith.constant 5 : index
    %c0_106 = arith.constant 0 : index
    %c0_107 = arith.constant 0 : index
    %362 = vector.load %arg4[%c5_105, %c0_106, %c0_107] : memref<6x160x96xbf16, #tpu.memory_space<vmem>>, vector<1x160x96xbf16>
    %363 = vector.shape_cast %362 : vector<1x160x96xbf16> to vector<160x96xbf16>
    %cst_108 = arith.constant dense<0.000000e+00> : vector<16x96xf32>
    %364 = tpu.matmul %361, %363, %cst_108 {dimension_numbers = #tpu.dot_dimension_numbers<[1], [0], [0], [1], [0, 0, 1, 1], [], []>} : vector<16x160xbf16>, vector<160x96xbf16>, vector<16x96xf32> -> vector<16x96xf32>
    %365 = arith.addf %359, %364 : vector<16x96xf32>
    %366 = vector.extract_strided_slice %365 {offsets = [0, 0], sizes = [16, 48], strides = [1, 1]} : vector<16x96xf32> to vector<16x48xf32>
    %367 = vector.extract_strided_slice %365 {offsets = [0, 48], sizes = [16, 48], strides = [1, 1]} : vector<16x96xf32> to vector<16x48xf32>
    %368 = arith.maximumf %366, %367 : vector<16x48xf32>
    %369 = vector.shape_cast %368 : vector<16x48xf32> to vector<2x8x48xf32>
    %370 = vector.extract_strided_slice %369 {offsets = [0, 0, 0], sizes = [2, 4, 48], strides = [1, 1, 1]} : vector<2x8x48xf32> to vector<2x4x48xf32>
    %371 = vector.extract_strided_slice %369 {offsets = [0, 4, 0], sizes = [2, 4, 48], strides = [1, 1, 1]} : vector<2x8x48xf32> to vector<2x4x48xf32>
    %372 = arith.maximumf %370, %371 : vector<2x4x48xf32>
    %373 = arith.addf %372, %6 : vector<2x4x48xf32>
    %cst_109 = arith.constant 0.000000e+00 : f32
    %374 = vector.broadcast %cst_109 : f32 to vector<2x4x48xf32>
    %375 = arith.maximumf %373, %374 : vector<2x4x48xf32>
    %c2_110 = arith.constant 2 : index
    %c0_111 = arith.constant 0 : index
    %c0_112 = arith.constant 0 : index
    %376 = vector.load %arg7[%c2_110, %c0_111, %c0_112] : memref<12x16x160xbf16, #tpu.memory_space<vmem>>, vector<1x16x160xbf16>
    %377 = vector.shape_cast %376 : vector<1x16x160xbf16> to vector<16x160xbf16>
    %c0_113 = arith.constant 0 : index
    %c0_114 = arith.constant 0 : index
    %c0_115 = arith.constant 0 : index
    %378 = vector.load %arg4[%c0_113, %c0_114, %c0_115] : memref<6x160x96xbf16, #tpu.memory_space<vmem>>, vector<1x160x96xbf16>
    %379 = vector.shape_cast %378 : vector<1x160x96xbf16> to vector<160x96xbf16>
    %cst_116 = arith.constant dense<0.000000e+00> : vector<16x96xf32>
    %380 = tpu.matmul %377, %379, %cst_116 {dimension_numbers = #tpu.dot_dimension_numbers<[1], [0], [0], [1], [0, 0, 1, 1], [], []>} : vector<16x160xbf16>, vector<160x96xbf16>, vector<16x96xf32> -> vector<16x96xf32>
    %c3_117 = arith.constant 3 : index
    %c0_118 = arith.constant 0 : index
    %c0_119 = arith.constant 0 : index
    %381 = vector.load %arg7[%c3_117, %c0_118, %c0_119] : memref<12x16x160xbf16, #tpu.memory_space<vmem>>, vector<1x16x160xbf16>
    %382 = vector.shape_cast %381 : vector<1x16x160xbf16> to vector<16x160xbf16>
    %c1_120 = arith.constant 1 : index
    %c0_121 = arith.constant 0 : index
    %c0_122 = arith.constant 0 : index
    %383 = vector.load %arg4[%c1_120, %c0_121, %c0_122] : memref<6x160x96xbf16, #tpu.memory_space<vmem>>, vector<1x160x96xbf16>
    %384 = vector.shape_cast %383 : vector<1x160x96xbf16> to vector<160x96xbf16>
    %cst_123 = arith.constant dense<0.000000e+00> : vector<16x96xf32>
    %385 = tpu.matmul %382, %384, %cst_123 {dimension_numbers = #tpu.dot_dimension_numbers<[1], [0], [0], [1], [0, 0, 1, 1], [], []>} : vector<16x160xbf16>, vector<160x96xbf16>, vector<16x96xf32> -> vector<16x96xf32>
    %386 = arith.addf %380, %385 : vector<16x96xf32>
    %c4_124 = arith.constant 4 : index
    %c0_125 = arith.constant 0 : index
    %c0_126 = arith.constant 0 : index
    %387 = vector.load %arg7[%c4_124, %c0_125, %c0_126] : memref<12x16x160xbf16, #tpu.memory_space<vmem>>, vector<1x16x160xbf16>
    %388 = vector.shape_cast %387 : vector<1x16x160xbf16> to vector<16x160xbf16>
    %c2_127 = arith.constant 2 : index
    %c0_128 = arith.constant 0 : index
    %c0_129 = arith.constant 0 : index
    %389 = vector.load %arg4[%c2_127, %c0_128, %c0_129] : memref<6x160x96xbf16, #tpu.memory_space<vmem>>, vector<1x160x96xbf16>
    %390 = vector.shape_cast %389 : vector<1x160x96xbf16> to vector<160x96xbf16>
    %cst_130 = arith.constant dense<0.000000e+00> : vector<16x96xf32>
    %391 = tpu.matmul %388, %390, %cst_130 {dimension_numbers = #tpu.dot_dimension_numbers<[1], [0], [0], [1], [0, 0, 1, 1], [], []>} : vector<16x160xbf16>, vector<160x96xbf16>, vector<16x96xf32> -> vector<16x96xf32>
    %392 = arith.addf %386, %391 : vector<16x96xf32>
    %c5_131 = arith.constant 5 : index
    %c0_132 = arith.constant 0 : index
    %c0_133 = arith.constant 0 : index
    %393 = vector.load %arg7[%c5_131, %c0_132, %c0_133] : memref<12x16x160xbf16, #tpu.memory_space<vmem>>, vector<1x16x160xbf16>
    %394 = vector.shape_cast %393 : vector<1x16x160xbf16> to vector<16x160xbf16>
    %c3_134 = arith.constant 3 : index
    %c0_135 = arith.constant 0 : index
    %c0_136 = arith.constant 0 : index
    %395 = vector.load %arg4[%c3_134, %c0_135, %c0_136] : memref<6x160x96xbf16, #tpu.memory_space<vmem>>, vector<1x160x96xbf16>
    %396 = vector.shape_cast %395 : vector<1x160x96xbf16> to vector<160x96xbf16>
    %cst_137 = arith.constant dense<0.000000e+00> : vector<16x96xf32>
    %397 = tpu.matmul %394, %396, %cst_137 {dimension_numbers = #tpu.dot_dimension_numbers<[1], [0], [0], [1], [0, 0, 1, 1], [], []>} : vector<16x160xbf16>, vector<160x96xbf16>, vector<16x96xf32> -> vector<16x96xf32>
    %398 = arith.addf %392, %397 : vector<16x96xf32>
    %c6_138 = arith.constant 6 : index
    %c0_139 = arith.constant 0 : index
    %c0_140 = arith.constant 0 : index
    %399 = vector.load %arg7[%c6_138, %c0_139, %c0_140] : memref<12x16x160xbf16, #tpu.memory_space<vmem>>, vector<1x16x160xbf16>
    %400 = vector.shape_cast %399 : vector<1x16x160xbf16> to vector<16x160xbf16>
    %c4_141 = arith.constant 4 : index
    %c0_142 = arith.constant 0 : index
    %c0_143 = arith.constant 0 : index
    %401 = vector.load %arg4[%c4_141, %c0_142, %c0_143] : memref<6x160x96xbf16, #tpu.memory_space<vmem>>, vector<1x160x96xbf16>
    %402 = vector.shape_cast %401 : vector<1x160x96xbf16> to vector<160x96xbf16>
    %cst_144 = arith.constant dense<0.000000e+00> : vector<16x96xf32>
    %403 = tpu.matmul %400, %402, %cst_144 {dimension_numbers = #tpu.dot_dimension_numbers<[1], [0], [0], [1], [0, 0, 1, 1], [], []>} : vector<16x160xbf16>, vector<160x96xbf16>, vector<16x96xf32> -> vector<16x96xf32>
    %404 = arith.addf %398, %403 : vector<16x96xf32>
    %c7_145 = arith.constant 7 : index
    %c0_146 = arith.constant 0 : index
    %c0_147 = arith.constant 0 : index
    %405 = vector.load %arg7[%c7_145, %c0_146, %c0_147] : memref<12x16x160xbf16, #tpu.memory_space<vmem>>, vector<1x16x160xbf16>
    %406 = vector.shape_cast %405 : vector<1x16x160xbf16> to vector<16x160xbf16>
    %c5_148 = arith.constant 5 : index
    %c0_149 = arith.constant 0 : index
    %c0_150 = arith.constant 0 : index
    %407 = vector.load %arg4[%c5_148, %c0_149, %c0_150] : memref<6x160x96xbf16, #tpu.memory_space<vmem>>, vector<1x160x96xbf16>
    %408 = vector.shape_cast %407 : vector<1x160x96xbf16> to vector<160x96xbf16>
    %cst_151 = arith.constant dense<0.000000e+00> : vector<16x96xf32>
    %409 = tpu.matmul %406, %408, %cst_151 {dimension_numbers = #tpu.dot_dimension_numbers<[1], [0], [0], [1], [0, 0, 1, 1], [], []>} : vector<16x160xbf16>, vector<160x96xbf16>, vector<16x96xf32> -> vector<16x96xf32>
    %410 = arith.addf %404, %409 : vector<16x96xf32>
    %411 = vector.extract_strided_slice %410 {offsets = [0, 0], sizes = [16, 48], strides = [1, 1]} : vector<16x96xf32> to vector<16x48xf32>
    %412 = vector.extract_strided_slice %410 {offsets = [0, 48], sizes = [16, 48], strides = [1, 1]} : vector<16x96xf32> to vector<16x48xf32>
    %413 = arith.maximumf %411, %412 : vector<16x48xf32>
    %414 = vector.shape_cast %413 : vector<16x48xf32> to vector<2x8x48xf32>
    %415 = vector.extract_strided_slice %414 {offsets = [0, 0, 0], sizes = [2, 4, 48], strides = [1, 1, 1]} : vector<2x8x48xf32> to vector<2x4x48xf32>
    %416 = vector.extract_strided_slice %414 {offsets = [0, 4, 0], sizes = [2, 4, 48], strides = [1, 1, 1]} : vector<2x8x48xf32> to vector<2x4x48xf32>
    %417 = arith.maximumf %415, %416 : vector<2x4x48xf32>
    %418 = arith.addf %417, %6 : vector<2x4x48xf32>
    %cst_152 = arith.constant 0.000000e+00 : f32
    %419 = vector.broadcast %cst_152 : f32 to vector<2x4x48xf32>
    %420 = arith.maximumf %418, %419 : vector<2x4x48xf32>
    %c4_153 = arith.constant 4 : index
    %c0_154 = arith.constant 0 : index
    %c0_155 = arith.constant 0 : index
    %421 = vector.load %arg7[%c4_153, %c0_154, %c0_155] : memref<12x16x160xbf16, #tpu.memory_space<vmem>>, vector<1x16x160xbf16>
    %422 = vector.shape_cast %421 : vector<1x16x160xbf16> to vector<16x160xbf16>
    %c0_156 = arith.constant 0 : index
    %c0_157 = arith.constant 0 : index
    %c0_158 = arith.constant 0 : index
    %423 = vector.load %arg4[%c0_156, %c0_157, %c0_158] : memref<6x160x96xbf16, #tpu.memory_space<vmem>>, vector<1x160x96xbf16>
    %424 = vector.shape_cast %423 : vector<1x160x96xbf16> to vector<160x96xbf16>
    %cst_159 = arith.constant dense<0.000000e+00> : vector<16x96xf32>
    %425 = tpu.matmul %422, %424, %cst_159 {dimension_numbers = #tpu.dot_dimension_numbers<[1], [0], [0], [1], [0, 0, 1, 1], [], []>} : vector<16x160xbf16>, vector<160x96xbf16>, vector<16x96xf32> -> vector<16x96xf32>
    %c5_160 = arith.constant 5 : index
    %c0_161 = arith.constant 0 : index
    %c0_162 = arith.constant 0 : index
    %426 = vector.load %arg7[%c5_160, %c0_161, %c0_162] : memref<12x16x160xbf16, #tpu.memory_space<vmem>>, vector<1x16x160xbf16>
    %427 = vector.shape_cast %426 : vector<1x16x160xbf16> to vector<16x160xbf16>
    %c1_163 = arith.constant 1 : index
    %c0_164 = arith.constant 0 : index
    %c0_165 = arith.constant 0 : index
    %428 = vector.load %arg4[%c1_163, %c0_164, %c0_165] : memref<6x160x96xbf16, #tpu.memory_space<vmem>>, vector<1x160x96xbf16>
    %429 = vector.shape_cast %428 : vector<1x160x96xbf16> to vector<160x96xbf16>
    %cst_166 = arith.constant dense<0.000000e+00> : vector<16x96xf32>
    %430 = tpu.matmul %427, %429, %cst_166 {dimension_numbers = #tpu.dot_dimension_numbers<[1], [0], [0], [1], [0, 0, 1, 1], [], []>} : vector<16x160xbf16>, vector<160x96xbf16>, vector<16x96xf32> -> vector<16x96xf32>
    %431 = arith.addf %425, %430 : vector<16x96xf32>
    %c6_167 = arith.constant 6 : index
    %c0_168 = arith.constant 0 : index
    %c0_169 = arith.constant 0 : index
    %432 = vector.load %arg7[%c6_167, %c0_168, %c0_169] : memref<12x16x160xbf16, #tpu.memory_space<vmem>>, vector<1x16x160xbf16>
    %433 = vector.shape_cast %432 : vector<1x16x160xbf16> to vector<16x160xbf16>
    %c2_170 = arith.constant 2 : index
    %c0_171 = arith.constant 0 : index
    %c0_172 = arith.constant 0 : index
    %434 = vector.load %arg4[%c2_170, %c0_171, %c0_172] : memref<6x160x96xbf16, #tpu.memory_space<vmem>>, vector<1x160x96xbf16>
    %435 = vector.shape_cast %434 : vector<1x160x96xbf16> to vector<160x96xbf16>
    %cst_173 = arith.constant dense<0.000000e+00> : vector<16x96xf32>
    %436 = tpu.matmul %433, %435, %cst_173 {dimension_numbers = #tpu.dot_dimension_numbers<[1], [0], [0], [1], [0, 0, 1, 1], [], []>} : vector<16x160xbf16>, vector<160x96xbf16>, vector<16x96xf32> -> vector<16x96xf32>
    %437 = arith.addf %431, %436 : vector<16x96xf32>
    %c7_174 = arith.constant 7 : index
    %c0_175 = arith.constant 0 : index
    %c0_176 = arith.constant 0 : index
    %438 = vector.load %arg7[%c7_174, %c0_175, %c0_176] : memref<12x16x160xbf16, #tpu.memory_space<vmem>>, vector<1x16x160xbf16>
    %439 = vector.shape_cast %438 : vector<1x16x160xbf16> to vector<16x160xbf16>
    %c3_177 = arith.constant 3 : index
    %c0_178 = arith.constant 0 : index
    %c0_179 = arith.constant 0 : index
    %440 = vector.load %arg4[%c3_177, %c0_178, %c0_179] : memref<6x160x96xbf16, #tpu.memory_space<vmem>>, vector<1x160x96xbf16>
    %441 = vector.shape_cast %440 : vector<1x160x96xbf16> to vector<160x96xbf16>
    %cst_180 = arith.constant dense<0.000000e+00> : vector<16x96xf32>
    %442 = tpu.matmul %439, %441, %cst_180 {dimension_numbers = #tpu.dot_dimension_numbers<[1], [0], [0], [1], [0, 0, 1, 1], [], []>} : vector<16x160xbf16>, vector<160x96xbf16>, vector<16x96xf32> -> vector<16x96xf32>
    %443 = arith.addf %437, %442 : vector<16x96xf32>
    %c8_181 = arith.constant 8 : index
    %c0_182 = arith.constant 0 : index
    %c0_183 = arith.constant 0 : index
    %444 = vector.load %arg7[%c8_181, %c0_182, %c0_183] : memref<12x16x160xbf16, #tpu.memory_space<vmem>>, vector<1x16x160xbf16>
    %445 = vector.shape_cast %444 : vector<1x16x160xbf16> to vector<16x160xbf16>
    %c4_184 = arith.constant 4 : index
    %c0_185 = arith.constant 0 : index
    %c0_186 = arith.constant 0 : index
    %446 = vector.load %arg4[%c4_184, %c0_185, %c0_186] : memref<6x160x96xbf16, #tpu.memory_space<vmem>>, vector<1x160x96xbf16>
    %447 = vector.shape_cast %446 : vector<1x160x96xbf16> to vector<160x96xbf16>
    %cst_187 = arith.constant dense<0.000000e+00> : vector<16x96xf32>
    %448 = tpu.matmul %445, %447, %cst_187 {dimension_numbers = #tpu.dot_dimension_numbers<[1], [0], [0], [1], [0, 0, 1, 1], [], []>} : vector<16x160xbf16>, vector<160x96xbf16>, vector<16x96xf32> -> vector<16x96xf32>
    %449 = arith.addf %443, %448 : vector<16x96xf32>
    %c9_188 = arith.constant 9 : index
    %c0_189 = arith.constant 0 : index
    %c0_190 = arith.constant 0 : index
    %450 = vector.load %arg7[%c9_188, %c0_189, %c0_190] : memref<12x16x160xbf16, #tpu.memory_space<vmem>>, vector<1x16x160xbf16>
    %451 = vector.shape_cast %450 : vector<1x16x160xbf16> to vector<16x160xbf16>
    %c5_191 = arith.constant 5 : index
    %c0_192 = arith.constant 0 : index
    %c0_193 = arith.constant 0 : index
    %452 = vector.load %arg4[%c5_191, %c0_192, %c0_193] : memref<6x160x96xbf16, #tpu.memory_space<vmem>>, vector<1x160x96xbf16>
    %453 = vector.shape_cast %452 : vector<1x160x96xbf16> to vector<160x96xbf16>
    %cst_194 = arith.constant dense<0.000000e+00> : vector<16x96xf32>
    %454 = tpu.matmul %451, %453, %cst_194 {dimension_numbers = #tpu.dot_dimension_numbers<[1], [0], [0], [1], [0, 0, 1, 1], [], []>} : vector<16x160xbf16>, vector<160x96xbf16>, vector<16x96xf32> -> vector<16x96xf32>
    %455 = arith.addf %449, %454 : vector<16x96xf32>
    %456 = vector.extract_strided_slice %455 {offsets = [0, 0], sizes = [16, 48], strides = [1, 1]} : vector<16x96xf32> to vector<16x48xf32>
    %457 = vector.extract_strided_slice %455 {offsets = [0, 48], sizes = [16, 48], strides = [1, 1]} : vector<16x96xf32> to vector<16x48xf32>
    %458 = arith.maximumf %456, %457 : vector<16x48xf32>
    %459 = vector.shape_cast %458 : vector<16x48xf32> to vector<2x8x48xf32>
    %460 = vector.extract_strided_slice %459 {offsets = [0, 0, 0], sizes = [2, 4, 48], strides = [1, 1, 1]} : vector<2x8x48xf32> to vector<2x4x48xf32>
    %461 = vector.extract_strided_slice %459 {offsets = [0, 4, 0], sizes = [2, 4, 48], strides = [1, 1, 1]} : vector<2x8x48xf32> to vector<2x4x48xf32>
    %462 = arith.maximumf %460, %461 : vector<2x4x48xf32>
    %463 = arith.addf %462, %6 : vector<2x4x48xf32>
    %cst_195 = arith.constant 0.000000e+00 : f32
    %464 = vector.broadcast %cst_195 : f32 to vector<2x4x48xf32>
    %465 = arith.maximumf %463, %464 : vector<2x4x48xf32>
    %c6_196 = arith.constant 6 : index
    %c0_197 = arith.constant 0 : index
    %c0_198 = arith.constant 0 : index
    %466 = vector.load %arg7[%c6_196, %c0_197, %c0_198] : memref<12x16x160xbf16, #tpu.memory_space<vmem>>, vector<1x16x160xbf16>
    %467 = vector.shape_cast %466 : vector<1x16x160xbf16> to vector<16x160xbf16>
    %c0_199 = arith.constant 0 : index
    %c0_200 = arith.constant 0 : index
    %c0_201 = arith.constant 0 : index
    %468 = vector.load %arg4[%c0_199, %c0_200, %c0_201] : memref<6x160x96xbf16, #tpu.memory_space<vmem>>, vector<1x160x96xbf16>
    %469 = vector.shape_cast %468 : vector<1x160x96xbf16> to vector<160x96xbf16>
    %cst_202 = arith.constant dense<0.000000e+00> : vector<16x96xf32>
    %470 = tpu.matmul %467, %469, %cst_202 {dimension_numbers = #tpu.dot_dimension_numbers<[1], [0], [0], [1], [0, 0, 1, 1], [], []>} : vector<16x160xbf16>, vector<160x96xbf16>, vector<16x96xf32> -> vector<16x96xf32>
    %c7_203 = arith.constant 7 : index
    %c0_204 = arith.constant 0 : index
    %c0_205 = arith.constant 0 : index
    %471 = vector.load %arg7[%c7_203, %c0_204, %c0_205] : memref<12x16x160xbf16, #tpu.memory_space<vmem>>, vector<1x16x160xbf16>
    %472 = vector.shape_cast %471 : vector<1x16x160xbf16> to vector<16x160xbf16>
    %c1_206 = arith.constant 1 : index
    %c0_207 = arith.constant 0 : index
    %c0_208 = arith.constant 0 : index
    %473 = vector.load %arg4[%c1_206, %c0_207, %c0_208] : memref<6x160x96xbf16, #tpu.memory_space<vmem>>, vector<1x160x96xbf16>
    %474 = vector.shape_cast %473 : vector<1x160x96xbf16> to vector<160x96xbf16>
    %cst_209 = arith.constant dense<0.000000e+00> : vector<16x96xf32>
    %475 = tpu.matmul %472, %474, %cst_209 {dimension_numbers = #tpu.dot_dimension_numbers<[1], [0], [0], [1], [0, 0, 1, 1], [], []>} : vector<16x160xbf16>, vector<160x96xbf16>, vector<16x96xf32> -> vector<16x96xf32>
    %476 = arith.addf %470, %475 : vector<16x96xf32>
    %c8_210 = arith.constant 8 : index
    %c0_211 = arith.constant 0 : index
    %c0_212 = arith.constant 0 : index
    %477 = vector.load %arg7[%c8_210, %c0_211, %c0_212] : memref<12x16x160xbf16, #tpu.memory_space<vmem>>, vector<1x16x160xbf16>
    %478 = vector.shape_cast %477 : vector<1x16x160xbf16> to vector<16x160xbf16>
    %c2_213 = arith.constant 2 : index
    %c0_214 = arith.constant 0 : index
    %c0_215 = arith.constant 0 : index
    %479 = vector.load %arg4[%c2_213, %c0_214, %c0_215] : memref<6x160x96xbf16, #tpu.memory_space<vmem>>, vector<1x160x96xbf16>
    %480 = vector.shape_cast %479 : vector<1x160x96xbf16> to vector<160x96xbf16>
    %cst_216 = arith.constant dense<0.000000e+00> : vector<16x96xf32>
    %481 = tpu.matmul %478, %480, %cst_216 {dimension_numbers = #tpu.dot_dimension_numbers<[1], [0], [0], [1], [0, 0, 1, 1], [], []>} : vector<16x160xbf16>, vector<160x96xbf16>, vector<16x96xf32> -> vector<16x96xf32>
    %482 = arith.addf %476, %481 : vector<16x96xf32>
    %c9_217 = arith.constant 9 : index
    %c0_218 = arith.constant 0 : index
    %c0_219 = arith.constant 0 : index
    %483 = vector.load %arg7[%c9_217, %c0_218, %c0_219] : memref<12x16x160xbf16, #tpu.memory_space<vmem>>, vector<1x16x160xbf16>
    %484 = vector.shape_cast %483 : vector<1x16x160xbf16> to vector<16x160xbf16>
    %c3_220 = arith.constant 3 : index
    %c0_221 = arith.constant 0 : index
    %c0_222 = arith.constant 0 : index
    %485 = vector.load %arg4[%c3_220, %c0_221, %c0_222] : memref<6x160x96xbf16, #tpu.memory_space<vmem>>, vector<1x160x96xbf16>
    %486 = vector.shape_cast %485 : vector<1x160x96xbf16> to vector<160x96xbf16>
    %cst_223 = arith.constant dense<0.000000e+00> : vector<16x96xf32>
    %487 = tpu.matmul %484, %486, %cst_223 {dimension_numbers = #tpu.dot_dimension_numbers<[1], [0], [0], [1], [0, 0, 1, 1], [], []>} : vector<16x160xbf16>, vector<160x96xbf16>, vector<16x96xf32> -> vector<16x96xf32>
    %488 = arith.addf %482, %487 : vector<16x96xf32>
    %c10_224 = arith.constant 10 : index
    %c0_225 = arith.constant 0 : index
    %c0_226 = arith.constant 0 : index
    %489 = vector.load %arg7[%c10_224, %c0_225, %c0_226] : memref<12x16x160xbf16, #tpu.memory_space<vmem>>, vector<1x16x160xbf16>
    %490 = vector.shape_cast %489 : vector<1x16x160xbf16> to vector<16x160xbf16>
    %c4_227 = arith.constant 4 : index
    %c0_228 = arith.constant 0 : index
    %c0_229 = arith.constant 0 : index
    %491 = vector.load %arg4[%c4_227, %c0_228, %c0_229] : memref<6x160x96xbf16, #tpu.memory_space<vmem>>, vector<1x160x96xbf16>
    %492 = vector.shape_cast %491 : vector<1x160x96xbf16> to vector<160x96xbf16>
    %cst_230 = arith.constant dense<0.000000e+00> : vector<16x96xf32>
    %493 = tpu.matmul %490, %492, %cst_230 {dimension_numbers = #tpu.dot_dimension_numbers<[1], [0], [0], [1], [0, 0, 1, 1], [], []>} : vector<16x160xbf16>, vector<160x96xbf16>, vector<16x96xf32> -> vector<16x96xf32>
    %494 = arith.addf %488, %493 : vector<16x96xf32>
    %c11_231 = arith.constant 11 : index
    %c0_232 = arith.constant 0 : index
    %c0_233 = arith.constant 0 : index
    %495 = vector.load %arg7[%c11_231, %c0_232, %c0_233] : memref<12x16x160xbf16, #tpu.memory_space<vmem>>, vector<1x16x160xbf16>
    %496 = vector.shape_cast %495 : vector<1x16x160xbf16> to vector<16x160xbf16>
    %c5_234 = arith.constant 5 : index
    %c0_235 = arith.constant 0 : index
    %c0_236 = arith.constant 0 : index
    %497 = vector.load %arg4[%c5_234, %c0_235, %c0_236] : memref<6x160x96xbf16, #tpu.memory_space<vmem>>, vector<1x160x96xbf16>
    %498 = vector.shape_cast %497 : vector<1x160x96xbf16> to vector<160x96xbf16>
    %cst_237 = arith.constant dense<0.000000e+00> : vector<16x96xf32>
    %499 = tpu.matmul %496, %498, %cst_237 {dimension_numbers = #tpu.dot_dimension_numbers<[1], [0], [0], [1], [0, 0, 1, 1], [], []>} : vector<16x160xbf16>, vector<160x96xbf16>, vector<16x96xf32> -> vector<16x96xf32>
    %500 = arith.addf %494, %499 : vector<16x96xf32>
    %501 = vector.extract_strided_slice %500 {offsets = [0, 0], sizes = [16, 48], strides = [1, 1]} : vector<16x96xf32> to vector<16x48xf32>
    %502 = vector.extract_strided_slice %500 {offsets = [0, 48], sizes = [16, 48], strides = [1, 1]} : vector<16x96xf32> to vector<16x48xf32>
    %503 = arith.maximumf %501, %502 : vector<16x48xf32>
    %504 = vector.shape_cast %503 : vector<16x48xf32> to vector<2x8x48xf32>
    %505 = vector.extract_strided_slice %504 {offsets = [0, 0, 0], sizes = [2, 4, 48], strides = [1, 1, 1]} : vector<2x8x48xf32> to vector<2x4x48xf32>
    %506 = vector.extract_strided_slice %504 {offsets = [0, 4, 0], sizes = [2, 4, 48], strides = [1, 1, 1]} : vector<2x8x48xf32> to vector<2x4x48xf32>
    %507 = arith.maximumf %505, %506 : vector<2x4x48xf32>
    %508 = arith.addf %507, %6 : vector<2x4x48xf32>
    %cst_238 = arith.constant 0.000000e+00 : f32
    %509 = vector.broadcast %cst_238 : f32 to vector<2x4x48xf32>
    %510 = arith.maximumf %508, %509 : vector<2x4x48xf32>
    %511 = tpu.concatenate %375, %420, %465, %510 in 1 : vector<2x4x48xf32>, vector<2x4x48xf32>, vector<2x4x48xf32>, vector<2x4x48xf32> -> vector<2x16x48xf32>
    %c0_239 = arith.constant 0 : index
    %c0_240 = arith.constant 0 : index
    %c0_241 = arith.constant 0 : index
    %512 = vector.load %arg6[%c0_239, %c0_240, %c0_241] : memref<2x16x48xf32, #tpu.memory_space<vmem>>, vector<2x16x48xf32>
    tpu.vector_store %arg6[%c0_239, %c0_240, %c0_241], %511 {strides = array<i32>} : memref<2x16x48xf32, #tpu.memory_space<vmem>>, vector<2x16x48xf32>,
    return
  }
  func.func @transform_0(%arg0: i32) -> (i32, i32, i32, i32) {
    %c0_i32 = arith.constant 0 : i32
    %c0_i32_0 = arith.constant 0 : i32
    %c0_i32_1 = arith.constant 0 : i32
    %c0_i32_2 = arith.constant 0 : i32
    return %arg0, %c0_i32, %c0_i32_0, %c0_i32_1 : i32, i32, i32, i32
  }
  func.func @transform_1(%arg0: i32) -> (i32, i32) {
    %c0_i32 = arith.constant 0 : i32
    %c0_i32_0 = arith.constant 0 : i32
    %c0_i32_1 = arith.constant 0 : i32
    return %c0_i32, %c0_i32_0 : i32, i32
  }
  func.func @transform_2(%arg0: i32) -> (i32, i32, i32) {
    %c0_i32 = arith.constant 0 : i32
    %c0_i32_0 = arith.constant 0 : i32
    %c0_i32_1 = arith.constant 0 : i32
    %c0_i32_2 = arith.constant 0 : i32
    return %c0_i32, %c0_i32_0, %c0_i32_1 : i32, i32, i32
  }
  func.func @transform_3(%arg0: i32) -> (i32, i32, i32) {
    %c0_i32 = arith.constant 0 : i32
    %c0_i32_0 = arith.constant 0 : i32
    %c0_i32_1 = arith.constant 0 : i32
    %c0_i32_2 = arith.constant 0 : i32
    return %c0_i32, %c0_i32_0, %c0_i32_1 : i32, i32, i32
  }
  func.func @transform_4(%arg0: i32) -> (i32, i32, i32) {
    %c0_i32 = arith.constant 0 : i32
    %c0_i32_0 = arith.constant 0 : i32
    %c0_i32_1 = arith.constant 0 : i32
    %c0_i32_2 = arith.constant 0 : i32
    return %c0_i32, %c0_i32_0, %c0_i32_1 : i32, i32, i32
  }
  func.func @transform_5(%arg0: i32) -> (i32, i32, i32) {
    %c0_i32 = arith.constant 0 : i32
    %c0_i32_0 = arith.constant 0 : i32
    %c0_i32_1 = arith.constant 0 : i32
    return %arg0, %c0_i32, %c0_i32_0 : i32, i32, i32
  }
}

</mosaic_0001>

<llo_original>
// kernel: tpu_custom_call.1
$region0: #{tpu_custom_call.1}
  #allocation0 [shape = 'u32[]', space=smem, size = 0x4, offset = 0x4, fixed_abs, tag = 'smem constant byte address 0x4 - core index']
  #allocation1 [shape = 'u32[144,128]{1,0:T(1,128)}', space=vmem, size = 0x12000, scoped, tag = 'internal scratch']
  #allocation2 [shape = 'bf16[12,16,160]{2,1,0:T(16,128)(2,1)}', space=vmem, size = 0x18000, scoped, tag = 'scratch operand']
  %s0 = inlined_call_operand.hbm [shape: bf16[4,6,48,90], index: 0, kind: input, shape index: {}]
  %s1 = inlined_call_operand.vmem [shape: bf16[90,64], index: 1, kind: input, shape index: {}]
  %s2 = inlined_call_operand.vmem [shape: f32[1,1,32], index: 2, kind: input, shape index: {}]
  %s3 = inlined_call_operand.hbm [shape: bf16[6,160,96], index: 3, kind: input, shape index: {}]
  %s4 = inlined_call_operand.vmem [shape: f32[1,1,48], index: 4, kind: input, shape index: {}]
  %s5 = inlined_call_operand.hbm [shape: f32[4,16,48], index: 5, kind: output, shape index: {}]
  %s6 = sld [smem:[#allocation0]]
  $region61: #{tpu_custom_call.1} parent=0
    _
  %s8 = ssub.s32 1, %s6
  %s9 = scalar_select 0, %s8, %s6
  $region1: #{tpu_custom_call.1} parent=0
    #allocation3 [shape = 'u8[294912]{0}', space=vmem, size = 0x48000, scoped, tag = 'input window, operand 0']
    #allocation4 [shape = 's32[2]{0}', space=sflag, size = 0x8, scoped, tag = 'scoped memory for tpu_custom_call.1']
    #allocation5 [shape = 's32[2]{0}', space=sflag, size = 0x8, scoped, tag = 'scoped memory for tpu_custom_call.1']
    #allocation6 [shape = 'u8[245760]{0}', space=vmem, size = 0x3c000, scoped, tag = 'input window, operand 3, single buffered']
    #allocation7 [shape = 's32[1]{0}', space=sflag, size = 0x4, scoped, tag = 'scoped memory for tpu_custom_call.1']
    #allocation8 [shape = 'u8[32768]{0}', space=vmem, size = 0x8000, scoped, tag = 'output window, operand 0']
    %10 = vsyncpa [#allocation4], 0
    %s11 = scalar_lea.sflag [#allocation4], 1
    %12 = vsyncpa %s11, 0
    %13 = vsyncpa [#allocation7], 0
    %14 = vsyncpa [#allocation5], 0
    %s15 = scalar_lea.sflag [#allocation5], 1
    %16 = vsyncpa %s15, 0
    loop: start=0, step=1, limit=4
    $region2: #{tpu_custom_call.1} parent=1 // loop_pre_header
      _
    $region3: #{tpu_custom_call.1} parent=1 // loop_header
      %s18 = sphi 0, %s22
      %p19 = scmp.ge.s32.totalorder %s18, 4
      %s28 = sphi 0, %s30
      %s31 = sphi 0, %s28
      %s32 = sphi 0, %s31
      %s48 = sphi 0, %s32
      %s52 = sphi 0, %s52
      %s54 = sphi 0, %s52
      %s55 = sphi 0, %s54
      %s69 = sphi 0, %s55
      %s73 = sphi 0, %s73
      %s75 = sphi 0, %s73
      %s76 = sphi 0, %s75
      %s90 = sphi 0, %s76
      %s94 = sphi 0, %s94
      %s96 = sphi 0, %s94
      %s97 = sphi 0, %s96
      %s111 = sphi 0, %s97
      %s115 = sphi 0, %s115
      %s117 = sphi 0, %s115
      %s118 = sphi 0, %s117
      %s132 = sphi 0, %s118
      %s138 = sphi 0, %s140
      %s141 = sphi 0, %s138
      %s142 = sphi 0, %s141
      %s158 = sphi 0, %s142
    $region4: #{tpu_custom_call.1} parent=1 // loop_header_branch
      %21 = sbr.rel (%p19) target = $region8
    $region5: #{tpu_custom_call.1} parent=1 // loop_body
      %s23 = ssub.s32 %s18, 1
      %s24 = ssub.s32 %s18, 2
      %s25 = sadd.s32 %s18, 1
      %s26 = ssub.s32 %s18, %s25
      %p27 = scmp.eq.s32.totalorder %s26, 0
      %s29 = sadd.s32 %s28, 1
      %s30 = scalar_select %p27, %s28, %s29
      %p33 = pneg %p27
      %p34 = scmp.eq.s32.totalorder %s18, 1
      %p35 = por %p33, %p34
      %p36 = scmp.ne.s32.totalorder %s28, %s31
      %p37 = scmp.eq.s32.totalorder %s18, 0
      %p38 = por %p36, %p37
      %p39 = scmp.ne.s32.totalorder %s28, %s31
      %p40 = scmp.eq.s32.totalorder %s23, 1
      %p41 = por %p39, %p40
      %p42 = scmp.ne.s32.totalorder %s31, %s32
      %p43 = scmp.eq.s32.totalorder %s23, 0
      %p44 = por %p42, %p43
      %p45 = scmp.ne.s32.totalorder %s31, %s32
      %p46 = scmp.eq.s32.totalorder %s24, 1
      %p47 = por %p45, %p46
      %p49 = scmp.ne.s32.totalorder %s32, %s48
      %p50 = scmp.eq.s32.totalorder %s24, 0
      %p51 = por %p49, %p50
      %s53 = sadd.s32 %s52, 1
      %p56 = scmp.eq.s32.totalorder %s18, 1
      %p57 = scmp.ne.s32.totalorder %s52, %s54
      %p58 = scmp.eq.s32.totalorder %s18, 0
      %p59 = por %p57, %p58
      %p60 = scmp.ne.s32.totalorder %s52, %s54
      %p61 = scmp.eq.s32.totalorder %s23, 1
      %p62 = por %p60, %p61
      %p63 = scmp.ne.s32.totalorder %s54, %s55
      %p64 = scmp.eq.s32.totalorder %s23, 0
      %p65 = por %p63, %p64
      %p66 = scmp.ne.s32.totalorder %s54, %s55
      %p67 = scmp.eq.s32.totalorder %s24, 1
      %p68 = por %p66, %p67
      %p70 = scmp.ne.s32.totalorder %s55, %s69
      %p71 = scmp.eq.s32.totalorder %s24, 0
      %p72 = por %p70, %p71
      %s74 = sadd.s32 %s73, 1
      %p77 = scmp.eq.s32.totalorder %s18, 1
      %p78 = scmp.ne.s32.totalorder %s73, %s75
      %p79 = scmp.eq.s32.totalorder %s18, 0
      %p80 = por %p78, %p79
      %p81 = scmp.ne.s32.totalorder %s73, %s75
      %p82 = scmp.eq.s32.totalorder %s23, 1
      %p83 = por %p81, %p82
      %p84 = scmp.ne.s32.totalorder %s75, %s76
      %p85 = scmp.eq.s32.totalorder %s23, 0
      %p86 = por %p84, %p85
      %p87 = scmp.ne.s32.totalorder %s75, %s76
      %p88 = scmp.eq.s32.totalorder %s24, 1
      %p89 = por %p87, %p88
      %p91 = scmp.ne.s32.totalorder %s76, %s90
      %p92 = scmp.eq.s32.totalorder %s24, 0
      %p93 = por %p91, %p92
      %s95 = sadd.s32 %s94, 1
      %p98 = scmp.eq.s32.totalorder %s18, 1
      %p99 = scmp.ne.s32.totalorder %s94, %s96
      %p100 = scmp.eq.s32.totalorder %s18, 0
      %p101 = por %p99, %p100
      %p102 = scmp.ne.s32.totalorder %s94, %s96
      %p103 = scmp.eq.s32.totalorder %s23, 1
      %p104 = por %p102, %p103
      %p105 = scmp.ne.s32.totalorder %s96, %s97
      %p106 = scmp.eq.s32.totalorder %s23, 0
      %p107 = por %p105, %p106
      %p108 = scmp.ne.s32.totalorder %s96, %s97
      %p109 = scmp.eq.s32.totalorder %s24, 1
      %p110 = por %p108, %p109
      %p112 = scmp.ne.s32.totalorder %s97, %s111
      %p113 = scmp.eq.s32.totalorder %s24, 0
      %p114 = por %p112, %p113
      %s116 = sadd.s32 %s115, 1
      %p119 = scmp.eq.s32.totalorder %s18, 1
      %p120 = scmp.ne.s32.totalorder %s115, %s117
      %p121 = scmp.eq.s32.totalorder %s18, 0
      %p122 = por %p120, %p121
      %p123 = scmp.ne.s32.totalorder %s115, %s117
      %p124 = scmp.eq.s32.totalorder %s23, 1
      %p125 = por %p123, %p124
      %p126 = scmp.ne.s32.totalorder %s117, %s118
      %p127 = scmp.eq.s32.totalorder %s23, 0
      %p128 = por %p126, %p127
      %p129 = scmp.ne.s32.totalorder %s117, %s118
      %p130 = scmp.eq.s32.totalorder %s24, 1
      %p131 = por %p129, %p130
      %p133 = scmp.ne.s32.totalorder %s118, %s132
      %p134 = scmp.eq.s32.totalorder %s24, 0
      %p135 = por %p133, %p134
      %s136 = ssub.s32 %s18, %s25
      %p137 = scmp.eq.s32.totalorder %s136, 0
      %s139 = sadd.s32 %s138, 1
      %s140 = scalar_select %p137, %s138, %s139
      %p143 = pneg %p137
      %p144 = scmp.eq.s32.totalorder %s18, 1
      %p145 = por %p143, %p144
      %p146 = scmp.ne.s32.totalorder %s138, %s141
      %p147 = scmp.eq.s32.totalorder %s18, 0
      %p148 = por %p146, %p147
      %p149 = scmp.ne.s32.totalorder %s138, %s141
      %p150 = scmp.eq.s32.totalorder %s23, 1
      %p151 = por %p149, %p150
      %p152 = scmp.ne.s32.totalorder %s141, %s142
      %p153 = scmp.eq.s32.totalorder %s23, 0
      %p154 = por %p152, %p153
      %p155 = scmp.ne.s32.totalorder %s141, %s142
      %p156 = scmp.eq.s32.totalorder %s24, 1
      %p157 = por %p155, %p156
      %p159 = scmp.ne.s32.totalorder %s142, %s158
      %p160 = scmp.eq.s32.totalorder %s24, 0
      %p161 = por %p159, %p160
      %p162 = scmp.le.s32.totalorder 1, %s18
      %p163 = scmp.lt.s32.totalorder %s18, 3
      %p164 = pnand %p162, %p163
      %p165 = pneg %p164
      // Predicated region
      $region9: #{tpu_custom_call.1} parent=5 // pred_check
        _
      $region10: #{tpu_custom_call.1} parent=5 // pred_check_branch
        %167 = sbr.rel (%p164) target = $region12
      $region11: #{tpu_custom_call.1} parent=5 // pred_region
        %s168 = ssub.s32 %s18, 1
        // Predicated region
        $region13: #{tpu_custom_call.1} parent=11 // pred_check
          %p169 = pneg %p65
        $region14: #{tpu_custom_call.1} parent=11 // pred_check_branch
          %171 = sbr.rel (%p169) target = $region16
        $region15: #{tpu_custom_call.1} parent=11 // pred_region
          _
        $region16: #{tpu_custom_call.1} parent=11 // pred_fallthru
          _
        // Predicated region
        $region17: #{tpu_custom_call.1} parent=11 // pred_check
          %p172 = pneg %p86
        $region18: #{tpu_custom_call.1} parent=11 // pred_check_branch
          %174 = sbr.rel (%p172) target = $region20
        $region19: #{tpu_custom_call.1} parent=11 // pred_region
          _
        $region20: #{tpu_custom_call.1} parent=11 // pred_fallthru
          _
        // Predicated region
        $region21: #{tpu_custom_call.1} parent=11 // pred_check
          %p175 = pneg %p107
        $region22: #{tpu_custom_call.1} parent=11 // pred_check_branch
          %177 = sbr.rel (%p175) target = $region24
        $region23: #{tpu_custom_call.1} parent=11 // pred_region
          %s179 = ssub.s32 7680, 7680
          %180 = vsyncadd [#allocation7], %s179
          %s181 = sshll.u32 [#allocation6], 4
          %s182 = int_to_ptr.vmem [resolvable:$true] %s181
          %187 = dma.hbm_to_vmem [thread:$0]  %s3, 7680, %s182, [#allocation7], 64, 64, 4
        $region24: #{tpu_custom_call.1} parent=11 // pred_fallthru
          _
        // Predicated region
        $region25: #{tpu_custom_call.1} parent=11 // pred_check
          %p188 = pneg %p128
        $region26: #{tpu_custom_call.1} parent=11 // pred_check_branch
          %190 = sbr.rel (%p188) target = $region28
        $region27: #{tpu_custom_call.1} parent=11 // pred_region
          _
        $region28: #{tpu_custom_call.1} parent=11 // pred_fallthru
          _
      $region12: #{tpu_custom_call.1} parent=5 // pred_fallthru
        _
      %p191 = scmp.lt.s32.totalorder %s18, 2
      // Predicated region
      $region29: #{tpu_custom_call.1} parent=5 // pred_check
        %p192 = pneg %p191
      $region30: #{tpu_custom_call.1} parent=5 // pred_check_branch
        %194 = sbr.rel (%p192) target = $region32
      $region31: #{tpu_custom_call.1} parent=5 // pred_region
        // Predicated region
        $region33: #{tpu_custom_call.1} parent=31 // pred_check
          %p195 = pneg %p38
        $region34: #{tpu_custom_call.1} parent=31 // pred_check_branch
          %197 = sbr.rel (%p195) target = $region36
        $region35: #{tpu_custom_call.1} parent=31 // pred_region
          %s198 = sand.u32 %s28, 1
          %s199 = scalar_lea.sflag [#allocation4], %s198
          %s200 = sand.u32 %s28, 1
          %s201 = smul.addr %s200, 288
          %s202 = scalar_lea.vmem [#allocation3], %s201
          %s203 = smul.u32 2, %s18
          %s205 = ssub.s32 4608, 4608
          %206 = vsyncadd %s199, %s205
          %s207 = smul.addr %s203, 36
          %s208 = smul.addr %s207, 64
          %s209 = scalar_lea.hbm %s0, %s208
          %s210 = sshll.u32 %s202, 4
          %s211 = int_to_ptr.vmem [resolvable:$true] %s210
          %216 = dma.hbm_to_vmem [thread:$0]  %s209, 4608, %s211, %s199, 64, 64, 4
        $region36: #{tpu_custom_call.1} parent=31 // pred_fallthru
          _
      $region32: #{tpu_custom_call.1} parent=5 // pred_fallthru
        _
      %p217 = scmp.le.s32.totalorder 1, %s18
      %p218 = scmp.lt.s32.totalorder %s18, 3
      %p219 = pnand %p217, %p218
      %p220 = pneg %p219
      // Predicated region
      $region37: #{tpu_custom_call.1} parent=5 // pred_check
        _
      $region38: #{tpu_custom_call.1} parent=5 // pred_check_branch
        %222 = sbr.rel (%p219) target = $region40
      $region39: #{tpu_custom_call.1} parent=5 // pred_region
        %s223 = ssub.s32 %s18, 1
        %s224 = sand.u32 %s31, 1
        %s225 = scalar_lea.sflag [#allocation4], %s224
        %s226 = sand.u32 %s31, 1
        %s227 = smul.addr %s226, 288
        %s228 = scalar_lea.vmem [#allocation3], %s227
        // Predicated region
        $region41: #{tpu_custom_call.1} parent=39 // pred_check
          %p229 = pneg %p44
        $region42: #{tpu_custom_call.1} parent=39 // pred_check_branch
          %231 = sbr.rel (%p229) target = $region44
        $region43: #{tpu_custom_call.1} parent=39 // pred_region
          %232 = dma.done %s225, 4608
        $region44: #{tpu_custom_call.1} parent=39 // pred_fallthru
          _
        // Predicated region
        $region45: #{tpu_custom_call.1} parent=39 // pred_check
          %p233 = pneg %p107
        $region46: #{tpu_custom_call.1} parent=39 // pred_check_branch
          %235 = sbr.rel (%p233) target = $region48
        $region47: #{tpu_custom_call.1} parent=39 // pred_region
          %236 = dma.done [#allocation7], 7680
        $region48: #{tpu_custom_call.1} parent=39 // pred_fallthru
          _
        %s237 = sand.u32 %s31, 1
        %s238 = scalar_lea.sflag [#allocation4], %s237
        %s239 = sand.u32 %s31, 1
        %s240 = smul.addr %s239, 288
        %s241 = scalar_lea.vmem [#allocation3], %s240
        %p242 = pneg %p44
        %p243 = pneg %p41
        %p244 = pneg %p65
        %p245 = pneg %p62
        %p246 = pneg %p86
        %p247 = pneg %p83
        %p248 = pneg %p107
        %p249 = pneg %p104
        %p250 = pneg %p128
        %p251 = pneg %p125
        %p252 = pneg %p154
        %p253 = pneg %p151
        %s254 = sand.u32 %s141, 1
        %s255 = scalar_lea.sflag [#allocation5], %s254
        %s256 = sand.u32 %s141, 1
        %s257 = smul.addr %s256, 32
        %s258 = scalar_lea.vmem [#allocation8], %s257
        %s259 = smul.u32 2, %s23
        %s260 = smul.u32 2, %s23
        %v262 = vld [vmem:[%s1] sm:$0xf]
        %v263 = vld [vmem:[%s1 + $0x4] sm:$0xf]
        %v264 = vld [vmem:[%s1 + $0x8] sm:$0xf]
        %v265 = vld [vmem:[%s1 + $0xc] sm:$0xf]
        %v266 = vld [vmem:[%s1 + $0x10] sm:$0xf]
        %v267 = vld [vmem:[%s1 + $0x14] sm:$0xf]
        %v268 = vld [vmem:[%s1 + $0x18] sm:$0xf]
        %v269 = vld [vmem:[%s1 + $0x1c] sm:$0xf]
        %v270 = vld [vmem:[%s1 + $0x20] sm:$0xf]
        %v271 = vld [vmem:[%s1 + $0x24] sm:$0xf]
        %v272 = vld [vmem:[%s1 + $0x28] sm:$0xf]
        %v273 = vld [vmem:[%s1 + $0x2c] sm:$0x1]
        %v274 = vld [vmem:[%s2] sm:$0x1]
        %v276 = vlaneseq
        %v277 = vshrl.u32 %v276, 7
        %v278 = vsub.s32 0, %v277
        %v279 = vrot.slane %v274, %v278
        %v281 = vld [vmem:[%s4] sm:$0x1]
        %v283 = vlaneseq
        %v284 = vshrl.u32 %v283, 7
        %v285 = vsub.s32 0, %v284
        %v286 = vrot.slane %v281, %v285
        %v288 = vld [vmem:[%s228] sm:$0xf]
        %v289 = vld [vmem:[%s228 + $0x4] sm:$0xf]
        %v290 = vld [vmem:[%s228 + $0x8] sm:$0xf]
        %v291 = vld [vmem:[%s228 + $0xc] sm:$0xf]
        %v292 = vld [vmem:[%s228 + $0x10] sm:$0xf]
        %v293 = vld [vmem:[%s228 + $0x14] sm:$0xf]
        %v294 = vld [vmem:[%s228 + $0x90] sm:$0xf]
        %v295 = vld [vmem:[%s228 + $0x94] sm:$0xf]
        %v296 = vld [vmem:[%s228 + $0x98] sm:$0xf]
        %v297 = vld [vmem:[%s228 + $0x9c] sm:$0xf]
        %v298 = vld [vmem:[%s228 + $0xa0] sm:$0xf]
        %v299 = vld [vmem:[%s228 + $0xa4] sm:$0xf]
        %v312 = vunpack.c.l.b16 %v288
        %v313 = vunpack.c.l.b16 %v289
        %v314 = vunpack.c.l.b16 %v290
        %v315 = vunpack.c.l.b16 %v291
        %v316 = vunpack.c.l.b16 %v292
        %v317 = vunpack.c.l.b16 %v293
        %v318 = vunpack.c.l.b16 %v294
        %v319 = vunpack.c.l.b16 %v295
        %v320 = vunpack.c.l.b16 %v296
        %v321 = vunpack.c.l.b16 %v297
        %v322 = vunpack.c.l.b16 %v298
        %v323 = vunpack.c.l.b16 %v299
        %v324 = vpack.c.b16 %v313, %v312
        %v325 = vpack.c.b16 %v315, %v314
        %v326 = vpack.c.b16 %v317, %v316
        %v327 = vpack.c.b16 %v319, %v318
        %v328 = vpack.c.b16 %v321, %v320
        %v329 = vpack.c.b16 %v323, %v322
        %v342 = vunpack.c.l.b16 %v262
        %v343 = vunpack.c.l.b16 %v263
        %v344 = vunpack.c.l.b16 %v264
        %v345 = vunpack.c.l.b16 %v265
        %v346 = vunpack.c.l.b16 %v266
        %v347 = vunpack.c.l.b16 %v267
        %v348 = vunpack.c.l.b16 %v268
        %v349 = vunpack.c.l.b16 %v269
        %v350 = vunpack.c.l.b16 %v270
        %v351 = vunpack.c.l.b16 %v271
        %v352 = vunpack.c.l.b16 %v272
        %v353 = vunpack.c.l.b16 %v273
        %v354 = vpack.c.b16 %v343, %v342
        %v355 = vpack.c.b16 %v345, %v344
        %v356 = vpack.c.b16 %v347, %v346
        %v357 = vpack.c.b16 %v349, %v348
        %v358 = vpack.c.b16 %v351, %v350
        %v359 = vpack.c.b16 %v353, %v352
        %vm365 = vcmask 736256
        %v367 = vsel %vm365, %v324, 0
        %v370 = vsel %vm365, %v325, 0
        %v373 = vsel %vm365, %v326, 0
        %v376 = vsel %vm365, %v327, 0
        %v379 = vsel %vm365, %v328, 0
        %v382 = vsel %vm365, %v329, 0
        %vm384 = vcmask 1044480
        %v386 = vsel %vm384, %v359, 0
        %388 = vmatprep.subr.bf16.mxu0 0
        %389 = vmatpush1.bf16.msra.mxu0 %v354
        %390 = vmatprep.subr.bf16.mxu0 0
        %391 = vmatpush1.bf16.msra.mxu0 %v355
        %392 = vmatprep.subr.bf16.mxu0 0
        %393 = vmatpush1.bf16.msra.mxu0 %v356
        %394 = vmatprep.subr.bf16.mxu0 0
        %395 = vmatpush1.bf16.msra.mxu0 %v357
        %396 = vmatprep.subr.bf16.mxu0 0
        %397 = vmatpush1.bf16.msra.mxu0 %v358
        %398 = vmatprep.subr.bf16.mxu0 0
        %399 = vmatpush1.bf16.msra.mxu0 %v386
        %400 = vmatprep.subr.bf16.mxu0 0
        %401 = vmatpush1.bf16.msra.mxu0 0
        %402 = vmatprep.subr.bf16.mxu0 0
        %403 = vmatpush1.bf16.msra.mxu0 0
        %404 = vmatprep.subr.bf16.mxu0 0
        %405 = vmatpush1.bf16.msra.mxu0 0
        %406 = vmatprep.subr.bf16.mxu0 0
        %407 = vmatpush1.bf16.msra.mxu0 0
        %408 = vmatprep.subr.bf16.mxu0 0
        %409 = vmatpush1.bf16.msra.mxu0 0
        %410 = vmatprep.subr.bf16.mxu0 0
        %411 = vmatpush1.bf16.msra.mxu0 0
        %412 = vmatprep.subr.bf16.mxu0 0
        %413 = vmatpush1.bf16.msra.mxu0 0
        %414 = vmatprep.subr.bf16.mxu0 0
        %415 = vmatpush1.bf16.msra.mxu0 0
        %416 = vmatprep.subr.bf16.mxu0 0
        %417 = vmatpush1.bf16.msra.mxu0 0
        %418 = vmatprep.subr.bf16.mxu0 0
        %419 = vmatpush1.bf16.msra.mxu0 0
        %420 = vmatprep.mubr.bf16.mxu0 0
        %421 = vmatmul.mubr.bf16.gmra.mrb[0].mxu0 %v367
        %v422 = vpop.f32.mrb[0].mxu0
        %v423 = vadd.f32 0.0, %v422
        %v424 = vpop.f32.mrb[0].mxu0
        %v425 = vpop.f32.mrb[0].mxu0
        %v426 = vadd.f32 0.0, %v425
        %v427 = vpop.f32.mrb[0].mxu0
        %428 = vmatprep.mubr.bf16.mxu0 0
        %429 = vmatmul.mubr.bf16.gmra.mrb[0].mxu0 %v370
        %v430 = vpop.f32.mrb[0].mxu0
        %v431 = vadd.f32 0.0, %v430
        %v432 = vpop.f32.mrb[0].mxu0
        %v433 = vpop.f32.mrb[0].mxu0
        %v434 = vadd.f32 0.0, %v433
        %v435 = vpop.f32.mrb[0].mxu0
        %436 = vmatprep.mubr.bf16.mxu0 0
        %437 = vmatmul.mubr.bf16.gmra.mrb[0].mxu0 %v373
        %v438 = vpop.f32.mrb[0].mxu0
        %v439 = vadd.f32 0.0, %v438
        %v440 = vpop.f32.mrb[0].mxu0
        %v441 = vpop.f32.mrb[0].mxu0
        %v442 = vadd.f32 0.0, %v441
        %v443 = vpop.f32.mrb[0].mxu0
        %444 = vmatprep.mubr.bf16.mxu0 0
        %445 = vmatmul.mubr.bf16.gmra.mrb[0].mxu0 %v376
        %v446 = vpop.f32.mrb[0].mxu0
        %v447 = vadd.f32 0.0, %v446
        %v448 = vpop.f32.mrb[0].mxu0
        %v449 = vpop.f32.mrb[0].mxu0
        %v450 = vadd.f32 0.0, %v449
        %v451 = vpop.f32.mrb[0].mxu0
        %452 = vmatprep.mubr.bf16.mxu0 0
        %453 = vmatmul.mubr.bf16.gmra.mrb[0].mxu0 %v379
        %v454 = vpop.f32.mrb[0].mxu0
        %v455 = vadd.f32 0.0, %v454
        %v456 = vpop.f32.mrb[0].mxu0
        %v457 = vpop.f32.mrb[0].mxu0
        %v458 = vadd.f32 0.0, %v457
        %v459 = vpop.f32.mrb[0].mxu0
        %460 = vmatprep.mubr.bf16.mxu0 0
        %461 = vmatmul.mubr.bf16.gmra.mrb[0].mxu0 %v382
        %v462 = vpop.f32.mrb[0].mxu0
        %v463 = vadd.f32 0.0, %v462
        %v464 = vpop.f32.mrb[0].mxu0
        %v465 = vpop.f32.mrb[0].mxu0
        %v466 = vadd.f32 0.0, %v465
        %v467 = vpop.f32.mrb[0].mxu0
        %468 = vdwg.mxu0
        %481 = vrot.lane.b32.xlu0 %v423, 96
        %v482 = vpop.permute.xlu0 %481
        %483 = vrot.lane.b32.xlu0 %v426, 96
        %v484 = vpop.permute.xlu0 %483
        %485 = vrot.lane.b32.xlu0 %v431, 96
        %v486 = vpop.permute.xlu0 %485
        %487 = vrot.lane.b32.xlu0 %v434, 96
        %v488 = vpop.permute.xlu0 %487
        %489 = vrot.lane.b32.xlu0 %v439, 96
        %v490 = vpop.permute.xlu0 %489
        %491 = vrot.lane.b32.xlu0 %v442, 96
        %v492 = vpop.permute.xlu0 %491
        %493 = vrot.lane.b32.xlu0 %v447, 96
        %v494 = vpop.permute.xlu0 %493
        %495 = vrot.lane.b32.xlu0 %v450, 96
        %v496 = vpop.permute.xlu0 %495
        %497 = vrot.lane.b32.xlu0 %v455, 96
        %v498 = vpop.permute.xlu0 %497
        %499 = vrot.lane.b32.xlu0 %v458, 96
        %v500 = vpop.permute.xlu0 %499
        %501 = vrot.lane.b32.xlu0 %v463, 96
        %v502 = vpop.permute.xlu0 %501
        %503 = vrot.lane.b32.xlu0 %v466, 96
        %v504 = vpop.permute.xlu0 %503
        %v517 = vmax.f32 %v423, %v482
        %v518 = vmax.f32 %v426, %v484
        %v519 = vmax.f32 %v431, %v486
        %v520 = vmax.f32 %v434, %v488
        %v521 = vmax.f32 %v439, %v490
        %v522 = vmax.f32 %v442, %v492
        %v523 = vmax.f32 %v447, %v494
        %v524 = vmax.f32 %v450, %v496
        %v525 = vmax.f32 %v455, %v498
        %v526 = vmax.f32 %v458, %v500
        %v527 = vmax.f32 %v463, %v502
        %v528 = vmax.f32 %v466, %v504
        %vm537 = vcmask 1043456
        %v538 = vrot.slane %v518, 4
        %v539 = vrot.slane %v519, 4
        %v540 = vsel %vm537, %v538, %v539
        %v541 = vrot.slane %v521, 4
        %v542 = vrot.slane %v522, 4
        %v543 = vsel %vm537, %v541, %v542
        %v544 = vrot.slane %v524, 4
        %v545 = vrot.slane %v525, 4
        %v546 = vsel %vm537, %v544, %v545
        %v547 = vrot.slane %v527, 4
        %v548 = vrot.slane %v528, 4
        %v549 = vsel %vm537, %v547, %v548
        %v558 = vmax.f32 %v517, %v540
        %v559 = vmax.f32 %v518, %v539
        %v560 = vmax.f32 %v520, %v543
        %v561 = vmax.f32 %v521, %v542
        %v562 = vmax.f32 %v523, %v546
        %v563 = vmax.f32 %v524, %v545
        %v564 = vmax.f32 %v526, %v549
        %v565 = vmax.f32 %v527, %v548
        %v566 = vadd.f32 %v558, %v279
        %v567 = vadd.f32 %v559, %v279
        %v568 = vadd.f32 %v560, %v279
        %v569 = vadd.f32 %v561, %v279
        %v570 = vadd.f32 %v562, %v279
        %v571 = vadd.f32 %v563, %v279
        %v572 = vadd.f32 %v564, %v279
        %v573 = vadd.f32 %v565, %v279
        %v574 = vmax.f32 %v566, 0.0
        %v575 = vmax.f32 %v567, 0.0
        %v576 = vmax.f32 %v568, 0.0
        %v577 = vmax.f32 %v569, 0.0
        %v578 = vmax.f32 %v570, 0.0
        %v579 = vmax.f32 %v571, 0.0
        %v580 = vmax.f32 %v572, 0.0
        %v581 = vmax.f32 %v573, 0.0
        %vm586 = vcmask 1041408
        %v587 = vrot.slane %v574, 6
        %v588 = vrot.slane %v575, 6
        %v589 = vsel %vm586, %v587, %v588
        %v590 = vrot.slane %v578, 6
        %v591 = vrot.slane %v579, 6
        %v592 = vsel %vm586, %v590, %v591
        %593 = vrot.lane.b32.xlu0 %v589, 32
        %v594 = vpop.permute.xlu0 %593
        %595 = vrot.lane.b32.xlu0 %v592, 32
        %v596 = vpop.permute.xlu0 %595
        %v599 = vrot.slane %v574, 1
        %v600 = vrot.slane %v578, 1
        %601 = vrot.lane.b32.xlu0 %v599, 64
        %v602 = vpop.permute.xlu0 %601
        %603 = vrot.lane.b32.xlu0 %v600, 64
        %v604 = vpop.permute.xlu0 %603
        %vm607 = vcmask 1040384
        %v608 = vrot.slane %v574, 7
        %v609 = vrot.slane %v575, 7
        %v610 = vsel %vm607, %v608, %v609
        %v611 = vrot.slane %v578, 7
        %v612 = vrot.slane %v579, 7
        %v613 = vsel %vm607, %v611, %v612
        %614 = vrot.lane.b32.xlu0 %v610, 96
        %v615 = vpop.permute.xlu0 %614
        %616 = vrot.lane.b32.xlu0 %v613, 96
        %v617 = vpop.permute.xlu0 %616
        %v620 = vrot.slane %v574, 2
        %v621 = vrot.slane %v578, 2
        %vm624 = vcmask 261120
        %v625 = vsel %vm624, %v574, %v594
        %v626 = vsel %vm624, %v578, %v596
        %vm627 = vcmask 523264
        %v628 = vsel %vm627, %v625, %v602
        %v629 = vsel %vm627, %v626, %v604
        %vm630 = vcmask 785408
        %v631 = vsel %vm630, %v628, %v615
        %v632 = vsel %vm630, %v629, %v617
        %v633 = vrot.slane %v574, 3
        %v634 = vrot.slane %v578, 3
        %635 = vrot.lane.b32.xlu0 %v633, 32
        %v636 = vpop.permute.xlu0 %635
        %637 = vrot.lane.b32.xlu0 %v634, 32
        %v638 = vpop.permute.xlu0 %637
        %vm641 = vcmask 1046528
        %v642 = vrot.slane %v575, 1
        %v643 = vsel %vm641, %v599, %v642
        %v644 = vrot.slane %v579, 1
        %v645 = vsel %vm641, %v600, %v644
        %646 = vrot.lane.b32.xlu0 %v643, 64
        %v647 = vpop.permute.xlu0 %646
        %648 = vrot.lane.b32.xlu0 %v642, 64
        %v649 = vpop.permute.xlu0 %648
        %650 = vrot.lane.b32.xlu0 %v645, 64
        %v651 = vpop.permute.xlu0 %650
        %652 = vrot.lane.b32.xlu0 %v644, 64
        %v653 = vpop.permute.xlu0 %652
        %v658 = vrot.slane %v574, 4
        %v659 = vrot.slane %v578, 4
        %660 = vrot.lane.b32.xlu0 %v658, 96
        %v661 = vpop.permute.xlu0 %660
        %662 = vrot.lane.b32.xlu0 %v659, 96
        %v663 = vpop.permute.xlu0 %662
        %v666 = vrot.slane %v575, 2
        %v667 = vrot.slane %v579, 2
        %v668 = vsel %vm624, %v574, %v636
        %v669 = vsel %vm624, %v575, %v636
        %v670 = vsel %vm624, %v578, %v638
        %v671 = vsel %vm624, %v579, %v638
        %v672 = vsel %vm627, %v668, %v647
        %v673 = vsel %vm627, %v669, %v649
        %v674 = vsel %vm627, %v670, %v651
        %v675 = vsel %vm627, %v671, %v653
        %v676 = vsel %vm630, %v672, %v661
        %v677 = vsel %vm630, %v673, %v661
        %v678 = vsel %vm630, %v674, %v663
        %v679 = vsel %vm630, %v675, %v663
        %vm684 = vcmask 1045504
        %v685 = vrot.slane %v676, 2
        %v686 = vrot.slane %v677, 2
        %v687 = vsel %vm684, %v685, %v686
        %v688 = vrot.slane %v666, 2
        %v689 = vsel %vm684, %v688, %v688
        %v690 = vrot.slane %v678, 2
        %v691 = vrot.slane %v679, 2
        %v692 = vsel %vm684, %v690, %v691
        %v693 = vrot.slane %v667, 2
        %v694 = vsel %vm684, %v693, %v693
        %v699 = vsel %vm537, %v631, %v687
        %v700 = vsel %vm537, %v620, %v689
        %v701 = vsel %vm537, %v632, %v692
        %v702 = vsel %vm537, %v621, %v694
        %v703 = vpack.c.bf16 %v701, %v699
        %v704 = vpack.c.bf16 %v702, %v700
        %705 = vst [vmem:[#allocation2] sm:$0xff] %v703
        %706 = vst.msk [vmem:[#allocation2 + $0x8] sm:$0xff] %vm624, %v704
        %v711 = vrot.slane %v576, 6
        %v712 = vrot.slane %v577, 6
        %v713 = vsel %vm586, %v711, %v712
        %v714 = vrot.slane %v580, 6
        %v715 = vrot.slane %v581, 6
        %v716 = vsel %vm586, %v714, %v715
        %717 = vrot.lane.b32.xlu0 %v713, 32
        %v718 = vpop.permute.xlu0 %717
        %719 = vrot.lane.b32.xlu0 %v716, 32
        %v720 = vpop.permute.xlu0 %719
        %v723 = vrot.slane %v576, 1
        %v724 = vrot.slane %v580, 1
        %725 = vrot.lane.b32.xlu0 %v723, 64
        %v726 = vpop.permute.xlu0 %725
        %727 = vrot.lane.b32.xlu0 %v724, 64
        %v728 = vpop.permute.xlu0 %727
        %v731 = vrot.slane %v576, 7
        %v732 = vrot.slane %v577, 7
        %v733 = vsel %vm607, %v731, %v732
        %v734 = vrot.slane %v580, 7
        %v735 = vrot.slane %v581, 7
        %v736 = vsel %vm607, %v734, %v735
        %737 = vrot.lane.b32.xlu0 %v733, 96
        %v738 = vpop.permute.xlu0 %737
        %739 = vrot.lane.b32.xlu0 %v736, 96
        %v740 = vpop.permute.xlu0 %739
        %v743 = vrot.slane %v576, 2
        %v744 = vrot.slane %v580, 2
        %v747 = vsel %vm624, %v576, %v718
        %v748 = vsel %vm624, %v580, %v720
        %v749 = vsel %vm627, %v747, %v726
        %v750 = vsel %vm627, %v748, %v728
        %v751 = vsel %vm630, %v749, %v738
        %v752 = vsel %vm630, %v750, %v740
        %v753 = vrot.slane %v576, 3
        %v754 = vrot.slane %v580, 3
        %755 = vrot.lane.b32.xlu0 %v753, 32
        %v756 = vpop.permute.xlu0 %755
        %757 = vrot.lane.b32.xlu0 %v754, 32
        %v758 = vpop.permute.xlu0 %757
        %v761 = vrot.slane %v577, 1
        %v762 = vsel %vm641, %v723, %v761
        %v763 = vrot.slane %v581, 1
        %v764 = vsel %vm641, %v724, %v763
        %765 = vrot.lane.b32.xlu0 %v762, 64
        %v766 = vpop.permute.xlu0 %765
        %767 = vrot.lane.b32.xlu0 %v761, 64
        %v768 = vpop.permute.xlu0 %767
        %769 = vrot.lane.b32.xlu0 %v764, 64
        %v770 = vpop.permute.xlu0 %769
        %771 = vrot.lane.b32.xlu0 %v763, 64
        %v772 = vpop.permute.xlu0 %771
        %v777 = vrot.slane %v576, 4
        %v778 = vrot.slane %v580, 4
        %779 = vrot.lane.b32.xlu0 %v777, 96
        %v780 = vpop.permute.xlu0 %779
        %781 = vrot.lane.b32.xlu0 %v778, 96
        %v782 = vpop.permute.xlu0 %781
        %v785 = vrot.slane %v577, 2
        %v786 = vrot.slane %v581, 2
        %v787 = vsel %vm624, %v576, %v756
        %v788 = vsel %vm624, %v577, %v756
        %v789 = vsel %vm624, %v580, %v758
        %v790 = vsel %vm624, %v581, %v758
        %v791 = vsel %vm627, %v787, %v766
        %v792 = vsel %vm627, %v788, %v768
        %v793 = vsel %vm627, %v789, %v770
        %v794 = vsel %vm627, %v790, %v772
        %v795 = vsel %vm630, %v791, %v780
        %v796 = vsel %vm630, %v792, %v780
        %v797 = vsel %vm630, %v793, %v782
        %v798 = vsel %vm630, %v794, %v782
        %v803 = vrot.slane %v795, 2
        %v804 = vrot.slane %v796, 2
        %v805 = vsel %vm684, %v803, %v804
        %v806 = vrot.slane %v785, 2
        %v807 = vsel %vm684, %v806, %v806
        %v808 = vrot.slane %v797, 2
        %v809 = vrot.slane %v798, 2
        %v810 = vsel %vm684, %v808, %v809
        %v811 = vrot.slane %v786, 2
        %v812 = vsel %vm684, %v811, %v811
        %v817 = vsel %vm537, %v751, %v805
        %v818 = vsel %vm537, %v743, %v807
        %v819 = vsel %vm537, %v752, %v810
        %v820 = vsel %vm537, %v744, %v812
        %v821 = vpack.c.bf16 %v819, %v817
        %v822 = vpack.c.bf16 %v820, %v818
        %s823 = scalar_lea.vmem [#allocation2], 16
        %824 = vst [vmem:[%s823] sm:$0xff] %v821
        %825 = vst.msk [vmem:[%s823 + $0x8] sm:$0xff] %vm624, %v822
        %s826 = scalar_lea.vmem %s228, 24 [#allocation3]
        %v827 = vld [vmem:[%s826] sm:$0xf]
        %v828 = vld [vmem:[%s826 + $0x4] sm:$0xf]
        %v829 = vld [vmem:[%s826 + $0x8] sm:$0xf]
        %v830 = vld [vmem:[%s826 + $0xc] sm:$0xf]
        %v831 = vld [vmem:[%s826 + $0x10] sm:$0xf]
        %v832 = vld [vmem:[%s826 + $0x14] sm:$0xf]
        %v833 = vld [vmem:[%s826 + $0x90] sm:$0xf]
        %v834 = vld [vmem:[%s826 + $0x94] sm:$0xf]
        %v835 = vld [vmem:[%s826 + $0x98] sm:$0xf]
        %v836 = vld [vmem:[%s826 + $0x9c] sm:$0xf]
        %v837 = vld [vmem:[%s826 + $0xa0] sm:$0xf]
        %v838 = vld [vmem:[%s826 + $0xa4] sm:$0xf]
        %v851 = vunpack.c.l.b16 %v827
        %v852 = vunpack.c.l.b16 %v828
        %v853 = vunpack.c.l.b16 %v829
        %v854 = vunpack.c.l.b16 %v830
        %v855 = vunpack.c.l.b16 %v831
        %v856 = vunpack.c.l.b16 %v832
        %v857 = vunpack.c.l.b16 %v833
        %v858 = vunpack.c.l.b16 %v834
        %v859 = vunpack.c.l.b16 %v835
        %v860 = vunpack.c.l.b16 %v836
        %v861 = vunpack.c.l.b16 %v837
        %v862 = vunpack.c.l.b16 %v838
        %v863 = vpack.c.b16 %v852, %v851
        %v864 = vpack.c.b16 %v854, %v853
        %v865 = vpack.c.b16 %v856, %v855
        %v866 = vpack.c.b16 %v858, %v857
        %v867 = vpack.c.b16 %v860, %v859
        %v868 = vpack.c.b16 %v862, %v861
        %v870 = vsel %vm365, %v863, 0
        %v873 = vsel %vm365, %v864, 0
        %v876 = vsel %vm365, %v865, 0
        %v879 = vsel %vm365, %v866, 0
        %v882 = vsel %vm365, %v867, 0
        %v885 = vsel %vm365, %v868, 0
        %887 = vmatprep.subr.bf16.mxu0 0
        %888 = vmatpush1.bf16.msra.mxu0 %v354
        %889 = vmatprep.subr.bf16.mxu0 0
        %890 = vmatpush1.bf16.msra.mxu0 %v355
        %891 = vmatprep.subr.bf16.mxu0 0
        %892 = vmatpush1.bf16.msra.mxu0 %v356
        %893 = vmatprep.subr.bf16.mxu0 0
        %894 = vmatpush1.bf16.msra.mxu0 %v357
        %895 = vmatprep.subr.bf16.mxu0 0
        %896 = vmatpush1.bf16.msra.mxu0 %v358
        %897 = vmatprep.subr.bf16.mxu0 0
        %898 = vmatpush1.bf16.msra.mxu0 %v386
        %899 = vmatprep.subr.bf16.mxu0 0
        %900 = vmatpush1.bf16.msra.mxu0 0
        %901 = vmatprep.subr.bf16.mxu0 0
        %902 = vmatpush1.bf16.msra.mxu0 0
        %903 = vmatprep.subr.bf16.mxu0 0
        %904 = vmatpush1.bf16.msra.mxu0 0
        %905 = vmatprep.subr.bf16.mxu0 0
        %906 = vmatpush1.bf16.msra.mxu0 0
        %907 = vmatprep.subr.bf16.mxu0 0
        %908 = vmatpush1.bf16.msra.mxu0 0
        %909 = vmatprep.subr.bf16.mxu0 0
        %910 = vmatpush1.bf16.msra.mxu0 0
        %911 = vmatprep.subr.bf16.mxu0 0
        %912 = vmatpush1.bf16.msra.mxu0 0
        %913 = vmatprep.subr.bf16.mxu0 0
        %914 = vmatpush1.bf16.msra.mxu0 0
        %915 = vmatprep.subr.bf16.mxu0 0
        %916 = vmatpush1.bf16.msra.mxu0 0
        %917 = vmatprep.subr.bf16.mxu0 0
        %918 = vmatpush1.bf16.msra.mxu0 0
        %919 = vmatprep.mubr.bf16.mxu0 0
        %920 = vmatmul.mubr.bf16.gmra.mrb[0].mxu0 %v870
        %v921 = vpop.f32.mrb[0].mxu0
        %v922 = vadd.f32 0.0, %v921
        %v923 = vpop.f32.mrb[0].mxu0
        %v924 = vpop.f32.mrb[0].mxu0
        %v925 = vadd.f32 0.0, %v924
        %v926 = vpop.f32.mrb[0].mxu0
        %927 = vmatprep.mubr.bf16.mxu0 0
        %928 = vmatmul.mubr.bf16.gmra.mrb[0].mxu0 %v873
        %v929 = vpop.f32.mrb[0].mxu0
        %v930 = vadd.f32 0.0, %v929
        %v931 = vpop.f32.mrb[0].mxu0
        %v932 = vpop.f32.mrb[0].mxu0
        %v933 = vadd.f32 0.0, %v932
        %v934 = vpop.f32.mrb[0].mxu0
        %935 = vmatprep.mubr.bf16.mxu0 0
        %936 = vmatmul.mubr.bf16.gmra.mrb[0].mxu0 %v876
        %v937 = vpop.f32.mrb[0].mxu0
        %v938 = vadd.f32 0.0, %v937
        %v939 = vpop.f32.mrb[0].mxu0
        %v940 = vpop.f32.mrb[0].mxu0
        %v941 = vadd.f32 0.0, %v940
        %v942 = vpop.f32.mrb[0].mxu0
        %943 = vmatprep.mubr.bf16.mxu0 0
        %944 = vmatmul.mubr.bf16.gmra.mrb[0].mxu0 %v879
        %v945 = vpop.f32.mrb[0].mxu0
        %v946 = vadd.f32 0.0, %v945
        %v947 = vpop.f32.mrb[0].mxu0
        %v948 = vpop.f32.mrb[0].mxu0
        %v949 = vadd.f32 0.0, %v948
        %v950 = vpop.f32.mrb[0].mxu0
        %951 = vmatprep.mubr.bf16.mxu0 0
        %952 = vmatmul.mubr.bf16.gmra.mrb[0].mxu0 %v882
        %v953 = vpop.f32.mrb[0].mxu0
        %v954 = vadd.f32 0.0, %v953
        %v955 = vpop.f32.mrb[0].mxu0
        %v956 = vpop.f32.mrb[0].mxu0
        %v957 = vadd.f32 0.0, %v956
        %v958 = vpop.f32.mrb[0].mxu0
        %959 = vmatprep.mubr.bf16.mxu0 0
        %960 = vmatmul.mubr.bf16.gmra.mrb[0].mxu0 %v885
        %v961 = vpop.f32.mrb[0].mxu0
        %v962 = vadd.f32 0.0, %v961
        %v963 = vpop.f32.mrb[0].mxu0
        %v964 = vpop.f32.mrb[0].mxu0
        %v965 = vadd.f32 0.0, %v964
        %v966 = vpop.f32.mrb[0].mxu0
        %967 = vdwg.mxu0
        %980 = vrot.lane.b32.xlu0 %v922, 96
        %v981 = vpop.permute.xlu0 %980
        %982 = vrot.lane.b32.xlu0 %v925, 96
        %v983 = vpop.permute.xlu0 %982
        %984 = vrot.lane.b32.xlu0 %v930, 96
        %v985 = vpop.permute.xlu0 %984
        %986 = vrot.lane.b32.xlu0 %v933, 96
        %v987 = vpop.permute.xlu0 %986
        %988 = vrot.lane.b32.xlu0 %v938, 96
        %v989 = vpop.permute.xlu0 %988
        %990 = vrot.lane.b32.xlu0 %v941, 96
        %v991 = vpop.permute.xlu0 %990
        %992 = vrot.lane.b32.xlu0 %v946, 96
        %v993 = vpop.permute.xlu0 %992
        %994 = vrot.lane.b32.xlu0 %v949, 96
        %v995 = vpop.permute.xlu0 %994
        %996 = vrot.lane.b32.xlu0 %v954, 96
        %v997 = vpop.permute.xlu0 %996
        %998 = vrot.lane.b32.xlu0 %v957, 96
        %v999 = vpop.permute.xlu0 %998
        %1000 = vrot.lane.b32.xlu0 %v962, 96
        %v1001 = vpop.permute.xlu0 %1000
        %1002 = vrot.lane.b32.xlu0 %v965, 96
        %v1003 = vpop.permute.xlu0 %1002
        %v1016 = vmax.f32 %v922, %v981
        %v1017 = vmax.f32 %v925, %v983
        %v1018 = vmax.f32 %v930, %v985
        %v1019 = vmax.f32 %v933, %v987
        %v1020 = vmax.f32 %v938, %v989
        %v1021 = vmax.f32 %v941, %v991
        %v1022 = vmax.f32 %v946, %v993
        %v1023 = vmax.f32 %v949, %v995
        %v1024 = vmax.f32 %v954, %v997
        %v1025 = vmax.f32 %v957, %v999
        %v1026 = vmax.f32 %v962, %v1001
        %v1027 = vmax.f32 %v965, %v1003
        %v1036 = vrot.slane %v1017, 4
        %v1037 = vrot.slane %v1018, 4
        %v1038 = vsel %vm537, %v1036, %v1037
        %v1039 = vrot.slane %v1020, 4
        %v1040 = vrot.slane %v1021, 4
        %v1041 = vsel %vm537, %v1039, %v1040
        %v1042 = vrot.slane %v1023, 4
        %v1043 = vrot.slane %v1024, 4
        %v1044 = vsel %vm537, %v1042, %v1043
        %v1045 = vrot.slane %v1026, 4
        %v1046 = vrot.slane %v1027, 4
        %v1047 = vsel %vm537, %v1045, %v1046
        %v1056 = vmax.f32 %v1016, %v1038
        %v1057 = vmax.f32 %v1017, %v1037
        %v1058 = vmax.f32 %v1019, %v1041
        %v1059 = vmax.f32 %v1020, %v1040
        %v1060 = vmax.f32 %v1022, %v1044
        %v1061 = vmax.f32 %v1023, %v1043
        %v1062 = vmax.f32 %v1025, %v1047
        %v1063 = vmax.f32 %v1026, %v1046
        %v1064 = vadd.f32 %v1056, %v279
        %v1065 = vadd.f32 %v1057, %v279
        %v1066 = vadd.f32 %v1058, %v279
        %v1067 = vadd.f32 %v1059, %v279
        %v1068 = vadd.f32 %v1060, %v279
        %v1069 = vadd.f32 %v1061, %v279
        %v1070 = vadd.f32 %v1062, %v279
        %v1071 = vadd.f32 %v1063, %v279
        %v1072 = vmax.f32 %v1064, 0.0
        %v1073 = vmax.f32 %v1065, 0.0
        %v1074 = vmax.f32 %v1066, 0.0
        %v1075 = vmax.f32 %v1067, 0.0
        %v1076 = vmax.f32 %v1068, 0.0
        %v1077 = vmax.f32 %v1069, 0.0
        %v1078 = vmax.f32 %v1070, 0.0
        %v1079 = vmax.f32 %v1071, 0.0
        %v1084 = vrot.slane %v1072, 6
        %v1085 = vrot.slane %v1073, 6
        %v1086 = vsel %vm586, %v1084, %v1085
        %v1087 = vrot.slane %v1076, 6
        %v1088 = vrot.slane %v1077, 6
        %v1089 = vsel %vm586, %v1087, %v1088
        %1090 = vrot.lane.b32.xlu0 %v1086, 32
        %v1091 = vpop.permute.xlu0 %1090
        %1092 = vrot.lane.b32.xlu0 %v1089, 32
        %v1093 = vpop.permute.xlu0 %1092
        %v1096 = vrot.slane %v1072, 1
        %v1097 = vrot.slane %v1076, 1
        %1098 = vrot.lane.b32.xlu0 %v1096, 64
        %v1099 = vpop.permute.xlu0 %1098
        %1100 = vrot.lane.b32.xlu0 %v1097, 64
        %v1101 = vpop.permute.xlu0 %1100
        %v1104 = vrot.slane %v1072, 7
        %v1105 = vrot.slane %v1073, 7
        %v1106 = vsel %vm607, %v1104, %v1105
        %v1107 = vrot.slane %v1076, 7
        %v1108 = vrot.slane %v1077, 7
        %v1109 = vsel %vm607, %v1107, %v1108
        %1110 = vrot.lane.b32.xlu0 %v1106, 96
        %v1111 = vpop.permute.xlu0 %1110
        %1112 = vrot.lane.b32.xlu0 %v1109, 96
        %v1113 = vpop.permute.xlu0 %1112
        %v1116 = vrot.slane %v1072, 2
        %v1117 = vrot.slane %v1076, 2
        %v1120 = vsel %vm624, %v1072, %v1091
        %v1121 = vsel %vm624, %v1076, %v1093
        %v1122 = vsel %vm627, %v1120, %v1099
        %v1123 = vsel %vm627, %v1121, %v1101
        %v1124 = vsel %vm630, %v1122, %v1111
        %v1125 = vsel %vm630, %v1123, %v1113
        %v1126 = vrot.slane %v1072, 3
        %v1127 = vrot.slane %v1076, 3
        %1128 = vrot.lane.b32.xlu0 %v1126, 32
        %v1129 = vpop.permute.xlu0 %1128
        %1130 = vrot.lane.b32.xlu0 %v1127, 32
        %v1131 = vpop.permute.xlu0 %1130
        %v1134 = vrot.slane %v1073, 1
        %v1135 = vsel %vm641, %v1096, %v1134
        %v1136 = vrot.slane %v1077, 1
        %v1137 = vsel %vm641, %v1097, %v1136
        %1138 = vrot.lane.b32.xlu0 %v1135, 64
        %v1139 = vpop.permute.xlu0 %1138
        %1140 = vrot.lane.b32.xlu0 %v1134, 64
        %v1141 = vpop.permute.xlu0 %1140
        %1142 = vrot.lane.b32.xlu0 %v1137, 64
        %v1143 = vpop.permute.xlu0 %1142
        %1144 = vrot.lane.b32.xlu0 %v1136, 64
        %v1145 = vpop.permute.xlu0 %1144
        %v1150 = vrot.slane %v1072, 4
        %v1151 = vrot.slane %v1076, 4
        %1152 = vrot.lane.b32.xlu0 %v1150, 96
        %v1153 = vpop.permute.xlu0 %1152
        %1154 = vrot.lane.b32.xlu0 %v1151, 96
        %v1155 = vpop.permute.xlu0 %1154
        %v1158 = vrot.slane %v1073, 2
        %v1159 = vrot.slane %v1077, 2
        %v1160 = vsel %vm624, %v1072, %v1129
        %v1161 = vsel %vm624, %v1073, %v1129
        %v1162 = vsel %vm624, %v1076, %v1131
        %v1163 = vsel %vm624, %v1077, %v1131
        %v1164 = vsel %vm627, %v1160, %v1139
        %v1165 = vsel %vm627, %v1161, %v1141
        %v1166 = vsel %vm627, %v1162, %v1143
        %v1167 = vsel %vm627, %v1163, %v1145
        %v1168 = vsel %vm630, %v1164, %v1153
        %v1169 = vsel %vm630, %v1165, %v1153
        %v1170 = vsel %vm630, %v1166, %v1155
        %v1171 = vsel %vm630, %v1167, %v1155
        %v1176 = vrot.slane %v1168, 2
        %v1177 = vrot.slane %v1169, 2
        %v1178 = vsel %vm684, %v1176, %v1177
        %v1179 = vrot.slane %v1158, 2
        %v1180 = vsel %vm684, %v1179, %v1179
        %v1181 = vrot.slane %v1170, 2
        %v1182 = vrot.slane %v1171, 2
        %v1183 = vsel %vm684, %v1181, %v1182
        %v1184 = vrot.slane %v1159, 2
        %v1185 = vsel %vm684, %v1184, %v1184
        %v1190 = vsel %vm537, %v1124, %v1178
        %v1191 = vsel %vm537, %v1116, %v1180
        %v1192 = vsel %vm537, %v1125, %v1183
        %v1193 = vsel %vm537, %v1117, %v1185
        %v1194 = vpack.c.bf16 %v1192, %v1190
        %v1195 = vpack.c.bf16 %v1193, %v1191
        %s1196 = scalar_lea.vmem [#allocation2], 32
        %1197 = vst [vmem:[%s1196] sm:$0xff] %v1194
        %1198 = vst.msk [vmem:[%s1196 + $0x8] sm:$0xff] %vm624, %v1195
        %v1203 = vrot.slane %v1074, 6
        %v1204 = vrot.slane %v1075, 6
        %v1205 = vsel %vm586, %v1203, %v1204
        %v1206 = vrot.slane %v1078, 6
        %v1207 = vrot.slane %v1079, 6
        %v1208 = vsel %vm586, %v1206, %v1207
        %1209 = vrot.lane.b32.xlu0 %v1205, 32
        %v1210 = vpop.permute.xlu0 %1209
        %1211 = vrot.lane.b32.xlu0 %v1208, 32
        %v1212 = vpop.permute.xlu0 %1211
        %v1215 = vrot.slane %v1074, 1
        %v1216 = vrot.slane %v1078, 1
        %1217 = vrot.lane.b32.xlu0 %v1215, 64
        %v1218 = vpop.permute.xlu0 %1217
        %1219 = vrot.lane.b32.xlu0 %v1216, 64
        %v1220 = vpop.permute.xlu0 %1219
        %v1223 = vrot.slane %v1074, 7
        %v1224 = vrot.slane %v1075, 7
        %v1225 = vsel %vm607, %v1223, %v1224
        %v1226 = vrot.slane %v1078, 7
        %v1227 = vrot.slane %v1079, 7
        %v1228 = vsel %vm607, %v1226, %v1227
        %1229 = vrot.lane.b32.xlu0 %v1225, 96
        %v1230 = vpop.permute.xlu0 %1229
        %1231 = vrot.lane.b32.xlu0 %v1228, 96
        %v1232 = vpop.permute.xlu0 %1231
        %v1235 = vrot.slane %v1074, 2
        %v1236 = vrot.slane %v1078, 2
        %v1239 = vsel %vm624, %v1074, %v1210
        %v1240 = vsel %vm624, %v1078, %v1212
        %v1241 = vsel %vm627, %v1239, %v1218
        %v1242 = vsel %vm627, %v1240, %v1220
        %v1243 = vsel %vm630, %v1241, %v1230
        %v1244 = vsel %vm630, %v1242, %v1232
        %v1245 = vrot.slane %v1074, 3
        %v1246 = vrot.slane %v1078, 3
        %1247 = vrot.lane.b32.xlu0 %v1245, 32
        %v1248 = vpop.permute.xlu0 %1247
        %1249 = vrot.lane.b32.xlu0 %v1246, 32
        %v1250 = vpop.permute.xlu0 %1249
        %v1253 = vrot.slane %v1075, 1
        %v1254 = vsel %vm641, %v1215, %v1253
        %v1255 = vrot.slane %v1079, 1
        %v1256 = vsel %vm641, %v1216, %v1255
        %1257 = vrot.lane.b32.xlu0 %v1254, 64
        %v1258 = vpop.permute.xlu0 %1257
        %1259 = vrot.lane.b32.xlu0 %v1253, 64
        %v1260 = vpop.permute.xlu0 %1259
        %1261 = vrot.lane.b32.xlu0 %v1256, 64
        %v1262 = vpop.permute.xlu0 %1261
        %1263 = vrot.lane.b32.xlu0 %v1255, 64
        %v1264 = vpop.permute.xlu0 %1263
        %v1269 = vrot.slane %v1074, 4
        %v1270 = vrot.slane %v1078, 4
        %1271 = vrot.lane.b32.xlu0 %v1269, 96
        %v1272 = vpop.permute.xlu0 %1271
        %1273 = vrot.lane.b32.xlu0 %v1270, 96
        %v1274 = vpop.permute.xlu0 %1273
        %v1277 = vrot.slane %v1075, 2
        %v1278 = vrot.slane %v1079, 2
        %v1279 = vsel %vm624, %v1074, %v1248
        %v1280 = vsel %vm624, %v1075, %v1248
        %v1281 = vsel %vm624, %v1078, %v1250
        %v1282 = vsel %vm624, %v1079, %v1250
        %v1283 = vsel %vm627, %v1279, %v1258
        %v1284 = vsel %vm627, %v1280, %v1260
        %v1285 = vsel %vm627, %v1281, %v1262
        %v1286 = vsel %vm627, %v1282, %v1264
        %v1287 = vsel %vm630, %v1283, %v1272
        %v1288 = vsel %vm630, %v1284, %v1272
        %v1289 = vsel %vm630, %v1285, %v1274
        %v1290 = vsel %vm630, %v1286, %v1274
        %v1295 = vrot.slane %v1287, 2
        %v1296 = vrot.slane %v1288, 2
        %v1297 = vsel %vm684, %v1295, %v1296
        %v1298 = vrot.slane %v1277, 2
        %v1299 = vsel %vm684, %v1298, %v1298
        %v1300 = vrot.slane %v1289, 2
        %v1301 = vrot.slane %v1290, 2
        %v1302 = vsel %vm684, %v1300, %v1301
        %v1303 = vrot.slane %v1278, 2
        %v1304 = vsel %vm684, %v1303, %v1303
        %v1309 = vsel %vm537, %v1243, %v1297
        %v1310 = vsel %vm537, %v1235, %v1299
        %v1311 = vsel %vm537, %v1244, %v1302
        %v1312 = vsel %vm537, %v1236, %v1304
        %v1313 = vpack.c.bf16 %v1311, %v1309
        %v1314 = vpack.c.bf16 %v1312, %v1310
        %s1315 = scalar_lea.vmem [#allocation2], 48
        %1316 = vst [vmem:[%s1315] sm:$0xff] %v1313
        %1317 = vst.msk [vmem:[%s1315 + $0x8] sm:$0xff] %vm624, %v1314
        %s1318 = scalar_lea.vmem %s228, 48 [#allocation3]
        %v1319 = vld [vmem:[%s1318] sm:$0xf]
        %v1320 = vld [vmem:[%s1318 + $0x4] sm:$0xf]
        %v1321 = vld [vmem:[%s1318 + $0x8] sm:$0xf]
        %v1322 = vld [vmem:[%s1318 + $0xc] sm:$0xf]
        %v1323 = vld [vmem:[%s1318 + $0x10] sm:$0xf]
        %v1324 = vld [vmem:[%s1318 + $0x14] sm:$0xf]
        %v1325 = vld [vmem:[%s1318 + $0x90] sm:$0xf]
        %v1326 = vld [vmem:[%s1318 + $0x94] sm:$0xf]
        %v1327 = vld [vmem:[%s1318 + $0x98] sm:$0xf]
        %v1328 = vld [vmem:[%s1318 + $0x9c] sm:$0xf]
        %v1329 = vld [vmem:[%s1318 + $0xa0] sm:$0xf]
        %v1330 = vld [vmem:[%s1318 + $0xa4] sm:$0xf]
        %v1343 = vunpack.c.l.b16 %v1319
        %v1344 = vunpack.c.l.b16 %v1320
        %v1345 = vunpack.c.l.b16 %v1321
        %v1346 = vunpack.c.l.b16 %v1322
        %v1347 = vunpack.c.l.b16 %v1323
        %v1348 = vunpack.c.l.b16 %v1324
        %v1349 = vunpack.c.l.b16 %v1325
        %v1350 = vunpack.c.l.b16 %v1326
        %v1351 = vunpack.c.l.b16 %v1327
        %v1352 = vunpack.c.l.b16 %v1328
        %v1353 = vunpack.c.l.b16 %v1329
        %v1354 = vunpack.c.l.b16 %v1330
        %v1355 = vpack.c.b16 %v1344, %v1343
        %v1356 = vpack.c.b16 %v1346, %v1345
        %v1357 = vpack.c.b16 %v1348, %v1347
        %v1358 = vpack.c.b16 %v1350, %v1349
        %v1359 = vpack.c.b16 %v1352, %v1351
        %v1360 = vpack.c.b16 %v1354, %v1353
        %v1362 = vsel %vm365, %v1355, 0
        %v1365 = vsel %vm365, %v1356, 0
        %v1368 = vsel %vm365, %v1357, 0
        %v1371 = vsel %vm365, %v1358, 0
        %v1374 = vsel %vm365, %v1359, 0
        %v1377 = vsel %vm365, %v1360, 0
        %1379 = vmatprep.subr.bf16.mxu0 0
        %1380 = vmatpush1.bf16.msra.mxu0 %v354
        %1381 = vmatprep.subr.bf16.mxu0 0
        %1382 = vmatpush1.bf16.msra.mxu0 %v355
        %1383 = vmatprep.subr.bf16.mxu0 0
        %1384 = vmatpush1.bf16.msra.mxu0 %v356
        %1385 = vmatprep.subr.bf16.mxu0 0
        %1386 = vmatpush1.bf16.msra.mxu0 %v357
        %1387 = vmatprep.subr.bf16.mxu0 0
        %1388 = vmatpush1.bf16.msra.mxu0 %v358
        %1389 = vmatprep.subr.bf16.mxu0 0
        %1390 = vmatpush1.bf16.msra.mxu0 %v386
        %1391 = vmatprep.subr.bf16.mxu0 0
        %1392 = vmatpush1.bf16.msra.mxu0 0
        %1393 = vmatprep.subr.bf16.mxu0 0
        %1394 = vmatpush1.bf16.msra.mxu0 0
        %1395 = vmatprep.subr.bf16.mxu0 0
        %1396 = vmatpush1.bf16.msra.mxu0 0
        %1397 = vmatprep.subr.bf16.mxu0 0
        %1398 = vmatpush1.bf16.msra.mxu0 0
        %1399 = vmatprep.subr.bf16.mxu0 0
        %1400 = vmatpush1.bf16.msra.mxu0 0
        %1401 = vmatprep.subr.bf16.mxu0 0
        %1402 = vmatpush1.bf16.msra.mxu0 0
        %1403 = vmatprep.subr.bf16.mxu0 0
        %1404 = vmatpush1.bf16.msra.mxu0 0
        %1405 = vmatprep.subr.bf16.mxu0 0
        %1406 = vmatpush1.bf16.msra.mxu0 0
        %1407 = vmatprep.subr.bf16.mxu0 0
        %1408 = vmatpush1.bf16.msra.mxu0 0
        %1409 = vmatprep.subr.bf16.mxu0 0
        %1410 = vmatpush1.bf16.msra.mxu0 0
        %1411 = vmatprep.mubr.bf16.mxu0 0
        %1412 = vmatmul.mubr.bf16.gmra.mrb[0].mxu0 %v1362
        %v1413 = vpop.f32.mrb[0].mxu0
        %v1414 = vadd.f32 0.0, %v1413
        %v1415 = vpop.f32.mrb[0].mxu0
        %v1416 = vpop.f32.mrb[0].mxu0
        %v1417 = vadd.f32 0.0, %v1416
        %v1418 = vpop.f32.mrb[0].mxu0
        %1419 = vmatprep.mubr.bf16.mxu0 0
        %1420 = vmatmul.mubr.bf16.gmra.mrb[0].mxu0 %v1365
        %v1421 = vpop.f32.mrb[0].mxu0
        %v1422 = vadd.f32 0.0, %v1421
        %v1423 = vpop.f32.mrb[0].mxu0
        %v1424 = vpop.f32.mrb[0].mxu0
        %v1425 = vadd.f32 0.0, %v1424
        %v1426 = vpop.f32.mrb[0].mxu0
        %1427 = vmatprep.mubr.bf16.mxu0 0
        %1428 = vmatmul.mubr.bf16.gmra.mrb[0].mxu0 %v1368
        %v1429 = vpop.f32.mrb[0].mxu0
        %v1430 = vadd.f32 0.0, %v1429
        %v1431 = vpop.f32.mrb[0].mxu0
        %v1432 = vpop.f32.mrb[0].mxu0
        %v1433 = vadd.f32 0.0, %v1432
        %v1434 = vpop.f32.mrb[0].mxu0
        %1435 = vmatprep.mubr.bf16.mxu0 0
        %1436 = vmatmul.mubr.bf16.gmra.mrb[0].mxu0 %v1371
        %v1437 = vpop.f32.mrb[0].mxu0
        %v1438 = vadd.f32 0.0, %v1437
        %v1439 = vpop.f32.mrb[0].mxu0
        %v1440 = vpop.f32.mrb[0].mxu0
        %v1441 = vadd.f32 0.0, %v1440
        %v1442 = vpop.f32.mrb[0].mxu0
        %1443 = vmatprep.mubr.bf16.mxu0 0
        %1444 = vmatmul.mubr.bf16.gmra.mrb[0].mxu0 %v1374
        %v1445 = vpop.f32.mrb[0].mxu0
        %v1446 = vadd.f32 0.0, %v1445
        %v1447 = vpop.f32.mrb[0].mxu0
        %v1448 = vpop.f32.mrb[0].mxu0
        %v1449 = vadd.f32 0.0, %v1448
        %v1450 = vpop.f32.mrb[0].mxu0
        %1451 = vmatprep.mubr.bf16.mxu0 0
        %1452 = vmatmul.mubr.bf16.gmra.mrb[0].mxu0 %v1377
        %v1453 = vpop.f32.mrb[0].mxu0
        %v1454 = vadd.f32 0.0, %v1453
        %v1455 = vpop.f32.mrb[0].mxu0
        %v1456 = vpop.f32.mrb[0].mxu0
        %v1457 = vadd.f32 0.0, %v1456
        %v1458 = vpop.f32.mrb[0].mxu0
        %1459 = vdwg.mxu0
        %1472 = vrot.lane.b32.xlu0 %v1414, 96
        %v1473 = vpop.permute.xlu0 %1472
        %1474 = vrot.lane.b32.xlu0 %v1417, 96
        %v1475 = vpop.permute.xlu0 %1474
        %1476 = vrot.lane.b32.xlu0 %v1422, 96
        %v1477 = vpop.permute.xlu0 %1476
        %1478 = vrot.lane.b32.xlu0 %v1425, 96
        %v1479 = vpop.permute.xlu0 %1478
        %1480 = vrot.lane.b32.xlu0 %v1430, 96
        %v1481 = vpop.permute.xlu0 %1480
        %1482 = vrot.lane.b32.xlu0 %v1433, 96
        %v1483 = vpop.permute.xlu0 %1482
        %1484 = vrot.lane.b32.xlu0 %v1438, 96
        %v1485 = vpop.permute.xlu0 %1484
        %1486 = vrot.lane.b32.xlu0 %v1441, 96
        %v1487 = vpop.permute.xlu0 %1486
        %1488 = vrot.lane.b32.xlu0 %v1446, 96
        %v1489 = vpop.permute.xlu0 %1488
        %1490 = vrot.lane.b32.xlu0 %v1449, 96
        %v1491 = vpop.permute.xlu0 %1490
        %1492 = vrot.lane.b32.xlu0 %v1454, 96
        %v1493 = vpop.permute.xlu0 %1492
        %1494 = vrot.lane.b32.xlu0 %v1457, 96
        %v1495 = vpop.permute.xlu0 %1494
        %v1508 = vmax.f32 %v1414, %v1473
        %v1509 = vmax.f32 %v1417, %v1475
        %v1510 = vmax.f32 %v1422, %v1477
        %v1511 = vmax.f32 %v1425, %v1479
        %v1512 = vmax.f32 %v1430, %v1481
        %v1513 = vmax.f32 %v1433, %v1483
        %v1514 = vmax.f32 %v1438, %v1485
        %v1515 = vmax.f32 %v1441, %v1487
        %v1516 = vmax.f32 %v1446, %v1489
        %v1517 = vmax.f32 %v1449, %v1491
        %v1518 = vmax.f32 %v1454, %v1493
        %v1519 = vmax.f32 %v1457, %v1495
        %v1528 = vrot.slane %v1509, 4
        %v1529 = vrot.slane %v1510, 4
        %v1530 = vsel %vm537, %v1528, %v1529
        %v1531 = vrot.slane %v1512, 4
        %v1532 = vrot.slane %v1513, 4
        %v1533 = vsel %vm537, %v1531, %v1532
        %v1534 = vrot.slane %v1515, 4
        %v1535 = vrot.slane %v1516, 4
        %v1536 = vsel %vm537, %v1534, %v1535
        %v1537 = vrot.slane %v1518, 4
        %v1538 = vrot.slane %v1519, 4
        %v1539 = vsel %vm537, %v1537, %v1538
        %v1548 = vmax.f32 %v1508, %v1530
        %v1549 = vmax.f32 %v1509, %v1529
        %v1550 = vmax.f32 %v1511, %v1533
        %v1551 = vmax.f32 %v1512, %v1532
        %v1552 = vmax.f32 %v1514, %v1536
        %v1553 = vmax.f32 %v1515, %v1535
        %v1554 = vmax.f32 %v1517, %v1539
        %v1555 = vmax.f32 %v1518, %v1538
        %v1556 = vadd.f32 %v1548, %v279
        %v1557 = vadd.f32 %v1549, %v279
        %v1558 = vadd.f32 %v1550, %v279
        %v1559 = vadd.f32 %v1551, %v279
        %v1560 = vadd.f32 %v1552, %v279
        %v1561 = vadd.f32 %v1553, %v279
        %v1562 = vadd.f32 %v1554, %v279
        %v1563 = vadd.f32 %v1555, %v279
        %v1564 = vmax.f32 %v1556, 0.0
        %v1565 = vmax.f32 %v1557, 0.0
        %v1566 = vmax.f32 %v1558, 0.0
        %v1567 = vmax.f32 %v1559, 0.0
        %v1568 = vmax.f32 %v1560, 0.0
        %v1569 = vmax.f32 %v1561, 0.0
        %v1570 = vmax.f32 %v1562, 0.0
        %v1571 = vmax.f32 %v1563, 0.0
        %v1576 = vrot.slane %v1564, 6
        %v1577 = vrot.slane %v1565, 6
        %v1578 = vsel %vm586, %v1576, %v1577
        %v1579 = vrot.slane %v1568, 6
        %v1580 = vrot.slane %v1569, 6
        %v1581 = vsel %vm586, %v1579, %v1580
        %1582 = vrot.lane.b32.xlu0 %v1578, 32
        %v1583 = vpop.permute.xlu0 %1582
        %1584 = vrot.lane.b32.xlu0 %v1581, 32
        %v1585 = vpop.permute.xlu0 %1584
        %v1588 = vrot.slane %v1564, 1
        %v1589 = vrot.slane %v1568, 1
        %1590 = vrot.lane.b32.xlu0 %v1588, 64
        %v1591 = vpop.permute.xlu0 %1590
        %1592 = vrot.lane.b32.xlu0 %v1589, 64
        %v1593 = vpop.permute.xlu0 %1592
        %v1596 = vrot.slane %v1564, 7
        %v1597 = vrot.slane %v1565, 7
        %v1598 = vsel %vm607, %v1596, %v1597
        %v1599 = vrot.slane %v1568, 7
        %v1600 = vrot.slane %v1569, 7
        %v1601 = vsel %vm607, %v1599, %v1600
        %1602 = vrot.lane.b32.xlu0 %v1598, 96
        %v1603 = vpop.permute.xlu0 %1602
        %1604 = vrot.lane.b32.xlu0 %v1601, 96
        %v1605 = vpop.permute.xlu0 %1604
        %v1608 = vrot.slane %v1564, 2
        %v1609 = vrot.slane %v1568, 2
        %v1612 = vsel %vm624, %v1564, %v1583
        %v1613 = vsel %vm624, %v1568, %v1585
        %v1614 = vsel %vm627, %v1612, %v1591
        %v1615 = vsel %vm627, %v1613, %v1593
        %v1616 = vsel %vm630, %v1614, %v1603
        %v1617 = vsel %vm630, %v1615, %v1605
        %v1618 = vrot.slane %v1564, 3
        %v1619 = vrot.slane %v1568, 3
        %1620 = vrot.lane.b32.xlu0 %v1618, 32
        %v1621 = vpop.permute.xlu0 %1620
        %1622 = vrot.lane.b32.xlu0 %v1619, 32
        %v1623 = vpop.permute.xlu0 %1622
        %v1626 = vrot.slane %v1565, 1
        %v1627 = vsel %vm641, %v1588, %v1626
        %v1628 = vrot.slane %v1569, 1
        %v1629 = vsel %vm641, %v1589, %v1628
        %1630 = vrot.lane.b32.xlu0 %v1627, 64
        %v1631 = vpop.permute.xlu0 %1630
        %1632 = vrot.lane.b32.xlu0 %v1626, 64
        %v1633 = vpop.permute.xlu0 %1632
        %1634 = vrot.lane.b32.xlu0 %v1629, 64
        %v1635 = vpop.permute.xlu0 %1634
        %1636 = vrot.lane.b32.xlu0 %v1628, 64
        %v1637 = vpop.permute.xlu0 %1636
        %v1642 = vrot.slane %v1564, 4
        %v1643 = vrot.slane %v1568, 4
        %1644 = vrot.lane.b32.xlu0 %v1642, 96
        %v1645 = vpop.permute.xlu0 %1644
        %1646 = vrot.lane.b32.xlu0 %v1643, 96
        %v1647 = vpop.permute.xlu0 %1646
        %v1650 = vrot.slane %v1565, 2
        %v1651 = vrot.slane %v1569, 2
        %v1652 = vsel %vm624, %v1564, %v1621
        %v1653 = vsel %vm624, %v1565, %v1621
        %v1654 = vsel %vm624, %v1568, %v1623
        %v1655 = vsel %vm624, %v1569, %v1623
        %v1656 = vsel %vm627, %v1652, %v1631
        %v1657 = vsel %vm627, %v1653, %v1633
        %v1658 = vsel %vm627, %v1654, %v1635
        %v1659 = vsel %vm627, %v1655, %v1637
        %v1660 = vsel %vm630, %v1656, %v1645
        %v1661 = vsel %vm630, %v1657, %v1645
        %v1662 = vsel %vm630, %v1658, %v1647
        %v1663 = vsel %vm630, %v1659, %v1647
        %v1668 = vrot.slane %v1660, 2
        %v1669 = vrot.slane %v1661, 2
        %v1670 = vsel %vm684, %v1668, %v1669
        %v1671 = vrot.slane %v1650, 2
        %v1672 = vsel %vm684, %v1671, %v1671
        %v1673 = vrot.slane %v1662, 2
        %v1674 = vrot.slane %v1663, 2
        %v1675 = vsel %vm684, %v1673, %v1674
        %v1676 = vrot.slane %v1651, 2
        %v1677 = vsel %vm684, %v1676, %v1676
        %v1682 = vsel %vm537, %v1616, %v1670
        %v1683 = vsel %vm537, %v1608, %v1672
        %v1684 = vsel %vm537, %v1617, %v1675
        %v1685 = vsel %vm537, %v1609, %v1677
        %v1686 = vpack.c.bf16 %v1684, %v1682
        %v1687 = vpack.c.bf16 %v1685, %v1683
        %s1688 = scalar_lea.vmem [#allocation2], 64
        %1689 = vst [vmem:[%s1688] sm:$0xff] %v1686
        %1690 = vst.msk [vmem:[%s1688 + $0x8] sm:$0xff] %vm624, %v1687
        %v1695 = vrot.slane %v1566, 6
        %v1696 = vrot.slane %v1567, 6
        %v1697 = vsel %vm586, %v1695, %v1696
        %v1698 = vrot.slane %v1570, 6
        %v1699 = vrot.slane %v1571, 6
        %v1700 = vsel %vm586, %v1698, %v1699
        %1701 = vrot.lane.b32.xlu0 %v1697, 32
        %v1702 = vpop.permute.xlu0 %1701
        %1703 = vrot.lane.b32.xlu0 %v1700, 32
        %v1704 = vpop.permute.xlu0 %1703
        %v1707 = vrot.slane %v1566, 1
        %v1708 = vrot.slane %v1570, 1
        %1709 = vrot.lane.b32.xlu0 %v1707, 64
        %v1710 = vpop.permute.xlu0 %1709
        %1711 = vrot.lane.b32.xlu0 %v1708, 64
        %v1712 = vpop.permute.xlu0 %1711
        %v1715 = vrot.slane %v1566, 7
        %v1716 = vrot.slane %v1567, 7
        %v1717 = vsel %vm607, %v1715, %v1716
        %v1718 = vrot.slane %v1570, 7
        %v1719 = vrot.slane %v1571, 7
        %v1720 = vsel %vm607, %v1718, %v1719
        %1721 = vrot.lane.b32.xlu0 %v1717, 96
        %v1722 = vpop.permute.xlu0 %1721
        %1723 = vrot.lane.b32.xlu0 %v1720, 96
        %v1724 = vpop.permute.xlu0 %1723
        %v1727 = vrot.slane %v1566, 2
        %v1728 = vrot.slane %v1570, 2
        %v1731 = vsel %vm624, %v1566, %v1702
        %v1732 = vsel %vm624, %v1570, %v1704
        %v1733 = vsel %vm627, %v1731, %v1710
        %v1734 = vsel %vm627, %v1732, %v1712
        %v1735 = vsel %vm630, %v1733, %v1722
        %v1736 = vsel %vm630, %v1734, %v1724
        %v1737 = vrot.slane %v1566, 3
        %v1738 = vrot.slane %v1570, 3
        %1739 = vrot.lane.b32.xlu0 %v1737, 32
        %v1740 = vpop.permute.xlu0 %1739
        %1741 = vrot.lane.b32.xlu0 %v1738, 32
        %v1742 = vpop.permute.xlu0 %1741
        %v1745 = vrot.slane %v1567, 1
        %v1746 = vsel %vm641, %v1707, %v1745
        %v1747 = vrot.slane %v1571, 1
        %v1748 = vsel %vm641, %v1708, %v1747
        %1749 = vrot.lane.b32.xlu0 %v1746, 64
        %v1750 = vpop.permute.xlu0 %1749
        %1751 = vrot.lane.b32.xlu0 %v1745, 64
        %v1752 = vpop.permute.xlu0 %1751
        %1753 = vrot.lane.b32.xlu0 %v1748, 64
        %v1754 = vpop.permute.xlu0 %1753
        %1755 = vrot.lane.b32.xlu0 %v1747, 64
        %v1756 = vpop.permute.xlu0 %1755
        %v1761 = vrot.slane %v1566, 4
        %v1762 = vrot.slane %v1570, 4
        %1763 = vrot.lane.b32.xlu0 %v1761, 96
        %v1764 = vpop.permute.xlu0 %1763
        %1765 = vrot.lane.b32.xlu0 %v1762, 96
        %v1766 = vpop.permute.xlu0 %1765
        %v1769 = vrot.slane %v1567, 2
        %v1770 = vrot.slane %v1571, 2
        %v1771 = vsel %vm624, %v1566, %v1740
        %v1772 = vsel %vm624, %v1567, %v1740
        %v1773 = vsel %vm624, %v1570, %v1742
        %v1774 = vsel %vm624, %v1571, %v1742
        %v1775 = vsel %vm627, %v1771, %v1750
        %v1776 = vsel %vm627, %v1772, %v1752
        %v1777 = vsel %vm627, %v1773, %v1754
        %v1778 = vsel %vm627, %v1774, %v1756
        %v1779 = vsel %vm630, %v1775, %v1764
        %v1780 = vsel %vm630, %v1776, %v1764
        %v1781 = vsel %vm630, %v1777, %v1766
        %v1782 = vsel %vm630, %v1778, %v1766
        %v1787 = vrot.slane %v1779, 2
        %v1788 = vrot.slane %v1780, 2
        %v1789 = vsel %vm684, %v1787, %v1788
        %v1790 = vrot.slane %v1769, 2
        %v1791 = vsel %vm684, %v1790, %v1790
        %v1792 = vrot.slane %v1781, 2
        %v1793 = vrot.slane %v1782, 2
        %v1794 = vsel %vm684, %v1792, %v1793
        %v1795 = vrot.slane %v1770, 2
        %v1796 = vsel %vm684, %v1795, %v1795
        %v1801 = vsel %vm537, %v1735, %v1789
        %v1802 = vsel %vm537, %v1727, %v1791
        %v1803 = vsel %vm537, %v1736, %v1794
        %v1804 = vsel %vm537, %v1728, %v1796
        %v1805 = vpack.c.bf16 %v1803, %v1801
        %v1806 = vpack.c.bf16 %v1804, %v1802
        %s1807 = scalar_lea.vmem [#allocation2], 80
        %1808 = vst [vmem:[%s1807] sm:$0xff] %v1805
        %1809 = vst.msk [vmem:[%s1807 + $0x8] sm:$0xff] %vm624, %v1806
        %s1810 = scalar_lea.vmem %s228, 72 [#allocation3]
        %v1811 = vld [vmem:[%s1810] sm:$0xf]
        %v1812 = vld [vmem:[%s1810 + $0x4] sm:$0xf]
        %v1813 = vld [vmem:[%s1810 + $0x8] sm:$0xf]
        %v1814 = vld [vmem:[%s1810 + $0xc] sm:$0xf]
        %v1815 = vld [vmem:[%s1810 + $0x10] sm:$0xf]
        %v1816 = vld [vmem:[%s1810 + $0x14] sm:$0xf]
        %v1817 = vld [vmem:[%s1810 + $0x90] sm:$0xf]
        %v1818 = vld [vmem:[%s1810 + $0x94] sm:$0xf]
        %v1819 = vld [vmem:[%s1810 + $0x98] sm:$0xf]
        %v1820 = vld [vmem:[%s1810 + $0x9c] sm:$0xf]
        %v1821 = vld [vmem:[%s1810 + $0xa0] sm:$0xf]
        %v1822 = vld [vmem:[%s1810 + $0xa4] sm:$0xf]
        %v1835 = vunpack.c.l.b16 %v1811
        %v1836 = vunpack.c.l.b16 %v1812
        %v1837 = vunpack.c.l.b16 %v1813
        %v1838 = vunpack.c.l.b16 %v1814
        %v1839 = vunpack.c.l.b16 %v1815
        %v1840 = vunpack.c.l.b16 %v1816
        %v1841 = vunpack.c.l.b16 %v1817
        %v1842 = vunpack.c.l.b16 %v1818
        %v1843 = vunpack.c.l.b16 %v1819
        %v1844 = vunpack.c.l.b16 %v1820
        %v1845 = vunpack.c.l.b16 %v1821
        %v1846 = vunpack.c.l.b16 %v1822
        %v1847 = vpack.c.b16 %v1836, %v1835
        %v1848 = vpack.c.b16 %v1838, %v1837
        %v1849 = vpack.c.b16 %v1840, %v1839
        %v1850 = vpack.c.b16 %v1842, %v1841
        %v1851 = vpack.c.b16 %v1844, %v1843
        %v1852 = vpack.c.b16 %v1846, %v1845
        %v1854 = vsel %vm365, %v1847, 0
        %v1857 = vsel %vm365, %v1848, 0
        %v1860 = vsel %vm365, %v1849, 0
        %v1863 = vsel %vm365, %v1850, 0
        %v1866 = vsel %vm365, %v1851, 0
        %v1869 = vsel %vm365, %v1852, 0
        %1871 = vmatprep.subr.bf16.mxu0 0
        %1872 = vmatpush1.bf16.msra.mxu0 %v354
        %1873 = vmatprep.subr.bf16.mxu0 0
        %1874 = vmatpush1.bf16.msra.mxu0 %v355
        %1875 = vmatprep.subr.bf16.mxu0 0
        %1876 = vmatpush1.bf16.msra.mxu0 %v356
        %1877 = vmatprep.subr.bf16.mxu0 0
        %1878 = vmatpush1.bf16.msra.mxu0 %v357
        %1879 = vmatprep.subr.bf16.mxu0 0
        %1880 = vmatpush1.bf16.msra.mxu0 %v358
        %1881 = vmatprep.subr.bf16.mxu0 0
        %1882 = vmatpush1.bf16.msra.mxu0 %v386
        %1883 = vmatprep.subr.bf16.mxu0 0
        %1884 = vmatpush1.bf16.msra.mxu0 0
        %1885 = vmatprep.subr.bf16.mxu0 0
        %1886 = vmatpush1.bf16.msra.mxu0 0
        %1887 = vmatprep.subr.bf16.mxu0 0
        %1888 = vmatpush1.bf16.msra.mxu0 0
        %1889 = vmatprep.subr.bf16.mxu0 0
        %1890 = vmatpush1.bf16.msra.mxu0 0
        %1891 = vmatprep.subr.bf16.mxu0 0
        %1892 = vmatpush1.bf16.msra.mxu0 0
        %1893 = vmatprep.subr.bf16.mxu0 0
        %1894 = vmatpush1.bf16.msra.mxu0 0
        %1895 = vmatprep.subr.bf16.mxu0 0
        %1896 = vmatpush1.bf16.msra.mxu0 0
        %1897 = vmatprep.subr.bf16.mxu0 0
        %1898 = vmatpush1.bf16.msra.mxu0 0
        %1899 = vmatprep.subr.bf16.mxu0 0
        %1900 = vmatpush1.bf16.msra.mxu0 0
        %1901 = vmatprep.subr.bf16.mxu0 0
        %1902 = vmatpush1.bf16.msra.mxu0 0
        %1903 = vmatprep.mubr.bf16.mxu0 0
        %1904 = vmatmul.mubr.bf16.gmra.mrb[0].mxu0 %v1854
        %v1905 = vpop.f32.mrb[0].mxu0
        %v1906 = vadd.f32 0.0, %v1905
        %v1907 = vpop.f32.mrb[0].mxu0
        %v1908 = vpop.f32.mrb[0].mxu0
        %v1909 = vadd.f32 0.0, %v1908
        %v1910 = vpop.f32.mrb[0].mxu0
        %1911 = vmatprep.mubr.bf16.mxu0 0
        %1912 = vmatmul.mubr.bf16.gmra.mrb[0].mxu0 %v1857
        %v1913 = vpop.f32.mrb[0].mxu0
        %v1914 = vadd.f32 0.0, %v1913
        %v1915 = vpop.f32.mrb[0].mxu0
        %v1916 = vpop.f32.mrb[0].mxu0
        %v1917 = vadd.f32 0.0, %v1916
        %v1918 = vpop.f32.mrb[0].mxu0
        %1919 = vmatprep.mubr.bf16.mxu0 0
        %1920 = vmatmul.mubr.bf16.gmra.mrb[0].mxu0 %v1860
        %v1921 = vpop.f32.mrb[0].mxu0
        %v1922 = vadd.f32 0.0, %v1921
        %v1923 = vpop.f32.mrb[0].mxu0
        %v1924 = vpop.f32.mrb[0].mxu0
        %v1925 = vadd.f32 0.0, %v1924
        %v1926 = vpop.f32.mrb[0].mxu0
        %1927 = vmatprep.mubr.bf16.mxu0 0
        %1928 = vmatmul.mubr.bf16.gmra.mrb[0].mxu0 %v1863
        %v1929 = vpop.f32.mrb[0].mxu0
        %v1930 = vadd.f32 0.0, %v1929
        %v1931 = vpop.f32.mrb[0].mxu0
        %v1932 = vpop.f32.mrb[0].mxu0
        %v1933 = vadd.f32 0.0, %v1932
        %v1934 = vpop.f32.mrb[0].mxu0
        %1935 = vmatprep.mubr.bf16.mxu0 0
        %1936 = vmatmul.mubr.bf16.gmra.mrb[0].mxu0 %v1866
        %v1937 = vpop.f32.mrb[0].mxu0
        %v1938 = vadd.f32 0.0, %v1937
        %v1939 = vpop.f32.mrb[0].mxu0
        %v1940 = vpop.f32.mrb[0].mxu0
        %v1941 = vadd.f32 0.0, %v1940
        %v1942 = vpop.f32.mrb[0].mxu0
        %1943 = vmatprep.mubr.bf16.mxu0 0
        %1944 = vmatmul.mubr.bf16.gmra.mrb[0].mxu0 %v1869
        %v1945 = vpop.f32.mrb[0].mxu0
        %v1946 = vadd.f32 0.0, %v1945
        %v1947 = vpop.f32.mrb[0].mxu0
        %v1948 = vpop.f32.mrb[0].mxu0
        %v1949 = vadd.f32 0.0, %v1948
        %v1950 = vpop.f32.mrb[0].mxu0
        %1951 = vdwg.mxu0
        %1964 = vrot.lane.b32.xlu0 %v1906, 96
        %v1965 = vpop.permute.xlu0 %1964
        %1966 = vrot.lane.b32.xlu0 %v1909, 96
        %v1967 = vpop.permute.xlu0 %1966
        %1968 = vrot.lane.b32.xlu0 %v1914, 96
        %v1969 = vpop.permute.xlu0 %1968
        %1970 = vrot.lane.b32.xlu0 %v1917, 96
        %v1971 = vpop.permute.xlu0 %1970
        %1972 = vrot.lane.b32.xlu0 %v1922, 96
        %v1973 = vpop.permute.xlu0 %1972
        %1974 = vrot.lane.b32.xlu0 %v1925, 96
        %v1975 = vpop.permute.xlu0 %1974
        %1976 = vrot.lane.b32.xlu0 %v1930, 96
        %v1977 = vpop.permute.xlu0 %1976
        %1978 = vrot.lane.b32.xlu0 %v1933, 96
        %v1979 = vpop.permute.xlu0 %1978
        %1980 = vrot.lane.b32.xlu0 %v1938, 96
        %v1981 = vpop.permute.xlu0 %1980
        %1982 = vrot.lane.b32.xlu0 %v1941, 96
        %v1983 = vpop.permute.xlu0 %1982
        %1984 = vrot.lane.b32.xlu0 %v1946, 96
        %v1985 = vpop.permute.xlu0 %1984
        %1986 = vrot.lane.b32.xlu0 %v1949, 96
        %v1987 = vpop.permute.xlu0 %1986
        %v2000 = vmax.f32 %v1906, %v1965
        %v2001 = vmax.f32 %v1909, %v1967
        %v2002 = vmax.f32 %v1914, %v1969
        %v2003 = vmax.f32 %v1917, %v1971
        %v2004 = vmax.f32 %v1922, %v1973
        %v2005 = vmax.f32 %v1925, %v1975
        %v2006 = vmax.f32 %v1930, %v1977
        %v2007 = vmax.f32 %v1933, %v1979
        %v2008 = vmax.f32 %v1938, %v1981
        %v2009 = vmax.f32 %v1941, %v1983
        %v2010 = vmax.f32 %v1946, %v1985
        %v2011 = vmax.f32 %v1949, %v1987
        %v2020 = vrot.slane %v2001, 4
        %v2021 = vrot.slane %v2002, 4
        %v2022 = vsel %vm537, %v2020, %v2021
        %v2023 = vrot.slane %v2004, 4
        %v2024 = vrot.slane %v2005, 4
        %v2025 = vsel %vm537, %v2023, %v2024
        %v2026 = vrot.slane %v2007, 4
        %v2027 = vrot.slane %v2008, 4
        %v2028 = vsel %vm537, %v2026, %v2027
        %v2029 = vrot.slane %v2010, 4
        %v2030 = vrot.slane %v2011, 4
        %v2031 = vsel %vm537, %v2029, %v2030
        %v2040 = vmax.f32 %v2000, %v2022
        %v2041 = vmax.f32 %v2001, %v2021
        %v2042 = vmax.f32 %v2003, %v2025
        %v2043 = vmax.f32 %v2004, %v2024
        %v2044 = vmax.f32 %v2006, %v2028
        %v2045 = vmax.f32 %v2007, %v2027
        %v2046 = vmax.f32 %v2009, %v2031
        %v2047 = vmax.f32 %v2010, %v2030
        %v2048 = vadd.f32 %v2040, %v279
        %v2049 = vadd.f32 %v2041, %v279
        %v2050 = vadd.f32 %v2042, %v279
        %v2051 = vadd.f32 %v2043, %v279
        %v2052 = vadd.f32 %v2044, %v279
        %v2053 = vadd.f32 %v2045, %v279
        %v2054 = vadd.f32 %v2046, %v279
        %v2055 = vadd.f32 %v2047, %v279
        %v2056 = vmax.f32 %v2048, 0.0
        %v2057 = vmax.f32 %v2049, 0.0
        %v2058 = vmax.f32 %v2050, 0.0
        %v2059 = vmax.f32 %v2051, 0.0
        %v2060 = vmax.f32 %v2052, 0.0
        %v2061 = vmax.f32 %v2053, 0.0
        %v2062 = vmax.f32 %v2054, 0.0
        %v2063 = vmax.f32 %v2055, 0.0
        %v2068 = vrot.slane %v2056, 6
        %v2069 = vrot.slane %v2057, 6
        %v2070 = vsel %vm586, %v2068, %v2069
        %v2071 = vrot.slane %v2060, 6
        %v2072 = vrot.slane %v2061, 6
        %v2073 = vsel %vm586, %v2071, %v2072
        %2074 = vrot.lane.b32.xlu0 %v2070, 32
        %v2075 = vpop.permute.xlu0 %2074
        %2076 = vrot.lane.b32.xlu0 %v2073, 32
        %v2077 = vpop.permute.xlu0 %2076
        %v2080 = vrot.slane %v2056, 1
        %v2081 = vrot.slane %v2060, 1
        %2082 = vrot.lane.b32.xlu0 %v2080, 64
        %v2083 = vpop.permute.xlu0 %2082
        %2084 = vrot.lane.b32.xlu0 %v2081, 64
        %v2085 = vpop.permute.xlu0 %2084
        %v2088 = vrot.slane %v2056, 7
        %v2089 = vrot.slane %v2057, 7
        %v2090 = vsel %vm607, %v2088, %v2089
        %v2091 = vrot.slane %v2060, 7
        %v2092 = vrot.slane %v2061, 7
        %v2093 = vsel %vm607, %v2091, %v2092
        %2094 = vrot.lane.b32.xlu0 %v2090, 96
        %v2095 = vpop.permute.xlu0 %2094
        %2096 = vrot.lane.b32.xlu0 %v2093, 96
        %v2097 = vpop.permute.xlu0 %2096
        %v2100 = vrot.slane %v2056, 2
        %v2101 = vrot.slane %v2060, 2
        %v2104 = vsel %vm624, %v2056, %v2075
        %v2105 = vsel %vm624, %v2060, %v2077
        %v2106 = vsel %vm627, %v2104, %v2083
        %v2107 = vsel %vm627, %v2105, %v2085
        %v2108 = vsel %vm630, %v2106, %v2095
        %v2109 = vsel %vm630, %v2107, %v2097
        %v2110 = vrot.slane %v2056, 3
        %v2111 = vrot.slane %v2060, 3
        %2112 = vrot.lane.b32.xlu0 %v2110, 32
        %v2113 = vpop.permute.xlu0 %2112
        %2114 = vrot.lane.b32.xlu0 %v2111, 32
        %v2115 = vpop.permute.xlu0 %2114
        %v2118 = vrot.slane %v2057, 1
        %v2119 = vsel %vm641, %v2080, %v2118
        %v2120 = vrot.slane %v2061, 1
        %v2121 = vsel %vm641, %v2081, %v2120
        %2122 = vrot.lane.b32.xlu0 %v2119, 64
        %v2123 = vpop.permute.xlu0 %2122
        %2124 = vrot.lane.b32.xlu0 %v2118, 64
        %v2125 = vpop.permute.xlu0 %2124
        %2126 = vrot.lane.b32.xlu0 %v2121, 64
        %v2127 = vpop.permute.xlu0 %2126
        %2128 = vrot.lane.b32.xlu0 %v2120, 64
        %v2129 = vpop.permute.xlu0 %2128
        %v2134 = vrot.slane %v2056, 4
        %v2135 = vrot.slane %v2060, 4
        %2136 = vrot.lane.b32.xlu0 %v2134, 96
        %v2137 = vpop.permute.xlu0 %2136
        %2138 = vrot.lane.b32.xlu0 %v2135, 96
        %v2139 = vpop.permute.xlu0 %2138
        %v2142 = vrot.slane %v2057, 2
        %v2143 = vrot.slane %v2061, 2
        %v2144 = vsel %vm624, %v2056, %v2113
        %v2145 = vsel %vm624, %v2057, %v2113
        %v2146 = vsel %vm624, %v2060, %v2115
        %v2147 = vsel %vm624, %v2061, %v2115
        %v2148 = vsel %vm627, %v2144, %v2123
        %v2149 = vsel %vm627, %v2145, %v2125
        %v2150 = vsel %vm627, %v2146, %v2127
        %v2151 = vsel %vm627, %v2147, %v2129
        %v2152 = vsel %vm630, %v2148, %v2137
        %v2153 = vsel %vm630, %v2149, %v2137
        %v2154 = vsel %vm630, %v2150, %v2139
        %v2155 = vsel %vm630, %v2151, %v2139
        %v2160 = vrot.slane %v2152, 2
        %v2161 = vrot.slane %v2153, 2
        %v2162 = vsel %vm684, %v2160, %v2161
        %v2163 = vrot.slane %v2142, 2
        %v2164 = vsel %vm684, %v2163, %v2163
        %v2165 = vrot.slane %v2154, 2
        %v2166 = vrot.slane %v2155, 2
        %v2167 = vsel %vm684, %v2165, %v2166
        %v2168 = vrot.slane %v2143, 2
        %v2169 = vsel %vm684, %v2168, %v2168
        %v2174 = vsel %vm537, %v2108, %v2162
        %v2175 = vsel %vm537, %v2100, %v2164
        %v2176 = vsel %vm537, %v2109, %v2167
        %v2177 = vsel %vm537, %v2101, %v2169
        %v2178 = vpack.c.bf16 %v2176, %v2174
        %v2179 = vpack.c.bf16 %v2177, %v2175
        %s2180 = scalar_lea.vmem [#allocation2], 96
        %2181 = vst [vmem:[%s2180] sm:$0xff] %v2178
        %2182 = vst.msk [vmem:[%s2180 + $0x8] sm:$0xff] %vm624, %v2179
        %v2187 = vrot.slane %v2058, 6
        %v2188 = vrot.slane %v2059, 6
        %v2189 = vsel %vm586, %v2187, %v2188
        %v2190 = vrot.slane %v2062, 6
        %v2191 = vrot.slane %v2063, 6
        %v2192 = vsel %vm586, %v2190, %v2191
        %2193 = vrot.lane.b32.xlu0 %v2189, 32
        %v2194 = vpop.permute.xlu0 %2193
        %2195 = vrot.lane.b32.xlu0 %v2192, 32
        %v2196 = vpop.permute.xlu0 %2195
        %v2199 = vrot.slane %v2058, 1
        %v2200 = vrot.slane %v2062, 1
        %2201 = vrot.lane.b32.xlu0 %v2199, 64
        %v2202 = vpop.permute.xlu0 %2201
        %2203 = vrot.lane.b32.xlu0 %v2200, 64
        %v2204 = vpop.permute.xlu0 %2203
        %v2207 = vrot.slane %v2058, 7
        %v2208 = vrot.slane %v2059, 7
        %v2209 = vsel %vm607, %v2207, %v2208
        %v2210 = vrot.slane %v2062, 7
        %v2211 = vrot.slane %v2063, 7
        %v2212 = vsel %vm607, %v2210, %v2211
        %2213 = vrot.lane.b32.xlu0 %v2209, 96
        %v2214 = vpop.permute.xlu0 %2213
        %2215 = vrot.lane.b32.xlu0 %v2212, 96
        %v2216 = vpop.permute.xlu0 %2215
        %v2219 = vrot.slane %v2058, 2
        %v2220 = vrot.slane %v2062, 2
        %v2223 = vsel %vm624, %v2058, %v2194
        %v2224 = vsel %vm624, %v2062, %v2196
        %v2225 = vsel %vm627, %v2223, %v2202
        %v2226 = vsel %vm627, %v2224, %v2204
        %v2227 = vsel %vm630, %v2225, %v2214
        %v2228 = vsel %vm630, %v2226, %v2216
        %v2229 = vrot.slane %v2058, 3
        %v2230 = vrot.slane %v2062, 3
        %2231 = vrot.lane.b32.xlu0 %v2229, 32
        %v2232 = vpop.permute.xlu0 %2231
        %2233 = vrot.lane.b32.xlu0 %v2230, 32
        %v2234 = vpop.permute.xlu0 %2233
        %v2237 = vrot.slane %v2059, 1
        %v2238 = vsel %vm641, %v2199, %v2237
        %v2239 = vrot.slane %v2063, 1
        %v2240 = vsel %vm641, %v2200, %v2239
        %2241 = vrot.lane.b32.xlu0 %v2238, 64
        %v2242 = vpop.permute.xlu0 %2241
        %2243 = vrot.lane.b32.xlu0 %v2237, 64
        %v2244 = vpop.permute.xlu0 %2243
        %2245 = vrot.lane.b32.xlu0 %v2240, 64
        %v2246 = vpop.permute.xlu0 %2245
        %2247 = vrot.lane.b32.xlu0 %v2239, 64
        %v2248 = vpop.permute.xlu0 %2247
        %v2253 = vrot.slane %v2058, 4
        %v2254 = vrot.slane %v2062, 4
        %2255 = vrot.lane.b32.xlu0 %v2253, 96
        %v2256 = vpop.permute.xlu0 %2255
        %2257 = vrot.lane.b32.xlu0 %v2254, 96
        %v2258 = vpop.permute.xlu0 %2257
        %v2261 = vrot.slane %v2059, 2
        %v2262 = vrot.slane %v2063, 2
        %v2263 = vsel %vm624, %v2058, %v2232
        %v2264 = vsel %vm624, %v2059, %v2232
        %v2265 = vsel %vm624, %v2062, %v2234
        %v2266 = vsel %vm624, %v2063, %v2234
        %v2267 = vsel %vm627, %v2263, %v2242
        %v2268 = vsel %vm627, %v2264, %v2244
        %v2269 = vsel %vm627, %v2265, %v2246
        %v2270 = vsel %vm627, %v2266, %v2248
        %v2271 = vsel %vm630, %v2267, %v2256
        %v2272 = vsel %vm630, %v2268, %v2256
        %v2273 = vsel %vm630, %v2269, %v2258
        %v2274 = vsel %vm630, %v2270, %v2258
        %v2279 = vrot.slane %v2271, 2
        %v2280 = vrot.slane %v2272, 2
        %v2281 = vsel %vm684, %v2279, %v2280
        %v2282 = vrot.slane %v2261, 2
        %v2283 = vsel %vm684, %v2282, %v2282
        %v2284 = vrot.slane %v2273, 2
        %v2285 = vrot.slane %v2274, 2
        %v2286 = vsel %vm684, %v2284, %v2285
        %v2287 = vrot.slane %v2262, 2
        %v2288 = vsel %vm684, %v2287, %v2287
        %v2293 = vsel %vm537, %v2227, %v2281
        %v2294 = vsel %vm537, %v2219, %v2283
        %v2295 = vsel %vm537, %v2228, %v2286
        %v2296 = vsel %vm537, %v2220, %v2288
        %v2297 = vpack.c.bf16 %v2295, %v2293
        %v2298 = vpack.c.bf16 %v2296, %v2294
        %s2299 = scalar_lea.vmem [#allocation2], 112
        %2300 = vst [vmem:[%s2299] sm:$0xff] %v2297
        %2301 = vst.msk [vmem:[%s2299 + $0x8] sm:$0xff] %vm624, %v2298
        %s2302 = scalar_lea.vmem %s228, 96 [#allocation3]
        %v2303 = vld [vmem:[%s2302] sm:$0xf]
        %v2304 = vld [vmem:[%s2302 + $0x4] sm:$0xf]
        %v2305 = vld [vmem:[%s2302 + $0x8] sm:$0xf]
        %v2306 = vld [vmem:[%s2302 + $0xc] sm:$0xf]
        %v2307 = vld [vmem:[%s2302 + $0x10] sm:$0xf]
        %v2308 = vld [vmem:[%s2302 + $0x14] sm:$0xf]
        %v2309 = vld [vmem:[%s2302 + $0x90] sm:$0xf]
        %v2310 = vld [vmem:[%s2302 + $0x94] sm:$0xf]
        %v2311 = vld [vmem:[%s2302 + $0x98] sm:$0xf]
        %v2312 = vld [vmem:[%s2302 + $0x9c] sm:$0xf]
        %v2313 = vld [vmem:[%s2302 + $0xa0] sm:$0xf]
        %v2314 = vld [vmem:[%s2302 + $0xa4] sm:$0xf]
        %v2327 = vunpack.c.l.b16 %v2303
        %v2328 = vunpack.c.l.b16 %v2304
        %v2329 = vunpack.c.l.b16 %v2305
        %v2330 = vunpack.c.l.b16 %v2306
        %v2331 = vunpack.c.l.b16 %v2307
        %v2332 = vunpack.c.l.b16 %v2308
        %v2333 = vunpack.c.l.b16 %v2309
        %v2334 = vunpack.c.l.b16 %v2310
        %v2335 = vunpack.c.l.b16 %v2311
        %v2336 = vunpack.c.l.b16 %v2312
        %v2337 = vunpack.c.l.b16 %v2313
        %v2338 = vunpack.c.l.b16 %v2314
        %v2339 = vpack.c.b16 %v2328, %v2327
        %v2340 = vpack.c.b16 %v2330, %v2329
        %v2341 = vpack.c.b16 %v2332, %v2331
        %v2342 = vpack.c.b16 %v2334, %v2333
        %v2343 = vpack.c.b16 %v2336, %v2335
        %v2344 = vpack.c.b16 %v2338, %v2337
        %v2346 = vsel %vm365, %v2339, 0
        %v2349 = vsel %vm365, %v2340, 0
        %v2352 = vsel %vm365, %v2341, 0
        %v2355 = vsel %vm365, %v2342, 0
        %v2358 = vsel %vm365, %v2343, 0
        %v2361 = vsel %vm365, %v2344, 0
        %2363 = vmatprep.subr.bf16.mxu0 0
        %2364 = vmatpush1.bf16.msra.mxu0 %v354
        %2365 = vmatprep.subr.bf16.mxu0 0
        %2366 = vmatpush1.bf16.msra.mxu0 %v355
        %2367 = vmatprep.subr.bf16.mxu0 0
        %2368 = vmatpush1.bf16.msra.mxu0 %v356
        %2369 = vmatprep.subr.bf16.mxu0 0
        %2370 = vmatpush1.bf16.msra.mxu0 %v357
        %2371 = vmatprep.subr.bf16.mxu0 0
        %2372 = vmatpush1.bf16.msra.mxu0 %v358
        %2373 = vmatprep.subr.bf16.mxu0 0
        %2374 = vmatpush1.bf16.msra.mxu0 %v386
        %2375 = vmatprep.subr.bf16.mxu0 0
        %2376 = vmatpush1.bf16.msra.mxu0 0
        %2377 = vmatprep.subr.bf16.mxu0 0
        %2378 = vmatpush1.bf16.msra.mxu0 0
        %2379 = vmatprep.subr.bf16.mxu0 0
        %2380 = vmatpush1.bf16.msra.mxu0 0
        %2381 = vmatprep.subr.bf16.mxu0 0
        %2382 = vmatpush1.bf16.msra.mxu0 0
        %2383 = vmatprep.subr.bf16.mxu0 0
        %2384 = vmatpush1.bf16.msra.mxu0 0
        %2385 = vmatprep.subr.bf16.mxu0 0
        %2386 = vmatpush1.bf16.msra.mxu0 0
        %2387 = vmatprep.subr.bf16.mxu0 0
        %2388 = vmatpush1.bf16.msra.mxu0 0
        %2389 = vmatprep.subr.bf16.mxu0 0
        %2390 = vmatpush1.bf16.msra.mxu0 0
        %2391 = vmatprep.subr.bf16.mxu0 0
        %2392 = vmatpush1.bf16.msra.mxu0 0
        %2393 = vmatprep.subr.bf16.mxu0 0
        %2394 = vmatpush1.bf16.msra.mxu0 0
        %2395 = vmatprep.mubr.bf16.mxu0 0
        %2396 = vmatmul.mubr.bf16.gmra.mrb[0].mxu0 %v2346
        %v2397 = vpop.f32.mrb[0].mxu0
        %v2398 = vadd.f32 0.0, %v2397
        %v2399 = vpop.f32.mrb[0].mxu0
        %v2400 = vpop.f32.mrb[0].mxu0
        %v2401 = vadd.f32 0.0, %v2400
        %v2402 = vpop.f32.mrb[0].mxu0
        %2403 = vmatprep.mubr.bf16.mxu0 0
        %2404 = vmatmul.mubr.bf16.gmra.mrb[0].mxu0 %v2349
        %v2405 = vpop.f32.mrb[0].mxu0
        %v2406 = vadd.f32 0.0, %v2405
        %v2407 = vpop.f32.mrb[0].mxu0
        %v2408 = vpop.f32.mrb[0].mxu0
        %v2409 = vadd.f32 0.0, %v2408
        %v2410 = vpop.f32.mrb[0].mxu0
        %2411 = vmatprep.mubr.bf16.mxu0 0
        %2412 = vmatmul.mubr.bf16.gmra.mrb[0].mxu0 %v2352
        %v2413 = vpop.f32.mrb[0].mxu0
        %v2414 = vadd.f32 0.0, %v2413
        %v2415 = vpop.f32.mrb[0].mxu0
        %v2416 = vpop.f32.mrb[0].mxu0
        %v2417 = vadd.f32 0.0, %v2416
        %v2418 = vpop.f32.mrb[0].mxu0
        %2419 = vmatprep.mubr.bf16.mxu0 0
        %2420 = vmatmul.mubr.bf16.gmra.mrb[0].mxu0 %v2355
        %v2421 = vpop.f32.mrb[0].mxu0
        %v2422 = vadd.f32 0.0, %v2421
        %v2423 = vpop.f32.mrb[0].mxu0
        %v2424 = vpop.f32.mrb[0].mxu0
        %v2425 = vadd.f32 0.0, %v2424
        %v2426 = vpop.f32.mrb[0].mxu0
        %2427 = vmatprep.mubr.bf16.mxu0 0
        %2428 = vmatmul.mubr.bf16.gmra.mrb[0].mxu0 %v2358
        %v2429 = vpop.f32.mrb[0].mxu0
        %v2430 = vadd.f32 0.0, %v2429
        %v2431 = vpop.f32.mrb[0].mxu0
        %v2432 = vpop.f32.mrb[0].mxu0
        %v2433 = vadd.f32 0.0, %v2432
        %v2434 = vpop.f32.mrb[0].mxu0
        %2435 = vmatprep.mubr.bf16.mxu0 0
        %2436 = vmatmul.mubr.bf16.gmra.mrb[0].mxu0 %v2361
        %v2437 = vpop.f32.mrb[0].mxu0
        %v2438 = vadd.f32 0.0, %v2437
        %v2439 = vpop.f32.mrb[0].mxu0
        %v2440 = vpop.f32.mrb[0].mxu0
        %v2441 = vadd.f32 0.0, %v2440
        %v2442 = vpop.f32.mrb[0].mxu0
        %2443 = vdwg.mxu0
        %2456 = vrot.lane.b32.xlu0 %v2398, 96
        %v2457 = vpop.permute.xlu0 %2456
        %2458 = vrot.lane.b32.xlu0 %v2401, 96
        %v2459 = vpop.permute.xlu0 %2458
        %2460 = vrot.lane.b32.xlu0 %v2406, 96
        %v2461 = vpop.permute.xlu0 %2460
        %2462 = vrot.lane.b32.xlu0 %v2409, 96
        %v2463 = vpop.permute.xlu0 %2462
        %2464 = vrot.lane.b32.xlu0 %v2414, 96
        %v2465 = vpop.permute.xlu0 %2464
        %2466 = vrot.lane.b32.xlu0 %v2417, 96
        %v2467 = vpop.permute.xlu0 %2466
        %2468 = vrot.lane.b32.xlu0 %v2422, 96
        %v2469 = vpop.permute.xlu0 %2468
        %2470 = vrot.lane.b32.xlu0 %v2425, 96
        %v2471 = vpop.permute.xlu0 %2470
        %2472 = vrot.lane.b32.xlu0 %v2430, 96
        %v2473 = vpop.permute.xlu0 %2472
        %2474 = vrot.lane.b32.xlu0 %v2433, 96
        %v2475 = vpop.permute.xlu0 %2474
        %2476 = vrot.lane.b32.xlu0 %v2438, 96
        %v2477 = vpop.permute.xlu0 %2476
        %2478 = vrot.lane.b32.xlu0 %v2441, 96
        %v2479 = vpop.permute.xlu0 %2478
        %v2492 = vmax.f32 %v2398, %v2457
        %v2493 = vmax.f32 %v2401, %v2459
        %v2494 = vmax.f32 %v2406, %v2461
        %v2495 = vmax.f32 %v2409, %v2463
        %v2496 = vmax.f32 %v2414, %v2465
        %v2497 = vmax.f32 %v2417, %v2467
        %v2498 = vmax.f32 %v2422, %v2469
        %v2499 = vmax.f32 %v2425, %v2471
        %v2500 = vmax.f32 %v2430, %v2473
        %v2501 = vmax.f32 %v2433, %v2475
        %v2502 = vmax.f32 %v2438, %v2477
        %v2503 = vmax.f32 %v2441, %v2479
        %v2512 = vrot.slane %v2493, 4
        %v2513 = vrot.slane %v2494, 4
        %v2514 = vsel %vm537, %v2512, %v2513
        %v2515 = vrot.slane %v2496, 4
        %v2516 = vrot.slane %v2497, 4
        %v2517 = vsel %vm537, %v2515, %v2516
        %v2518 = vrot.slane %v2499, 4
        %v2519 = vrot.slane %v2500, 4
        %v2520 = vsel %vm537, %v2518, %v2519
        %v2521 = vrot.slane %v2502, 4
        %v2522 = vrot.slane %v2503, 4
        %v2523 = vsel %vm537, %v2521, %v2522
        %v2532 = vmax.f32 %v2492, %v2514
        %v2533 = vmax.f32 %v2493, %v2513
        %v2534 = vmax.f32 %v2495, %v2517
        %v2535 = vmax.f32 %v2496, %v2516
        %v2536 = vmax.f32 %v2498, %v2520
        %v2537 = vmax.f32 %v2499, %v2519
        %v2538 = vmax.f32 %v2501, %v2523
        %v2539 = vmax.f32 %v2502, %v2522
        %v2540 = vadd.f32 %v2532, %v279
        %v2541 = vadd.f32 %v2533, %v279
        %v2542 = vadd.f32 %v2534, %v279
        %v2543 = vadd.f32 %v2535, %v279
        %v2544 = vadd.f32 %v2536, %v279
        %v2545 = vadd.f32 %v2537, %v279
        %v2546 = vadd.f32 %v2538, %v279
        %v2547 = vadd.f32 %v2539, %v279
        %v2548 = vmax.f32 %v2540, 0.0
        %v2549 = vmax.f32 %v2541, 0.0
        %v2550 = vmax.f32 %v2542, 0.0
        %v2551 = vmax.f32 %v2543, 0.0
        %v2552 = vmax.f32 %v2544, 0.0
        %v2553 = vmax.f32 %v2545, 0.0
        %v2554 = vmax.f32 %v2546, 0.0
        %v2555 = vmax.f32 %v2547, 0.0
        %v2560 = vrot.slane %v2548, 6
        %v2561 = vrot.slane %v2549, 6
        %v2562 = vsel %vm586, %v2560, %v2561
        %v2563 = vrot.slane %v2552, 6
        %v2564 = vrot.slane %v2553, 6
        %v2565 = vsel %vm586, %v2563, %v2564
        %2566 = vrot.lane.b32.xlu0 %v2562, 32
        %v2567 = vpop.permute.xlu0 %2566
        %2568 = vrot.lane.b32.xlu0 %v2565, 32
        %v2569 = vpop.permute.xlu0 %2568
        %v2572 = vrot.slane %v2548, 1
        %v2573 = vrot.slane %v2552, 1
        %2574 = vrot.lane.b32.xlu0 %v2572, 64
        %v2575 = vpop.permute.xlu0 %2574
        %2576 = vrot.lane.b32.xlu0 %v2573, 64
        %v2577 = vpop.permute.xlu0 %2576
        %v2580 = vrot.slane %v2548, 7
        %v2581 = vrot.slane %v2549, 7
        %v2582 = vsel %vm607, %v2580, %v2581
        %v2583 = vrot.slane %v2552, 7
        %v2584 = vrot.slane %v2553, 7
        %v2585 = vsel %vm607, %v2583, %v2584
        %2586 = vrot.lane.b32.xlu0 %v2582, 96
        %v2587 = vpop.permute.xlu0 %2586
        %2588 = vrot.lane.b32.xlu0 %v2585, 96
        %v2589 = vpop.permute.xlu0 %2588
        %v2592 = vrot.slane %v2548, 2
        %v2593 = vrot.slane %v2552, 2
        %v2596 = vsel %vm624, %v2548, %v2567
        %v2597 = vsel %vm624, %v2552, %v2569
        %v2598 = vsel %vm627, %v2596, %v2575
        %v2599 = vsel %vm627, %v2597, %v2577
        %v2600 = vsel %vm630, %v2598, %v2587
        %v2601 = vsel %vm630, %v2599, %v2589
        %v2602 = vrot.slane %v2548, 3
        %v2603 = vrot.slane %v2552, 3
        %2604 = vrot.lane.b32.xlu0 %v2602, 32
        %v2605 = vpop.permute.xlu0 %2604
        %2606 = vrot.lane.b32.xlu0 %v2603, 32
        %v2607 = vpop.permute.xlu0 %2606
        %v2610 = vrot.slane %v2549, 1
        %v2611 = vsel %vm641, %v2572, %v2610
        %v2612 = vrot.slane %v2553, 1
        %v2613 = vsel %vm641, %v2573, %v2612
        %2614 = vrot.lane.b32.xlu0 %v2611, 64
        %v2615 = vpop.permute.xlu0 %2614
        %2616 = vrot.lane.b32.xlu0 %v2610, 64
        %v2617 = vpop.permute.xlu0 %2616
        %2618 = vrot.lane.b32.xlu0 %v2613, 64
        %v2619 = vpop.permute.xlu0 %2618
        %2620 = vrot.lane.b32.xlu0 %v2612, 64
        %v2621 = vpop.permute.xlu0 %2620
        %v2626 = vrot.slane %v2548, 4
        %v2627 = vrot.slane %v2552, 4
        %2628 = vrot.lane.b32.xlu0 %v2626, 96
        %v2629 = vpop.permute.xlu0 %2628
        %2630 = vrot.lane.b32.xlu0 %v2627, 96
        %v2631 = vpop.permute.xlu0 %2630
        %v2634 = vrot.slane %v2549, 2
        %v2635 = vrot.slane %v2553, 2
        %v2636 = vsel %vm624, %v2548, %v2605
        %v2637 = vsel %vm624, %v2549, %v2605
        %v2638 = vsel %vm624, %v2552, %v2607
        %v2639 = vsel %vm624, %v2553, %v2607
        %v2640 = vsel %vm627, %v2636, %v2615
        %v2641 = vsel %vm627, %v2637, %v2617
        %v2642 = vsel %vm627, %v2638, %v2619
        %v2643 = vsel %vm627, %v2639, %v2621
        %v2644 = vsel %vm630, %v2640, %v2629
        %v2645 = vsel %vm630, %v2641, %v2629
        %v2646 = vsel %vm630, %v2642, %v2631
        %v2647 = vsel %vm630, %v2643, %v2631
        %v2652 = vrot.slane %v2644, 2
        %v2653 = vrot.slane %v2645, 2
        %v2654 = vsel %vm684, %v2652, %v2653
        %v2655 = vrot.slane %v2634, 2
        %v2656 = vsel %vm684, %v2655, %v2655
        %v2657 = vrot.slane %v2646, 2
        %v2658 = vrot.slane %v2647, 2
        %v2659 = vsel %vm684, %v2657, %v2658
        %v2660 = vrot.slane %v2635, 2
        %v2661 = vsel %vm684, %v2660, %v2660
        %v2666 = vsel %vm537, %v2600, %v2654
        %v2667 = vsel %vm537, %v2592, %v2656
        %v2668 = vsel %vm537, %v2601, %v2659
        %v2669 = vsel %vm537, %v2593, %v2661
        %v2670 = vpack.c.bf16 %v2668, %v2666
        %v2671 = vpack.c.bf16 %v2669, %v2667
        %s2672 = scalar_lea.vmem [#allocation2], 128
        %2673 = vst [vmem:[%s2672] sm:$0xff] %v2670
        %2674 = vst.msk [vmem:[%s2672 + $0x8] sm:$0xff] %vm624, %v2671
        %v2679 = vrot.slane %v2550, 6
        %v2680 = vrot.slane %v2551, 6
        %v2681 = vsel %vm586, %v2679, %v2680
        %v2682 = vrot.slane %v2554, 6
        %v2683 = vrot.slane %v2555, 6
        %v2684 = vsel %vm586, %v2682, %v2683
        %2685 = vrot.lane.b32.xlu0 %v2681, 32
        %v2686 = vpop.permute.xlu0 %2685
        %2687 = vrot.lane.b32.xlu0 %v2684, 32
        %v2688 = vpop.permute.xlu0 %2687
        %v2691 = vrot.slane %v2550, 1
        %v2692 = vrot.slane %v2554, 1
        %2693 = vrot.lane.b32.xlu0 %v2691, 64
        %v2694 = vpop.permute.xlu0 %2693
        %2695 = vrot.lane.b32.xlu0 %v2692, 64
        %v2696 = vpop.permute.xlu0 %2695
        %v2699 = vrot.slane %v2550, 7
        %v2700 = vrot.slane %v2551, 7
        %v2701 = vsel %vm607, %v2699, %v2700
        %v2702 = vrot.slane %v2554, 7
        %v2703 = vrot.slane %v2555, 7
        %v2704 = vsel %vm607, %v2702, %v2703
        %2705 = vrot.lane.b32.xlu0 %v2701, 96
        %v2706 = vpop.permute.xlu0 %2705
        %2707 = vrot.lane.b32.xlu0 %v2704, 96
        %v2708 = vpop.permute.xlu0 %2707
        %v2711 = vrot.slane %v2550, 2
        %v2712 = vrot.slane %v2554, 2
        %v2715 = vsel %vm624, %v2550, %v2686
        %v2716 = vsel %vm624, %v2554, %v2688
        %v2717 = vsel %vm627, %v2715, %v2694
        %v2718 = vsel %vm627, %v2716, %v2696
        %v2719 = vsel %vm630, %v2717, %v2706
        %v2720 = vsel %vm630, %v2718, %v2708
        %v2721 = vrot.slane %v2550, 3
        %v2722 = vrot.slane %v2554, 3
        %2723 = vrot.lane.b32.xlu0 %v2721, 32
        %v2724 = vpop.permute.xlu0 %2723
        %2725 = vrot.lane.b32.xlu0 %v2722, 32
        %v2726 = vpop.permute.xlu0 %2725
        %v2729 = vrot.slane %v2551, 1
        %v2730 = vsel %vm641, %v2691, %v2729
        %v2731 = vrot.slane %v2555, 1
        %v2732 = vsel %vm641, %v2692, %v2731
        %2733 = vrot.lane.b32.xlu0 %v2730, 64
        %v2734 = vpop.permute.xlu0 %2733
        %2735 = vrot.lane.b32.xlu0 %v2729, 64
        %v2736 = vpop.permute.xlu0 %2735
        %2737 = vrot.lane.b32.xlu0 %v2732, 64
        %v2738 = vpop.permute.xlu0 %2737
        %2739 = vrot.lane.b32.xlu0 %v2731, 64
        %v2740 = vpop.permute.xlu0 %2739
        %v2745 = vrot.slane %v2550, 4
        %v2746 = vrot.slane %v2554, 4
        %2747 = vrot.lane.b32.xlu0 %v2745, 96
        %v2748 = vpop.permute.xlu0 %2747
        %2749 = vrot.lane.b32.xlu0 %v2746, 96
        %v2750 = vpop.permute.xlu0 %2749
        %v2753 = vrot.slane %v2551, 2
        %v2754 = vrot.slane %v2555, 2
        %v2755 = vsel %vm624, %v2550, %v2724
        %v2756 = vsel %vm624, %v2551, %v2724
        %v2757 = vsel %vm624, %v2554, %v2726
        %v2758 = vsel %vm624, %v2555, %v2726
        %v2759 = vsel %vm627, %v2755, %v2734
        %v2760 = vsel %vm627, %v2756, %v2736
        %v2761 = vsel %vm627, %v2757, %v2738
        %v2762 = vsel %vm627, %v2758, %v2740
        %v2763 = vsel %vm630, %v2759, %v2748
        %v2764 = vsel %vm630, %v2760, %v2748
        %v2765 = vsel %vm630, %v2761, %v2750
        %v2766 = vsel %vm630, %v2762, %v2750
        %v2771 = vrot.slane %v2763, 2
        %v2772 = vrot.slane %v2764, 2
        %v2773 = vsel %vm684, %v2771, %v2772
        %v2774 = vrot.slane %v2753, 2
        %v2775 = vsel %vm684, %v2774, %v2774
        %v2776 = vrot.slane %v2765, 2
        %v2777 = vrot.slane %v2766, 2
        %v2778 = vsel %vm684, %v2776, %v2777
        %v2779 = vrot.slane %v2754, 2
        %v2780 = vsel %vm684, %v2779, %v2779
        %v2785 = vsel %vm537, %v2719, %v2773
        %v2786 = vsel %vm537, %v2711, %v2775
        %v2787 = vsel %vm537, %v2720, %v2778
        %v2788 = vsel %vm537, %v2712, %v2780
        %v2789 = vpack.c.bf16 %v2787, %v2785
        %v2790 = vpack.c.bf16 %v2788, %v2786
        %s2791 = scalar_lea.vmem [#allocation2], 144
        %2792 = vst [vmem:[%s2791] sm:$0xff] %v2789
        %2793 = vst.msk [vmem:[%s2791 + $0x8] sm:$0xff] %vm624, %v2790
        %s2794 = scalar_lea.vmem %s228, 120 [#allocation3]
        %v2795 = vld [vmem:[%s2794] sm:$0xf]
        %v2796 = vld [vmem:[%s2794 + $0x4] sm:$0xf]
        %v2797 = vld [vmem:[%s2794 + $0x8] sm:$0xf]
        %v2798 = vld [vmem:[%s2794 + $0xc] sm:$0xf]
        %v2799 = vld [vmem:[%s2794 + $0x10] sm:$0xf]
        %v2800 = vld [vmem:[%s2794 + $0x14] sm:$0xf]
        %v2801 = vld [vmem:[%s2794 + $0x90] sm:$0xf]
        %v2802 = vld [vmem:[%s2794 + $0x94] sm:$0xf]
        %v2803 = vld [vmem:[%s2794 + $0x98] sm:$0xf]
        %v2804 = vld [vmem:[%s2794 + $0x9c] sm:$0xf]
        %v2805 = vld [vmem:[%s2794 + $0xa0] sm:$0xf]
        %v2806 = vld [vmem:[%s2794 + $0xa4] sm:$0xf]
        %v2819 = vunpack.c.l.b16 %v2795
        %v2820 = vunpack.c.l.b16 %v2796
        %v2821 = vunpack.c.l.b16 %v2797
        %v2822 = vunpack.c.l.b16 %v2798
        %v2823 = vunpack.c.l.b16 %v2799
        %v2824 = vunpack.c.l.b16 %v2800
        %v2825 = vunpack.c.l.b16 %v2801
        %v2826 = vunpack.c.l.b16 %v2802
        %v2827 = vunpack.c.l.b16 %v2803
        %v2828 = vunpack.c.l.b16 %v2804
        %v2829 = vunpack.c.l.b16 %v2805
        %v2830 = vunpack.c.l.b16 %v2806
        %v2831 = vpack.c.b16 %v2820, %v2819
        %v2832 = vpack.c.b16 %v2822, %v2821
        %v2833 = vpack.c.b16 %v2824, %v2823
        %v2834 = vpack.c.b16 %v2826, %v2825
        %v2835 = vpack.c.b16 %v2828, %v2827
        %v2836 = vpack.c.b16 %v2830, %v2829
        %v2838 = vsel %vm365, %v2831, 0
        %v2841 = vsel %vm365, %v2832, 0
        %v2844 = vsel %vm365, %v2833, 0
        %v2847 = vsel %vm365, %v2834, 0
        %v2850 = vsel %vm365, %v2835, 0
        %v2853 = vsel %vm365, %v2836, 0
        %2855 = vmatprep.subr.bf16.mxu0 0
        %2856 = vmatpush1.bf16.msra.mxu0 %v354
        %2857 = vmatprep.subr.bf16.mxu0 0
        %2858 = vmatpush1.bf16.msra.mxu0 %v355
        %2859 = vmatprep.subr.bf16.mxu0 0
        %2860 = vmatpush1.bf16.msra.mxu0 %v356
        %2861 = vmatprep.subr.bf16.mxu0 0
        %2862 = vmatpush1.bf16.msra.mxu0 %v357
        %2863 = vmatprep.subr.bf16.mxu0 0
        %2864 = vmatpush1.bf16.msra.mxu0 %v358
        %2865 = vmatprep.subr.bf16.mxu0 0
        %2866 = vmatpush1.bf16.msra.mxu0 %v386
        %2867 = vmatprep.subr.bf16.mxu0 0
        %2868 = vmatpush1.bf16.msra.mxu0 0
        %2869 = vmatprep.subr.bf16.mxu0 0
        %2870 = vmatpush1.bf16.msra.mxu0 0
        %2871 = vmatprep.subr.bf16.mxu0 0
        %2872 = vmatpush1.bf16.msra.mxu0 0
        %2873 = vmatprep.subr.bf16.mxu0 0
        %2874 = vmatpush1.bf16.msra.mxu0 0
        %2875 = vmatprep.subr.bf16.mxu0 0
        %2876 = vmatpush1.bf16.msra.mxu0 0
        %2877 = vmatprep.subr.bf16.mxu0 0
        %2878 = vmatpush1.bf16.msra.mxu0 0
        %2879 = vmatprep.subr.bf16.mxu0 0
        %2880 = vmatpush1.bf16.msra.mxu0 0
        %2881 = vmatprep.subr.bf16.mxu0 0
        %2882 = vmatpush1.bf16.msra.mxu0 0
        %2883 = vmatprep.subr.bf16.mxu0 0
        %2884 = vmatpush1.bf16.msra.mxu0 0
        %2885 = vmatprep.subr.bf16.mxu0 0
        %2886 = vmatpush1.bf16.msra.mxu0 0
        %2887 = vmatprep.mubr.bf16.mxu0 0
        %2888 = vmatmul.mubr.bf16.gmra.mrb[0].mxu0 %v2838
        %v2889 = vpop.f32.mrb[0].mxu0
        %v2890 = vadd.f32 0.0, %v2889
        %v2891 = vpop.f32.mrb[0].mxu0
        %v2892 = vpop.f32.mrb[0].mxu0
        %v2893 = vadd.f32 0.0, %v2892
        %v2894 = vpop.f32.mrb[0].mxu0
        %2895 = vmatprep.mubr.bf16.mxu0 0
        %2896 = vmatmul.mubr.bf16.gmra.mrb[0].mxu0 %v2841
        %v2897 = vpop.f32.mrb[0].mxu0
        %v2898 = vadd.f32 0.0, %v2897
        %v2899 = vpop.f32.mrb[0].mxu0
        %v2900 = vpop.f32.mrb[0].mxu0
        %v2901 = vadd.f32 0.0, %v2900
        %v2902 = vpop.f32.mrb[0].mxu0
        %2903 = vmatprep.mubr.bf16.mxu0 0
        %2904 = vmatmul.mubr.bf16.gmra.mrb[0].mxu0 %v2844
        %v2905 = vpop.f32.mrb[0].mxu0
        %v2906 = vadd.f32 0.0, %v2905
        %v2907 = vpop.f32.mrb[0].mxu0
        %v2908 = vpop.f32.mrb[0].mxu0
        %v2909 = vadd.f32 0.0, %v2908
        %v2910 = vpop.f32.mrb[0].mxu0
        %2911 = vmatprep.mubr.bf16.mxu0 0
        %2912 = vmatmul.mubr.bf16.gmra.mrb[0].mxu0 %v2847
        %v2913 = vpop.f32.mrb[0].mxu0
        %v2914 = vadd.f32 0.0, %v2913
        %v2915 = vpop.f32.mrb[0].mxu0
        %v2916 = vpop.f32.mrb[0].mxu0
        %v2917 = vadd.f32 0.0, %v2916
        %v2918 = vpop.f32.mrb[0].mxu0
        %2919 = vmatprep.mubr.bf16.mxu0 0
        %2920 = vmatmul.mubr.bf16.gmra.mrb[0].mxu0 %v2850
        %v2921 = vpop.f32.mrb[0].mxu0
        %v2922 = vadd.f32 0.0, %v2921
        %v2923 = vpop.f32.mrb[0].mxu0
        %v2924 = vpop.f32.mrb[0].mxu0
        %v2925 = vadd.f32 0.0, %v2924
        %v2926 = vpop.f32.mrb[0].mxu0
        %2927 = vmatprep.mubr.bf16.mxu0 0
        %2928 = vmatmul.mubr.bf16.gmra.mrb[0].mxu0 %v2853
        %v2929 = vpop.f32.mrb[0].mxu0
        %v2930 = vadd.f32 0.0, %v2929
        %v2931 = vpop.f32.mrb[0].mxu0
        %v2932 = vpop.f32.mrb[0].mxu0
        %v2933 = vadd.f32 0.0, %v2932
        %v2934 = vpop.f32.mrb[0].mxu0
        %2935 = vdwg.mxu0
        %2948 = vrot.lane.b32.xlu0 %v2890, 96
        %v2949 = vpop.permute.xlu0 %2948
        %2950 = vrot.lane.b32.xlu0 %v2893, 96
        %v2951 = vpop.permute.xlu0 %2950
        %2952 = vrot.lane.b32.xlu0 %v2898, 96
        %v2953 = vpop.permute.xlu0 %2952
        %2954 = vrot.lane.b32.xlu0 %v2901, 96
        %v2955 = vpop.permute.xlu0 %2954
        %2956 = vrot.lane.b32.xlu0 %v2906, 96
        %v2957 = vpop.permute.xlu0 %2956
        %2958 = vrot.lane.b32.xlu0 %v2909, 96
        %v2959 = vpop.permute.xlu0 %2958
        %2960 = vrot.lane.b32.xlu0 %v2914, 96
        %v2961 = vpop.permute.xlu0 %2960
        %2962 = vrot.lane.b32.xlu0 %v2917, 96
        %v2963 = vpop.permute.xlu0 %2962
        %2964 = vrot.lane.b32.xlu0 %v2922, 96
        %v2965 = vpop.permute.xlu0 %2964
        %2966 = vrot.lane.b32.xlu0 %v2925, 96
        %v2967 = vpop.permute.xlu0 %2966
        %2968 = vrot.lane.b32.xlu0 %v2930, 96
        %v2969 = vpop.permute.xlu0 %2968
        %2970 = vrot.lane.b32.xlu0 %v2933, 96
        %v2971 = vpop.permute.xlu0 %2970
        %v2984 = vmax.f32 %v2890, %v2949
        %v2985 = vmax.f32 %v2893, %v2951
        %v2986 = vmax.f32 %v2898, %v2953
        %v2987 = vmax.f32 %v2901, %v2955
        %v2988 = vmax.f32 %v2906, %v2957
        %v2989 = vmax.f32 %v2909, %v2959
        %v2990 = vmax.f32 %v2914, %v2961
        %v2991 = vmax.f32 %v2917, %v2963
        %v2992 = vmax.f32 %v2922, %v2965
        %v2993 = vmax.f32 %v2925, %v2967
        %v2994 = vmax.f32 %v2930, %v2969
        %v2995 = vmax.f32 %v2933, %v2971
        %v3004 = vrot.slane %v2985, 4
        %v3005 = vrot.slane %v2986, 4
        %v3006 = vsel %vm537, %v3004, %v3005
        %v3007 = vrot.slane %v2988, 4
        %v3008 = vrot.slane %v2989, 4
        %v3009 = vsel %vm537, %v3007, %v3008
        %v3010 = vrot.slane %v2991, 4
        %v3011 = vrot.slane %v2992, 4
        %v3012 = vsel %vm537, %v3010, %v3011
        %v3013 = vrot.slane %v2994, 4
        %v3014 = vrot.slane %v2995, 4
        %v3015 = vsel %vm537, %v3013, %v3014
        %v3024 = vmax.f32 %v2984, %v3006
        %v3025 = vmax.f32 %v2985, %v3005
        %v3026 = vmax.f32 %v2987, %v3009
        %v3027 = vmax.f32 %v2988, %v3008
        %v3028 = vmax.f32 %v2990, %v3012
        %v3029 = vmax.f32 %v2991, %v3011
        %v3030 = vmax.f32 %v2993, %v3015
        %v3031 = vmax.f32 %v2994, %v3014
        %v3032 = vadd.f32 %v3024, %v279
        %v3033 = vadd.f32 %v3025, %v279
        %v3034 = vadd.f32 %v3026, %v279
        %v3035 = vadd.f32 %v3027, %v279
        %v3036 = vadd.f32 %v3028, %v279
        %v3037 = vadd.f32 %v3029, %v279
        %v3038 = vadd.f32 %v3030, %v279
        %v3039 = vadd.f32 %v3031, %v279
        %v3040 = vmax.f32 %v3032, 0.0
        %v3041 = vmax.f32 %v3033, 0.0
        %v3042 = vmax.f32 %v3034, 0.0
        %v3043 = vmax.f32 %v3035, 0.0
        %v3044 = vmax.f32 %v3036, 0.0
        %v3045 = vmax.f32 %v3037, 0.0
        %v3046 = vmax.f32 %v3038, 0.0
        %v3047 = vmax.f32 %v3039, 0.0
        %v3052 = vrot.slane %v3040, 6
        %v3053 = vrot.slane %v3041, 6
        %v3054 = vsel %vm586, %v3052, %v3053
        %v3055 = vrot.slane %v3044, 6
        %v3056 = vrot.slane %v3045, 6
        %v3057 = vsel %vm586, %v3055, %v3056
        %3058 = vrot.lane.b32.xlu0 %v3054, 32
        %v3059 = vpop.permute.xlu0 %3058
        %3060 = vrot.lane.b32.xlu0 %v3057, 32
        %v3061 = vpop.permute.xlu0 %3060
        %v3064 = vrot.slane %v3040, 1
        %v3065 = vrot.slane %v3044, 1
        %3066 = vrot.lane.b32.xlu0 %v3064, 64
        %v3067 = vpop.permute.xlu0 %3066
        %3068 = vrot.lane.b32.xlu0 %v3065, 64
        %v3069 = vpop.permute.xlu0 %3068
        %v3072 = vrot.slane %v3040, 7
        %v3073 = vrot.slane %v3041, 7
        %v3074 = vsel %vm607, %v3072, %v3073
        %v3075 = vrot.slane %v3044, 7
        %v3076 = vrot.slane %v3045, 7
        %v3077 = vsel %vm607, %v3075, %v3076
        %3078 = vrot.lane.b32.xlu0 %v3074, 96
        %v3079 = vpop.permute.xlu0 %3078
        %3080 = vrot.lane.b32.xlu0 %v3077, 96
        %v3081 = vpop.permute.xlu0 %3080
        %v3084 = vrot.slane %v3040, 2
        %v3085 = vrot.slane %v3044, 2
        %v3088 = vsel %vm624, %v3040, %v3059
        %v3089 = vsel %vm624, %v3044, %v3061
        %v3090 = vsel %vm627, %v3088, %v3067
        %v3091 = vsel %vm627, %v3089, %v3069
        %v3092 = vsel %vm630, %v3090, %v3079
        %v3093 = vsel %vm630, %v3091, %v3081
        %v3094 = vrot.slane %v3040, 3
        %v3095 = vrot.slane %v3044, 3
        %3096 = vrot.lane.b32.xlu0 %v3094, 32
        %v3097 = vpop.permute.xlu0 %3096
        %3098 = vrot.lane.b32.xlu0 %v3095, 32
        %v3099 = vpop.permute.xlu0 %3098
        %v3102 = vrot.slane %v3041, 1
        %v3103 = vsel %vm641, %v3064, %v3102
        %v3104 = vrot.slane %v3045, 1
        %v3105 = vsel %vm641, %v3065, %v3104
        %3106 = vrot.lane.b32.xlu0 %v3103, 64
        %v3107 = vpop.permute.xlu0 %3106
        %3108 = vrot.lane.b32.xlu0 %v3102, 64
        %v3109 = vpop.permute.xlu0 %3108
        %3110 = vrot.lane.b32.xlu0 %v3105, 64
        %v3111 = vpop.permute.xlu0 %3110
        %3112 = vrot.lane.b32.xlu0 %v3104, 64
        %v3113 = vpop.permute.xlu0 %3112
        %v3118 = vrot.slane %v3040, 4
        %v3119 = vrot.slane %v3044, 4
        %3120 = vrot.lane.b32.xlu0 %v3118, 96
        %v3121 = vpop.permute.xlu0 %3120
        %3122 = vrot.lane.b32.xlu0 %v3119, 96
        %v3123 = vpop.permute.xlu0 %3122
        %v3126 = vrot.slane %v3041, 2
        %v3127 = vrot.slane %v3045, 2
        %v3128 = vsel %vm624, %v3040, %v3097
        %v3129 = vsel %vm624, %v3041, %v3097
        %v3130 = vsel %vm624, %v3044, %v3099
        %v3131 = vsel %vm624, %v3045, %v3099
        %v3132 = vsel %vm627, %v3128, %v3107
        %v3133 = vsel %vm627, %v3129, %v3109
        %v3134 = vsel %vm627, %v3130, %v3111
        %v3135 = vsel %vm627, %v3131, %v3113
        %v3136 = vsel %vm630, %v3132, %v3121
        %v3137 = vsel %vm630, %v3133, %v3121
        %v3138 = vsel %vm630, %v3134, %v3123
        %v3139 = vsel %vm630, %v3135, %v3123
        %v3144 = vrot.slane %v3136, 2
        %v3145 = vrot.slane %v3137, 2
        %v3146 = vsel %vm684, %v3144, %v3145
        %v3147 = vrot.slane %v3126, 2
        %v3148 = vsel %vm684, %v3147, %v3147
        %v3149 = vrot.slane %v3138, 2
        %v3150 = vrot.slane %v3139, 2
        %v3151 = vsel %vm684, %v3149, %v3150
        %v3152 = vrot.slane %v3127, 2
        %v3153 = vsel %vm684, %v3152, %v3152
        %v3158 = vsel %vm537, %v3092, %v3146
        %v3159 = vsel %vm537, %v3084, %v3148
        %v3160 = vsel %vm537, %v3093, %v3151
        %v3161 = vsel %vm537, %v3085, %v3153
        %v3162 = vpack.c.bf16 %v3160, %v3158
        %v3163 = vpack.c.bf16 %v3161, %v3159
        %s3164 = scalar_lea.vmem [#allocation2], 160
        %3165 = vst [vmem:[%s3164] sm:$0xff] %v3162
        %3166 = vst.msk [vmem:[%s3164 + $0x8] sm:$0xff] %vm624, %v3163
        %v3171 = vrot.slane %v3042, 6
        %v3172 = vrot.slane %v3043, 6
        %v3173 = vsel %vm586, %v3171, %v3172
        %v3174 = vrot.slane %v3046, 6
        %v3175 = vrot.slane %v3047, 6
        %v3176 = vsel %vm586, %v3174, %v3175
        %3177 = vrot.lane.b32.xlu0 %v3173, 32
        %v3178 = vpop.permute.xlu0 %3177
        %3179 = vrot.lane.b32.xlu0 %v3176, 32
        %v3180 = vpop.permute.xlu0 %3179
        %v3183 = vrot.slane %v3042, 1
        %v3184 = vrot.slane %v3046, 1
        %3185 = vrot.lane.b32.xlu0 %v3183, 64
        %v3186 = vpop.permute.xlu0 %3185
        %3187 = vrot.lane.b32.xlu0 %v3184, 64
        %v3188 = vpop.permute.xlu0 %3187
        %v3191 = vrot.slane %v3042, 7
        %v3192 = vrot.slane %v3043, 7
        %v3193 = vsel %vm607, %v3191, %v3192
        %v3194 = vrot.slane %v3046, 7
        %v3195 = vrot.slane %v3047, 7
        %v3196 = vsel %vm607, %v3194, %v3195
        %3197 = vrot.lane.b32.xlu0 %v3193, 96
        %v3198 = vpop.permute.xlu0 %3197
        %3199 = vrot.lane.b32.xlu0 %v3196, 96
        %v3200 = vpop.permute.xlu0 %3199
        %v3203 = vrot.slane %v3042, 2
        %v3204 = vrot.slane %v3046, 2
        %v3207 = vsel %vm624, %v3042, %v3178
        %v3208 = vsel %vm624, %v3046, %v3180
        %v3209 = vsel %vm627, %v3207, %v3186
        %v3210 = vsel %vm627, %v3208, %v3188
        %v3211 = vsel %vm630, %v3209, %v3198
        %v3212 = vsel %vm630, %v3210, %v3200
        %v3213 = vrot.slane %v3042, 3
        %v3214 = vrot.slane %v3046, 3
        %3215 = vrot.lane.b32.xlu0 %v3213, 32
        %v3216 = vpop.permute.xlu0 %3215
        %3217 = vrot.lane.b32.xlu0 %v3214, 32
        %v3218 = vpop.permute.xlu0 %3217
        %v3221 = vrot.slane %v3043, 1
        %v3222 = vsel %vm641, %v3183, %v3221
        %v3223 = vrot.slane %v3047, 1
        %v3224 = vsel %vm641, %v3184, %v3223
        %3225 = vrot.lane.b32.xlu0 %v3222, 64
        %v3226 = vpop.permute.xlu0 %3225
        %3227 = vrot.lane.b32.xlu0 %v3221, 64
        %v3228 = vpop.permute.xlu0 %3227
        %3229 = vrot.lane.b32.xlu0 %v3224, 64
        %v3230 = vpop.permute.xlu0 %3229
        %3231 = vrot.lane.b32.xlu0 %v3223, 64
        %v3232 = vpop.permute.xlu0 %3231
        %v3237 = vrot.slane %v3042, 4
        %v3238 = vrot.slane %v3046, 4
        %3239 = vrot.lane.b32.xlu0 %v3237, 96
        %v3240 = vpop.permute.xlu0 %3239
        %3241 = vrot.lane.b32.xlu0 %v3238, 96
        %v3242 = vpop.permute.xlu0 %3241
        %v3245 = vrot.slane %v3043, 2
        %v3246 = vrot.slane %v3047, 2
        %v3247 = vsel %vm624, %v3042, %v3216
        %v3248 = vsel %vm624, %v3043, %v3216
        %v3249 = vsel %vm624, %v3046, %v3218
        %v3250 = vsel %vm624, %v3047, %v3218
        %v3251 = vsel %vm627, %v3247, %v3226
        %v3252 = vsel %vm627, %v3248, %v3228
        %v3253 = vsel %vm627, %v3249, %v3230
        %v3254 = vsel %vm627, %v3250, %v3232
        %v3255 = vsel %vm630, %v3251, %v3240
        %v3256 = vsel %vm630, %v3252, %v3240
        %v3257 = vsel %vm630, %v3253, %v3242
        %v3258 = vsel %vm630, %v3254, %v3242
        %v3263 = vrot.slane %v3255, 2
        %v3264 = vrot.slane %v3256, 2
        %v3265 = vsel %vm684, %v3263, %v3264
        %v3266 = vrot.slane %v3245, 2
        %v3267 = vsel %vm684, %v3266, %v3266
        %v3268 = vrot.slane %v3257, 2
        %v3269 = vrot.slane %v3258, 2
        %v3270 = vsel %vm684, %v3268, %v3269
        %v3271 = vrot.slane %v3246, 2
        %v3272 = vsel %vm684, %v3271, %v3271
        %v3277 = vsel %vm537, %v3211, %v3265
        %v3278 = vsel %vm537, %v3203, %v3267
        %v3279 = vsel %vm537, %v3212, %v3270
        %v3280 = vsel %vm537, %v3204, %v3272
        %v3281 = vpack.c.bf16 %v3279, %v3277
        %v3282 = vpack.c.bf16 %v3280, %v3278
        %s3283 = scalar_lea.vmem [#allocation2], 176
        %3284 = vst [vmem:[%s3283] sm:$0xff] %v3281
        %3285 = vst.msk [vmem:[%s3283 + $0x8] sm:$0xff] %vm624, %v3282
        %v3286 = vld [vmem:[#allocation2] sm:$0xff]
        %v3287 = vld [vmem:[#allocation2 + $0x8] sm:$0xff]
        %v3288 = vld [vmem:[#allocation6] sm:$0xf]
        %v3289 = vld [vmem:[#allocation6 + $0x4] sm:$0xf]
        %v3290 = vld [vmem:[#allocation6 + $0x8] sm:$0xf]
        %v3291 = vld [vmem:[#allocation6 + $0xc] sm:$0xf]
        %v3292 = vld [vmem:[#allocation6 + $0x10] sm:$0xf]
        %v3293 = vld [vmem:[#allocation6 + $0x14] sm:$0xf]
        %v3294 = vld [vmem:[#allocation6 + $0x18] sm:$0xf]
        %v3295 = vld [vmem:[#allocation6 + $0x1c] sm:$0xf]
        %v3296 = vld [vmem:[#allocation6 + $0x20] sm:$0xf]
        %v3297 = vld [vmem:[#allocation6 + $0x24] sm:$0xf]
        %v3298 = vld [vmem:[#allocation6 + $0x28] sm:$0xf]
        %v3299 = vld [vmem:[#allocation6 + $0x2c] sm:$0xf]
        %v3300 = vld [vmem:[#allocation6 + $0x30] sm:$0xf]
        %v3301 = vld [vmem:[#allocation6 + $0x34] sm:$0xf]
        %v3302 = vld [vmem:[#allocation6 + $0x38] sm:$0xf]
        %v3303 = vld [vmem:[#allocation6 + $0x3c] sm:$0xf]
        %v3304 = vld [vmem:[#allocation6 + $0x40] sm:$0xf]
        %v3305 = vld [vmem:[#allocation6 + $0x44] sm:$0xf]
        %v3306 = vld [vmem:[#allocation6 + $0x48] sm:$0xf]
        %v3307 = vld [vmem:[#allocation6 + $0x4c] sm:$0xf]
        %v3308 = vld [vmem:[%s823] sm:$0xff]
        %v3309 = vld [vmem:[%s823 + $0x8] sm:$0xff]
        %s3310 = scalar_lea.vmem [#allocation6], 80
        %v3311 = vld [vmem:[%s3310] sm:$0xf]
        %v3312 = vld [vmem:[%s3310 + $0x4] sm:$0xf]
        %v3313 = vld [vmem:[%s3310 + $0x8] sm:$0xf]
        %v3314 = vld [vmem:[%s3310 + $0xc] sm:$0xf]
        %v3315 = vld [vmem:[%s3310 + $0x10] sm:$0xf]
        %v3316 = vld [vmem:[%s3310 + $0x14] sm:$0xf]
        %v3317 = vld [vmem:[%s3310 + $0x18] sm:$0xf]
        %v3318 = vld [vmem:[%s3310 + $0x1c] sm:$0xf]
        %v3319 = vld [vmem:[%s3310 + $0x20] sm:$0xf]
        %v3320 = vld [vmem:[%s3310 + $0x24] sm:$0xf]
        %v3321 = vld [vmem:[%s3310 + $0x28] sm:$0xf]
        %v3322 = vld [vmem:[%s3310 + $0x2c] sm:$0xf]
        %v3323 = vld [vmem:[%s3310 + $0x30] sm:$0xf]
        %v3324 = vld [vmem:[%s3310 + $0x34] sm:$0xf]
        %v3325 = vld [vmem:[%s3310 + $0x38] sm:$0xf]
        %v3326 = vld [vmem:[%s3310 + $0x3c] sm:$0xf]
        %v3327 = vld [vmem:[%s3310 + $0x40] sm:$0xf]
        %v3328 = vld [vmem:[%s3310 + $0x44] sm:$0xf]
        %v3329 = vld [vmem:[%s3310 + $0x48] sm:$0xf]
        %v3330 = vld [vmem:[%s3310 + $0x4c] sm:$0xf]
        %v3351 = vunpack.c.l.b16 %v3311
        %v3352 = vunpack.c.l.b16 %v3312
        %v3353 = vunpack.c.l.b16 %v3313
        %v3354 = vunpack.c.l.b16 %v3314
        %v3355 = vunpack.c.l.b16 %v3315
        %v3356 = vunpack.c.l.b16 %v3316
        %v3357 = vunpack.c.l.b16 %v3317
        %v3358 = vunpack.c.l.b16 %v3318
        %v3359 = vunpack.c.l.b16 %v3319
        %v3360 = vunpack.c.l.b16 %v3320
        %v3361 = vunpack.c.l.b16 %v3321
        %v3362 = vunpack.c.l.b16 %v3322
        %v3363 = vunpack.c.l.b16 %v3323
        %v3364 = vunpack.c.l.b16 %v3324
        %v3365 = vunpack.c.l.b16 %v3325
        %v3366 = vunpack.c.l.b16 %v3326
        %v3367 = vunpack.c.l.b16 %v3327
        %v3368 = vunpack.c.l.b16 %v3328
        %v3369 = vunpack.c.l.b16 %v3329
        %v3370 = vunpack.c.l.b16 %v3330
        %v3371 = vpack.c.b16 %v3352, %v3351
        %v3372 = vpack.c.b16 %v3354, %v3353
        %v3373 = vpack.c.b16 %v3356, %v3355
        %v3374 = vpack.c.b16 %v3358, %v3357
        %v3375 = vpack.c.b16 %v3360, %v3359
        %v3376 = vpack.c.b16 %v3362, %v3361
        %v3377 = vpack.c.b16 %v3364, %v3363
        %v3378 = vpack.c.b16 %v3366, %v3365
        %v3379 = vpack.c.b16 %v3368, %v3367
        %v3380 = vpack.c.b16 %v3370, %v3369
        %v3392 = vsel %vm624, %v3309, 0
        %3394 = vmatprep.subr.bf16.mxu0 0
        %3395 = vmatpush1.bf16.msra.mxu0 %v3371
        %3396 = vmatprep.subr.bf16.mxu0 0
        %3397 = vmatpush1.bf16.msra.mxu0 %v3372
        %3398 = vmatprep.subr.bf16.mxu0 0
        %3399 = vmatpush1.bf16.msra.mxu0 %v3373
        %3400 = vmatprep.subr.bf16.mxu0 0
        %3401 = vmatpush1.bf16.msra.mxu0 %v3374
        %3402 = vmatprep.subr.bf16.mxu0 0
        %3403 = vmatpush1.bf16.msra.mxu0 %v3375
        %3404 = vmatprep.subr.bf16.mxu0 0
        %3405 = vmatpush1.bf16.msra.mxu0 %v3376
        %3406 = vmatprep.subr.bf16.mxu0 0
        %3407 = vmatpush1.bf16.msra.mxu0 %v3377
        %3408 = vmatprep.subr.bf16.mxu0 0
        %3409 = vmatpush1.bf16.msra.mxu0 %v3378
        %3410 = vmatprep.subr.bf16.mxu0 0
        %3411 = vmatpush1.bf16.msra.mxu0 %v3379
        %3412 = vmatprep.subr.bf16.mxu0 0
        %3413 = vmatpush1.bf16.msra.mxu0 %v3380
        %3414 = vmatprep.subr.bf16.mxu0 0
        %3415 = vmatpush1.bf16.msra.mxu0 0
        %3416 = vmatprep.subr.bf16.mxu0 0
        %3417 = vmatpush1.bf16.msra.mxu0 0
        %3418 = vmatprep.subr.bf16.mxu0 0
        %3419 = vmatpush1.bf16.msra.mxu0 0
        %3420 = vmatprep.subr.bf16.mxu0 0
        %3421 = vmatpush1.bf16.msra.mxu0 0
        %3422 = vmatprep.subr.bf16.mxu0 0
        %3423 = vmatpush1.bf16.msra.mxu0 0
        %3424 = vmatprep.subr.bf16.mxu0 0
        %3425 = vmatpush1.bf16.msra.mxu0 0
        %3426 = vmatprep.mubr.bf16.mxu0 %v3392
        %3427 = vmatmul.mubr.bf16.gmra.mrb[0].mxu0 %v3308
        %v3428 = vpop.f32.mrb[0].mxu0
        %v3429 = vadd.f32 0.0, %v3428
        %v3430 = vpop.f32.mrb[0].mxu0
        %v3431 = vpop.f32.mrb[0].mxu0
        %v3432 = vadd.f32 0.0, %v3431
        %v3433 = vpop.f32.mrb[0].mxu0
        %3434 = vdwg.mxu0
        %v3455 = vunpack.c.l.b16 %v3288
        %v3456 = vunpack.c.l.b16 %v3289
        %v3457 = vunpack.c.l.b16 %v3290
        %v3458 = vunpack.c.l.b16 %v3291
        %v3459 = vunpack.c.l.b16 %v3292
        %v3460 = vunpack.c.l.b16 %v3293
        %v3461 = vunpack.c.l.b16 %v3294
        %v3462 = vunpack.c.l.b16 %v3295
        %v3463 = vunpack.c.l.b16 %v3296
        %v3464 = vunpack.c.l.b16 %v3297
        %v3465 = vunpack.c.l.b16 %v3298
        %v3466 = vunpack.c.l.b16 %v3299
        %v3467 = vunpack.c.l.b16 %v3300
        %v3468 = vunpack.c.l.b16 %v3301
        %v3469 = vunpack.c.l.b16 %v3302
        %v3470 = vunpack.c.l.b16 %v3303
        %v3471 = vunpack.c.l.b16 %v3304
        %v3472 = vunpack.c.l.b16 %v3305
        %v3473 = vunpack.c.l.b16 %v3306
        %v3474 = vunpack.c.l.b16 %v3307
        %v3475 = vpack.c.b16 %v3456, %v3455
        %v3476 = vpack.c.b16 %v3458, %v3457
        %v3477 = vpack.c.b16 %v3460, %v3459
        %v3478 = vpack.c.b16 %v3462, %v3461
        %v3479 = vpack.c.b16 %v3464, %v3463
        %v3480 = vpack.c.b16 %v3466, %v3465
        %v3481 = vpack.c.b16 %v3468, %v3467
        %v3482 = vpack.c.b16 %v3470, %v3469
        %v3483 = vpack.c.b16 %v3472, %v3471
        %v3484 = vpack.c.b16 %v3474, %v3473
        %v3496 = vsel %vm624, %v3287, 0
        %3498 = vmatprep.subr.bf16.mxu0 0
        %3499 = vmatpush1.bf16.msra.mxu0 %v3475
        %3500 = vmatprep.subr.bf16.mxu0 0
        %3501 = vmatpush1.bf16.msra.mxu0 %v3476
        %3502 = vmatprep.subr.bf16.mxu0 0
        %3503 = vmatpush1.bf16.msra.mxu0 %v3477
        %3504 = vmatprep.subr.bf16.mxu0 0
        %3505 = vmatpush1.bf16.msra.mxu0 %v3478
        %3506 = vmatprep.subr.bf16.mxu0 0
        %3507 = vmatpush1.bf16.msra.mxu0 %v3479
        %3508 = vmatprep.subr.bf16.mxu0 0
        %3509 = vmatpush1.bf16.msra.mxu0 %v3480
        %3510 = vmatprep.subr.bf16.mxu0 0
        %3511 = vmatpush1.bf16.msra.mxu0 %v3481
        %3512 = vmatprep.subr.bf16.mxu0 0
        %3513 = vmatpush1.bf16.msra.mxu0 %v3482
        %3514 = vmatprep.subr.bf16.mxu0 0
        %3515 = vmatpush1.bf16.msra.mxu0 %v3483
        %3516 = vmatprep.subr.bf16.mxu0 0
        %3517 = vmatpush1.bf16.msra.mxu0 %v3484
        %3518 = vmatprep.subr.bf16.mxu0 0
        %3519 = vmatpush1.bf16.msra.mxu0 0
        %3520 = vmatprep.subr.bf16.mxu0 0
        %3521 = vmatpush1.bf16.msra.mxu0 0
        %3522 = vmatprep.subr.bf16.mxu0 0
        %3523 = vmatpush1.bf16.msra.mxu0 0
        %3524 = vmatprep.subr.bf16.mxu0 0
        %3525 = vmatpush1.bf16.msra.mxu0 0
        %3526 = vmatprep.subr.bf16.mxu0 0
        %3527 = vmatpush1.bf16.msra.mxu0 0
        %3528 = vmatprep.subr.bf16.mxu0 0
        %3529 = vmatpush1.bf16.msra.mxu0 0
        %3530 = vmatprep.mubr.bf16.mxu0 %v3496
        %3531 = vmatmul.mubr.bf16.gmra.mrb[0].mxu0 %v3286
        %v3532 = vpop.f32.mrb[0].mxu0
        %v3533 = vadd.f32 %v3429, %v3532
        %v3534 = vpop.f32.mrb[0].mxu0
        %v3535 = vpop.f32.mrb[0].mxu0
        %v3536 = vadd.f32 %v3432, %v3535
        %v3537 = vpop.f32.mrb[0].mxu0
        %3538 = vdwg.mxu0
        %v3539 = vld [vmem:[%s1196] sm:$0xff]
        %v3540 = vld [vmem:[%s1196 + $0x8] sm:$0xff]
        %s3541 = scalar_lea.vmem [#allocation6], 160
        %v3542 = vld [vmem:[%s3541] sm:$0xf]
        %v3543 = vld [vmem:[%s3541 + $0x4] sm:$0xf]
        %v3544 = vld [vmem:[%s3541 + $0x8] sm:$0xf]
        %v3545 = vld [vmem:[%s3541 + $0xc] sm:$0xf]
        %v3546 = vld [vmem:[%s3541 + $0x10] sm:$0xf]
        %v3547 = vld [vmem:[%s3541 + $0x14] sm:$0xf]
        %v3548 = vld [vmem:[%s3541 + $0x18] sm:$0xf]
        %v3549 = vld [vmem:[%s3541 + $0x1c] sm:$0xf]
        %v3550 = vld [vmem:[%s3541 + $0x20] sm:$0xf]
        %v3551 = vld [vmem:[%s3541 + $0x24] sm:$0xf]
        %v3552 = vld [vmem:[%s3541 + $0x28] sm:$0xf]
        %v3553 = vld [vmem:[%s3541 + $0x2c] sm:$0xf]
        %v3554 = vld [vmem:[%s3541 + $0x30] sm:$0xf]
        %v3555 = vld [vmem:[%s3541 + $0x34] sm:$0xf]
        %v3556 = vld [vmem:[%s3541 + $0x38] sm:$0xf]
        %v3557 = vld [vmem:[%s3541 + $0x3c] sm:$0xf]
        %v3558 = vld [vmem:[%s3541 + $0x40] sm:$0xf]
        %v3559 = vld [vmem:[%s3541 + $0x44] sm:$0xf]
        %v3560 = vld [vmem:[%s3541 + $0x48] sm:$0xf]
        %v3561 = vld [vmem:[%s3541 + $0x4c] sm:$0xf]
        %v3582 = vunpack.c.l.b16 %v3542
        %v3583 = vunpack.c.l.b16 %v3543
        %v3584 = vunpack.c.l.b16 %v3544
        %v3585 = vunpack.c.l.b16 %v3545
        %v3586 = vunpack.c.l.b16 %v3546
        %v3587 = vunpack.c.l.b16 %v3547
        %v3588 = vunpack.c.l.b16 %v3548
        %v3589 = vunpack.c.l.b16 %v3549
        %v3590 = vunpack.c.l.b16 %v3550
        %v3591 = vunpack.c.l.b16 %v3551
        %v3592 = vunpack.c.l.b16 %v3552
        %v3593 = vunpack.c.l.b16 %v3553
        %v3594 = vunpack.c.l.b16 %v3554
        %v3595 = vunpack.c.l.b16 %v3555
        %v3596 = vunpack.c.l.b16 %v3556
        %v3597 = vunpack.c.l.b16 %v3557
        %v3598 = vunpack.c.l.b16 %v3558
        %v3599 = vunpack.c.l.b16 %v3559
        %v3600 = vunpack.c.l.b16 %v3560
        %v3601 = vunpack.c.l.b16 %v3561
        %v3602 = vpack.c.b16 %v3583, %v3582
        %v3603 = vpack.c.b16 %v3585, %v3584
        %v3604 = vpack.c.b16 %v3587, %v3586
        %v3605 = vpack.c.b16 %v3589, %v3588
        %v3606 = vpack.c.b16 %v3591, %v3590
        %v3607 = vpack.c.b16 %v3593, %v3592
        %v3608 = vpack.c.b16 %v3595, %v3594
        %v3609 = vpack.c.b16 %v3597, %v3596
        %v3610 = vpack.c.b16 %v3599, %v3598
        %v3611 = vpack.c.b16 %v3601, %v3600
        %v3623 = vsel %vm624, %v3540, 0
        %3625 = vmatprep.subr.bf16.mxu0 0
        %3626 = vmatpush1.bf16.msra.mxu0 %v3602
        %3627 = vmatprep.subr.bf16.mxu0 0
        %3628 = vmatpush1.bf16.msra.mxu0 %v3603
        %3629 = vmatprep.subr.bf16.mxu0 0
        %3630 = vmatpush1.bf16.msra.mxu0 %v3604
        %3631 = vmatprep.subr.bf16.mxu0 0
        %3632 = vmatpush1.bf16.msra.mxu0 %v3605
        %3633 = vmatprep.subr.bf16.mxu0 0
        %3634 = vmatpush1.bf16.msra.mxu0 %v3606
        %3635 = vmatprep.subr.bf16.mxu0 0
        %3636 = vmatpush1.bf16.msra.mxu0 %v3607
        %3637 = vmatprep.subr.bf16.mxu0 0
        %3638 = vmatpush1.bf16.msra.mxu0 %v3608
        %3639 = vmatprep.subr.bf16.mxu0 0
        %3640 = vmatpush1.bf16.msra.mxu0 %v3609
        %3641 = vmatprep.subr.bf16.mxu0 0
        %3642 = vmatpush1.bf16.msra.mxu0 %v3610
        %3643 = vmatprep.subr.bf16.mxu0 0
        %3644 = vmatpush1.bf16.msra.mxu0 %v3611
        %3645 = vmatprep.subr.bf16.mxu0 0
        %3646 = vmatpush1.bf16.msra.mxu0 0
        %3647 = vmatprep.subr.bf16.mxu0 0
        %3648 = vmatpush1.bf16.msra.mxu0 0
        %3649 = vmatprep.subr.bf16.mxu0 0
        %3650 = vmatpush1.bf16.msra.mxu0 0
        %3651 = vmatprep.subr.bf16.mxu0 0
        %3652 = vmatpush1.bf16.msra.mxu0 0
        %3653 = vmatprep.subr.bf16.mxu0 0
        %3654 = vmatpush1.bf16.msra.mxu0 0
        %3655 = vmatprep.subr.bf16.mxu0 0
        %3656 = vmatpush1.bf16.msra.mxu0 0
        %3657 = vmatprep.mubr.bf16.mxu0 %v3623
        %3658 = vmatmul.mubr.bf16.gmra.mrb[0].mxu0 %v3539
        %v3659 = vpop.f32.mrb[0].mxu0
        %v3660 = vadd.f32 0.0, %v3659
        %v3661 = vpop.f32.mrb[0].mxu0
        %v3662 = vpop.f32.mrb[0].mxu0
        %v3663 = vadd.f32 0.0, %v3662
        %v3664 = vpop.f32.mrb[0].mxu0
        %3665 = vdwg.mxu0
        %v3666 = vadd.f32 %v3533, %v3660
        %v3667 = vadd.f32 %v3536, %v3663
        %v3668 = vld [vmem:[%s1315] sm:$0xff]
        %v3669 = vld [vmem:[%s1315 + $0x8] sm:$0xff]
        %s3670 = scalar_lea.vmem [#allocation6], 240
        %v3671 = vld [vmem:[%s3670] sm:$0xf]
        %v3672 = vld [vmem:[%s3670 + $0x4] sm:$0xf]
        %v3673 = vld [vmem:[%s3670 + $0x8] sm:$0xf]
        %v3674 = vld [vmem:[%s3670 + $0xc] sm:$0xf]
        %v3675 = vld [vmem:[%s3670 + $0x10] sm:$0xf]
        %v3676 = vld [vmem:[%s3670 + $0x14] sm:$0xf]
        %v3677 = vld [vmem:[%s3670 + $0x18] sm:$0xf]
        %v3678 = vld [vmem:[%s3670 + $0x1c] sm:$0xf]
        %v3679 = vld [vmem:[%s3670 + $0x20] sm:$0xf]
        %v3680 = vld [vmem:[%s3670 + $0x24] sm:$0xf]
        %v3681 = vld [vmem:[%s3670 + $0x28] sm:$0xf]
        %v3682 = vld [vmem:[%s3670 + $0x2c] sm:$0xf]
        %v3683 = vld [vmem:[%s3670 + $0x30] sm:$0xf]
        %v3684 = vld [vmem:[%s3670 + $0x34] sm:$0xf]
        %v3685 = vld [vmem:[%s3670 + $0x38] sm:$0xf]
        %v3686 = vld [vmem:[%s3670 + $0x3c] sm:$0xf]
        %v3687 = vld [vmem:[%s3670 + $0x40] sm:$0xf]
        %v3688 = vld [vmem:[%s3670 + $0x44] sm:$0xf]
        %v3689 = vld [vmem:[%s3670 + $0x48] sm:$0xf]
        %v3690 = vld [vmem:[%s3670 + $0x4c] sm:$0xf]
        %v3711 = vunpack.c.l.b16 %v3671
        %v3712 = vunpack.c.l.b16 %v3672
        %v3713 = vunpack.c.l.b16 %v3673
        %v3714 = vunpack.c.l.b16 %v3674
        %v3715 = vunpack.c.l.b16 %v3675
        %v3716 = vunpack.c.l.b16 %v3676
        %v3717 = vunpack.c.l.b16 %v3677
        %v3718 = vunpack.c.l.b16 %v3678
        %v3719 = vunpack.c.l.b16 %v3679
        %v3720 = vunpack.c.l.b16 %v3680
        %v3721 = vunpack.c.l.b16 %v3681
        %v3722 = vunpack.c.l.b16 %v3682
        %v3723 = vunpack.c.l.b16 %v3683
        %v3724 = vunpack.c.l.b16 %v3684
        %v3725 = vunpack.c.l.b16 %v3685
        %v3726 = vunpack.c.l.b16 %v3686
        %v3727 = vunpack.c.l.b16 %v3687
        %v3728 = vunpack.c.l.b16 %v3688
        %v3729 = vunpack.c.l.b16 %v3689
        %v3730 = vunpack.c.l.b16 %v3690
        %v3731 = vpack.c.b16 %v3712, %v3711
        %v3732 = vpack.c.b16 %v3714, %v3713
        %v3733 = vpack.c.b16 %v3716, %v3715
        %v3734 = vpack.c.b16 %v3718, %v3717
        %v3735 = vpack.c.b16 %v3720, %v3719
        %v3736 = vpack.c.b16 %v3722, %v3721
        %v3737 = vpack.c.b16 %v3724, %v3723
        %v3738 = vpack.c.b16 %v3726, %v3725
        %v3739 = vpack.c.b16 %v3728, %v3727
        %v3740 = vpack.c.b16 %v3730, %v3729
        %v3752 = vsel %vm624, %v3669, 0
        %3754 = vmatprep.subr.bf16.mxu0 0
        %3755 = vmatpush1.bf16.msra.mxu0 %v3731
        %3756 = vmatprep.subr.bf16.mxu0 0
        %3757 = vmatpush1.bf16.msra.mxu0 %v3732
        %3758 = vmatprep.subr.bf16.mxu0 0
        %3759 = vmatpush1.bf16.msra.mxu0 %v3733
        %3760 = vmatprep.subr.bf16.mxu0 0
        %3761 = vmatpush1.bf16.msra.mxu0 %v3734
        %3762 = vmatprep.subr.bf16.mxu0 0
        %3763 = vmatpush1.bf16.msra.mxu0 %v3735
        %3764 = vmatprep.subr.bf16.mxu0 0
        %3765 = vmatpush1.bf16.msra.mxu0 %v3736
        %3766 = vmatprep.subr.bf16.mxu0 0
        %3767 = vmatpush1.bf16.msra.mxu0 %v3737
        %3768 = vmatprep.subr.bf16.mxu0 0
        %3769 = vmatpush1.bf16.msra.mxu0 %v3738
        %3770 = vmatprep.subr.bf16.mxu0 0
        %3771 = vmatpush1.bf16.msra.mxu0 %v3739
        %3772 = vmatprep.subr.bf16.mxu0 0
        %3773 = vmatpush1.bf16.msra.mxu0 %v3740
        %3774 = vmatprep.subr.bf16.mxu0 0
        %3775 = vmatpush1.bf16.msra.mxu0 0
        %3776 = vmatprep.subr.bf16.mxu0 0
        %3777 = vmatpush1.bf16.msra.mxu0 0
        %3778 = vmatprep.subr.bf16.mxu0 0
        %3779 = vmatpush1.bf16.msra.mxu0 0
        %3780 = vmatprep.subr.bf16.mxu0 0
        %3781 = vmatpush1.bf16.msra.mxu0 0
        %3782 = vmatprep.subr.bf16.mxu0 0
        %3783 = vmatpush1.bf16.msra.mxu0 0
        %3784 = vmatprep.subr.bf16.mxu0 0
        %3785 = vmatpush1.bf16.msra.mxu0 0
        %3786 = vmatprep.mubr.bf16.mxu0 %v3752
        %3787 = vmatmul.mubr.bf16.gmra.mrb[0].mxu0 %v3668
        %v3788 = vpop.f32.mrb[0].mxu0
        %v3789 = vadd.f32 0.0, %v3788
        %v3790 = vpop.f32.mrb[0].mxu0
        %v3791 = vpop.f32.mrb[0].mxu0
        %v3792 = vadd.f32 0.0, %v3791
        %v3793 = vpop.f32.mrb[0].mxu0
        %3794 = vdwg.mxu0
        %v3795 = vadd.f32 %v3666, %v3789
        %v3796 = vadd.f32 %v3667, %v3792
        %v3797 = vld [vmem:[%s1688] sm:$0xff]
        %v3798 = vld [vmem:[%s1688 + $0x8] sm:$0xff]
        %s3799 = scalar_lea.vmem [#allocation6], 320
        %v3800 = vld [vmem:[%s3799] sm:$0xf]
        %v3801 = vld [vmem:[%s3799 + $0x4] sm:$0xf]
        %v3802 = vld [vmem:[%s3799 + $0x8] sm:$0xf]
        %v3803 = vld [vmem:[%s3799 + $0xc] sm:$0xf]
        %v3804 = vld [vmem:[%s3799 + $0x10] sm:$0xf]
        %v3805 = vld [vmem:[%s3799 + $0x14] sm:$0xf]
        %v3806 = vld [vmem:[%s3799 + $0x18] sm:$0xf]
        %v3807 = vld [vmem:[%s3799 + $0x1c] sm:$0xf]
        %v3808 = vld [vmem:[%s3799 + $0x20] sm:$0xf]
        %v3809 = vld [vmem:[%s3799 + $0x24] sm:$0xf]
        %v3810 = vld [vmem:[%s3799 + $0x28] sm:$0xf]
        %v3811 = vld [vmem:[%s3799 + $0x2c] sm:$0xf]
        %v3812 = vld [vmem:[%s3799 + $0x30] sm:$0xf]
        %v3813 = vld [vmem:[%s3799 + $0x34] sm:$0xf]
        %v3814 = vld [vmem:[%s3799 + $0x38] sm:$0xf]
        %v3815 = vld [vmem:[%s3799 + $0x3c] sm:$0xf]
        %v3816 = vld [vmem:[%s3799 + $0x40] sm:$0xf]
        %v3817 = vld [vmem:[%s3799 + $0x44] sm:$0xf]
        %v3818 = vld [vmem:[%s3799 + $0x48] sm:$0xf]
        %v3819 = vld [vmem:[%s3799 + $0x4c] sm:$0xf]
        %v3840 = vunpack.c.l.b16 %v3800
        %v3841 = vunpack.c.l.b16 %v3801
        %v3842 = vunpack.c.l.b16 %v3802
        %v3843 = vunpack.c.l.b16 %v3803
        %v3844 = vunpack.c.l.b16 %v3804
        %v3845 = vunpack.c.l.b16 %v3805
        %v3846 = vunpack.c.l.b16 %v3806
        %v3847 = vunpack.c.l.b16 %v3807
        %v3848 = vunpack.c.l.b16 %v3808
        %v3849 = vunpack.c.l.b16 %v3809
        %v3850 = vunpack.c.l.b16 %v3810
        %v3851 = vunpack.c.l.b16 %v3811
        %v3852 = vunpack.c.l.b16 %v3812
        %v3853 = vunpack.c.l.b16 %v3813
        %v3854 = vunpack.c.l.b16 %v3814
        %v3855 = vunpack.c.l.b16 %v3815
        %v3856 = vunpack.c.l.b16 %v3816
        %v3857 = vunpack.c.l.b16 %v3817
        %v3858 = vunpack.c.l.b16 %v3818
        %v3859 = vunpack.c.l.b16 %v3819
        %v3860 = vpack.c.b16 %v3841, %v3840
        %v3861 = vpack.c.b16 %v3843, %v3842
        %v3862 = vpack.c.b16 %v3845, %v3844
        %v3863 = vpack.c.b16 %v3847, %v3846
        %v3864 = vpack.c.b16 %v3849, %v3848
        %v3865 = vpack.c.b16 %v3851, %v3850
        %v3866 = vpack.c.b16 %v3853, %v3852
        %v3867 = vpack.c.b16 %v3855, %v3854
        %v3868 = vpack.c.b16 %v3857, %v3856
        %v3869 = vpack.c.b16 %v3859, %v3858
        %v3881 = vsel %vm624, %v3798, 0
        %3883 = vmatprep.subr.bf16.mxu0 0
        %3884 = vmatpush1.bf16.msra.mxu0 %v3860
        %3885 = vmatprep.subr.bf16.mxu0 0
        %3886 = vmatpush1.bf16.msra.mxu0 %v3861
        %3887 = vmatprep.subr.bf16.mxu0 0
        %3888 = vmatpush1.bf16.msra.mxu0 %v3862
        %3889 = vmatprep.subr.bf16.mxu0 0
        %3890 = vmatpush1.bf16.msra.mxu0 %v3863
        %3891 = vmatprep.subr.bf16.mxu0 0
        %3892 = vmatpush1.bf16.msra.mxu0 %v3864
        %3893 = vmatprep.subr.bf16.mxu0 0
        %3894 = vmatpush1.bf16.msra.mxu0 %v3865
        %3895 = vmatprep.subr.bf16.mxu0 0
        %3896 = vmatpush1.bf16.msra.mxu0 %v3866
        %3897 = vmatprep.subr.bf16.mxu0 0
        %3898 = vmatpush1.bf16.msra.mxu0 %v3867
        %3899 = vmatprep.subr.bf16.mxu0 0
        %3900 = vmatpush1.bf16.msra.mxu0 %v3868
        %3901 = vmatprep.subr.bf16.mxu0 0
        %3902 = vmatpush1.bf16.msra.mxu0 %v3869
        %3903 = vmatprep.subr.bf16.mxu0 0
        %3904 = vmatpush1.bf16.msra.mxu0 0
        %3905 = vmatprep.subr.bf16.mxu0 0
        %3906 = vmatpush1.bf16.msra.mxu0 0
        %3907 = vmatprep.subr.bf16.mxu0 0
        %3908 = vmatpush1.bf16.msra.mxu0 0
        %3909 = vmatprep.subr.bf16.mxu0 0
        %3910 = vmatpush1.bf16.msra.mxu0 0
        %3911 = vmatprep.subr.bf16.mxu0 0
        %3912 = vmatpush1.bf16.msra.mxu0 0
        %3913 = vmatprep.subr.bf16.mxu0 0
        %3914 = vmatpush1.bf16.msra.mxu0 0
        %3915 = vmatprep.mubr.bf16.mxu0 %v3881
        %3916 = vmatmul.mubr.bf16.gmra.mrb[0].mxu0 %v3797
        %v3917 = vpop.f32.mrb[0].mxu0
        %v3918 = vadd.f32 0.0, %v3917
        %v3919 = vpop.f32.mrb[0].mxu0
        %v3920 = vpop.f32.mrb[0].mxu0
        %v3921 = vadd.f32 0.0, %v3920
        %v3922 = vpop.f32.mrb[0].mxu0
        %3923 = vdwg.mxu0
        %v3924 = vadd.f32 %v3795, %v3918
        %v3925 = vadd.f32 %v3796, %v3921
        %v3926 = vld [vmem:[%s1807] sm:$0xff]
        %v3927 = vld [vmem:[%s1807 + $0x8] sm:$0xff]
        %s3928 = scalar_lea.vmem [#allocation6], 400
        %v3929 = vld [vmem:[%s3928] sm:$0xf]
        %v3930 = vld [vmem:[%s3928 + $0x4] sm:$0xf]
        %v3931 = vld [vmem:[%s3928 + $0x8] sm:$0xf]
        %v3932 = vld [vmem:[%s3928 + $0xc] sm:$0xf]
        %v3933 = vld [vmem:[%s3928 + $0x10] sm:$0xf]
        %v3934 = vld [vmem:[%s3928 + $0x14] sm:$0xf]
        %v3935 = vld [vmem:[%s3928 + $0x18] sm:$0xf]
        %v3936 = vld [vmem:[%s3928 + $0x1c] sm:$0xf]
        %v3937 = vld [vmem:[%s3928 + $0x20] sm:$0xf]
        %v3938 = vld [vmem:[%s3928 + $0x24] sm:$0xf]
        %v3939 = vld [vmem:[%s3928 + $0x28] sm:$0xf]
        %v3940 = vld [vmem:[%s3928 + $0x2c] sm:$0xf]
        %v3941 = vld [vmem:[%s3928 + $0x30] sm:$0xf]
        %v3942 = vld [vmem:[%s3928 + $0x34] sm:$0xf]
        %v3943 = vld [vmem:[%s3928 + $0x38] sm:$0xf]
        %v3944 = vld [vmem:[%s3928 + $0x3c] sm:$0xf]
        %v3945 = vld [vmem:[%s3928 + $0x40] sm:$0xf]
        %v3946 = vld [vmem:[%s3928 + $0x44] sm:$0xf]
        %v3947 = vld [vmem:[%s3928 + $0x48] sm:$0xf]
        %v3948 = vld [vmem:[%s3928 + $0x4c] sm:$0xf]
        %v3969 = vunpack.c.l.b16 %v3929
        %v3970 = vunpack.c.l.b16 %v3930
        %v3971 = vunpack.c.l.b16 %v3931
        %v3972 = vunpack.c.l.b16 %v3932
        %v3973 = vunpack.c.l.b16 %v3933
        %v3974 = vunpack.c.l.b16 %v3934
        %v3975 = vunpack.c.l.b16 %v3935
        %v3976 = vunpack.c.l.b16 %v3936
        %v3977 = vunpack.c.l.b16 %v3937
        %v3978 = vunpack.c.l.b16 %v3938
        %v3979 = vunpack.c.l.b16 %v3939
        %v3980 = vunpack.c.l.b16 %v3940
        %v3981 = vunpack.c.l.b16 %v3941
        %v3982 = vunpack.c.l.b16 %v3942
        %v3983 = vunpack.c.l.b16 %v3943
        %v3984 = vunpack.c.l.b16 %v3944
        %v3985 = vunpack.c.l.b16 %v3945
        %v3986 = vunpack.c.l.b16 %v3946
        %v3987 = vunpack.c.l.b16 %v3947
        %v3988 = vunpack.c.l.b16 %v3948
        %v3989 = vpack.c.b16 %v3970, %v3969
        %v3990 = vpack.c.b16 %v3972, %v3971
        %v3991 = vpack.c.b16 %v3974, %v3973
        %v3992 = vpack.c.b16 %v3976, %v3975
        %v3993 = vpack.c.b16 %v3978, %v3977
        %v3994 = vpack.c.b16 %v3980, %v3979
        %v3995 = vpack.c.b16 %v3982, %v3981
        %v3996 = vpack.c.b16 %v3984, %v3983
        %v3997 = vpack.c.b16 %v3986, %v3985
        %v3998 = vpack.c.b16 %v3988, %v3987
        %v4010 = vsel %vm624, %v3927, 0
        %4012 = vmatprep.subr.bf16.mxu0 0
        %4013 = vmatpush1.bf16.msra.mxu0 %v3989
        %4014 = vmatprep.subr.bf16.mxu0 0
        %4015 = vmatpush1.bf16.msra.mxu0 %v3990
        %4016 = vmatprep.subr.bf16.mxu0 0
        %4017 = vmatpush1.bf16.msra.mxu0 %v3991
        %4018 = vmatprep.subr.bf16.mxu0 0
        %4019 = vmatpush1.bf16.msra.mxu0 %v3992
        %4020 = vmatprep.subr.bf16.mxu0 0
        %4021 = vmatpush1.bf16.msra.mxu0 %v3993
        %4022 = vmatprep.subr.bf16.mxu0 0
        %4023 = vmatpush1.bf16.msra.mxu0 %v3994
        %4024 = vmatprep.subr.bf16.mxu0 0
        %4025 = vmatpush1.bf16.msra.mxu0 %v3995
        %4026 = vmatprep.subr.bf16.mxu0 0
        %4027 = vmatpush1.bf16.msra.mxu0 %v3996
        %4028 = vmatprep.subr.bf16.mxu0 0
        %4029 = vmatpush1.bf16.msra.mxu0 %v3997
        %4030 = vmatprep.subr.bf16.mxu0 0
        %4031 = vmatpush1.bf16.msra.mxu0 %v3998
        %4032 = vmatprep.subr.bf16.mxu0 0
        %4033 = vmatpush1.bf16.msra.mxu0 0
        %4034 = vmatprep.subr.bf16.mxu0 0
        %4035 = vmatpush1.bf16.msra.mxu0 0
        %4036 = vmatprep.subr.bf16.mxu0 0
        %4037 = vmatpush1.bf16.msra.mxu0 0
        %4038 = vmatprep.subr.bf16.mxu0 0
        %4039 = vmatpush1.bf16.msra.mxu0 0
        %4040 = vmatprep.subr.bf16.mxu0 0
        %4041 = vmatpush1.bf16.msra.mxu0 0
        %4042 = vmatprep.subr.bf16.mxu0 0
        %4043 = vmatpush1.bf16.msra.mxu0 0
        %4044 = vmatprep.mubr.bf16.mxu0 %v4010
        %4045 = vmatmul.mubr.bf16.gmra.mrb[0].mxu0 %v3926
        %v4046 = vpop.f32.mrb[0].mxu0
        %v4047 = vadd.f32 0.0, %v4046
        %v4048 = vpop.f32.mrb[0].mxu0
        %v4049 = vpop.f32.mrb[0].mxu0
        %v4050 = vadd.f32 0.0, %v4049
        %v4051 = vpop.f32.mrb[0].mxu0
        %4052 = vdwg.mxu0
        %v4053 = vadd.f32 %v3924, %v4047
        %v4054 = vadd.f32 %v3925, %v4050
        %4057 = vrot.lane.b32.xlu0 %v4053, 80
        %v4058 = vpop.permute.xlu0 %4057
        %4059 = vrot.lane.b32.xlu0 %v4054, 80
        %v4060 = vpop.permute.xlu0 %4059
        %v4063 = vmax.f32 %v4053, %v4058
        %v4064 = vmax.f32 %v4054, %v4060
        %v4067 = vrot.slane %v4063, 4
        %v4068 = vrot.slane %v4064, 4
        %v4071 = vmax.f32 %v4063, %v4067
        %v4072 = vmax.f32 %v4064, %v4068
        %v4073 = vadd.f32 %v4071, %v286
        %v4074 = vadd.f32 %v4072, %v286
        %v4075 = vmax.f32 %v4073, 0.0
        %v4076 = vmax.f32 %v4074, 0.0
        %4077 = vmatprep.subr.bf16.mxu0 0
        %4078 = vmatpush1.bf16.msra.mxu0 %v3371
        %4079 = vmatprep.subr.bf16.mxu0 0
        %4080 = vmatpush1.bf16.msra.mxu0 %v3372
        %4081 = vmatprep.subr.bf16.mxu0 0
        %4082 = vmatpush1.bf16.msra.mxu0 %v3373
        %4083 = vmatprep.subr.bf16.mxu0 0
        %4084 = vmatpush1.bf16.msra.mxu0 %v3374
        %4085 = vmatprep.subr.bf16.mxu0 0
        %4086 = vmatpush1.bf16.msra.mxu0 %v3375
        %4087 = vmatprep.subr.bf16.mxu0 0
        %4088 = vmatpush1.bf16.msra.mxu0 %v3376
        %4089 = vmatprep.subr.bf16.mxu0 0
        %4090 = vmatpush1.bf16.msra.mxu0 %v3377
        %4091 = vmatprep.subr.bf16.mxu0 0
        %4092 = vmatpush1.bf16.msra.mxu0 %v3378
        %4093 = vmatprep.subr.bf16.mxu0 0
        %4094 = vmatpush1.bf16.msra.mxu0 %v3379
        %4095 = vmatprep.subr.bf16.mxu0 0
        %4096 = vmatpush1.bf16.msra.mxu0 %v3380
        %4097 = vmatprep.subr.bf16.mxu0 0
        %4098 = vmatpush1.bf16.msra.mxu0 0
        %4099 = vmatprep.subr.bf16.mxu0 0
        %4100 = vmatpush1.bf16.msra.mxu0 0
        %4101 = vmatprep.subr.bf16.mxu0 0
        %4102 = vmatpush1.bf16.msra.mxu0 0
        %4103 = vmatprep.subr.bf16.mxu0 0
        %4104 = vmatpush1.bf16.msra.mxu0 0
        %4105 = vmatprep.subr.bf16.mxu0 0
        %4106 = vmatpush1.bf16.msra.mxu0 0
        %4107 = vmatprep.subr.bf16.mxu0 0
        %4108 = vmatpush1.bf16.msra.mxu0 0
        %4109 = vmatprep.mubr.bf16.mxu0 %v3752
        %4110 = vmatmul.mubr.bf16.gmra.mrb[0].mxu0 %v3668
        %v4111 = vpop.f32.mrb[0].mxu0
        %v4112 = vadd.f32 0.0, %v4111
        %v4113 = vpop.f32.mrb[0].mxu0
        %v4114 = vpop.f32.mrb[0].mxu0
        %v4115 = vadd.f32 0.0, %v4114
        %v4116 = vpop.f32.mrb[0].mxu0
        %4117 = vdwg.mxu0
        %4118 = vmatprep.subr.bf16.mxu0 0
        %4119 = vmatpush1.bf16.msra.mxu0 %v3475
        %4120 = vmatprep.subr.bf16.mxu0 0
        %4121 = vmatpush1.bf16.msra.mxu0 %v3476
        %4122 = vmatprep.subr.bf16.mxu0 0
        %4123 = vmatpush1.bf16.msra.mxu0 %v3477
        %4124 = vmatprep.subr.bf16.mxu0 0
        %4125 = vmatpush1.bf16.msra.mxu0 %v3478
        %4126 = vmatprep.subr.bf16.mxu0 0
        %4127 = vmatpush1.bf16.msra.mxu0 %v3479
        %4128 = vmatprep.subr.bf16.mxu0 0
        %4129 = vmatpush1.bf16.msra.mxu0 %v3480
        %4130 = vmatprep.subr.bf16.mxu0 0
        %4131 = vmatpush1.bf16.msra.mxu0 %v3481
        %4132 = vmatprep.subr.bf16.mxu0 0
        %4133 = vmatpush1.bf16.msra.mxu0 %v3482
        %4134 = vmatprep.subr.bf16.mxu0 0
        %4135 = vmatpush1.bf16.msra.mxu0 %v3483
        %4136 = vmatprep.subr.bf16.mxu0 0
        %4137 = vmatpush1.bf16.msra.mxu0 %v3484
        %4138 = vmatprep.subr.bf16.mxu0 0
        %4139 = vmatpush1.bf16.msra.mxu0 0
        %4140 = vmatprep.subr.bf16.mxu0 0
        %4141 = vmatpush1.bf16.msra.mxu0 0
        %4142 = vmatprep.subr.bf16.mxu0 0
        %4143 = vmatpush1.bf16.msra.mxu0 0
        %4144 = vmatprep.subr.bf16.mxu0 0
        %4145 = vmatpush1.bf16.msra.mxu0 0
        %4146 = vmatprep.subr.bf16.mxu0 0
        %4147 = vmatpush1.bf16.msra.mxu0 0
        %4148 = vmatprep.subr.bf16.mxu0 0
        %4149 = vmatpush1.bf16.msra.mxu0 0
        %4150 = vmatprep.mubr.bf16.mxu0 %v3623
        %4151 = vmatmul.mubr.bf16.gmra.mrb[0].mxu0 %v3539
        %v4152 = vpop.f32.mrb[0].mxu0
        %v4153 = vadd.f32 %v4112, %v4152
        %v4154 = vpop.f32.mrb[0].mxu0
        %v4155 = vpop.f32.mrb[0].mxu0
        %v4156 = vadd.f32 %v4115, %v4155
        %v4157 = vpop.f32.mrb[0].mxu0
        %4158 = vdwg.mxu0
        %4159 = vmatprep.subr.bf16.mxu0 0
        %4160 = vmatpush1.bf16.msra.mxu0 %v3602
        %4161 = vmatprep.subr.bf16.mxu0 0
        %4162 = vmatpush1.bf16.msra.mxu0 %v3603
        %4163 = vmatprep.subr.bf16.mxu0 0
        %4164 = vmatpush1.bf16.msra.mxu0 %v3604
        %4165 = vmatprep.subr.bf16.mxu0 0
        %4166 = vmatpush1.bf16.msra.mxu0 %v3605
        %4167 = vmatprep.subr.bf16.mxu0 0
        %4168 = vmatpush1.bf16.msra.mxu0 %v3606
        %4169 = vmatprep.subr.bf16.mxu0 0
        %4170 = vmatpush1.bf16.msra.mxu0 %v3607
        %4171 = vmatprep.subr.bf16.mxu0 0
        %4172 = vmatpush1.bf16.msra.mxu0 %v3608
        %4173 = vmatprep.subr.bf16.mxu0 0
        %4174 = vmatpush1.bf16.msra.mxu0 %v3609
        %4175 = vmatprep.subr.bf16.mxu0 0
        %4176 = vmatpush1.bf16.msra.mxu0 %v3610
        %4177 = vmatprep.subr.bf16.mxu0 0
        %4178 = vmatpush1.bf16.msra.mxu0 %v3611
        %4179 = vmatprep.subr.bf16.mxu0 0
        %4180 = vmatpush1.bf16.msra.mxu0 0
        %4181 = vmatprep.subr.bf16.mxu0 0
        %4182 = vmatpush1.bf16.msra.mxu0 0
        %4183 = vmatprep.subr.bf16.mxu0 0
        %4184 = vmatpush1.bf16.msra.mxu0 0
        %4185 = vmatprep.subr.bf16.mxu0 0
        %4186 = vmatpush1.bf16.msra.mxu0 0
        %4187 = vmatprep.subr.bf16.mxu0 0
        %4188 = vmatpush1.bf16.msra.mxu0 0
        %4189 = vmatprep.subr.bf16.mxu0 0
        %4190 = vmatpush1.bf16.msra.mxu0 0
        %4191 = vmatprep.mubr.bf16.mxu0 %v3881
        %4192 = vmatmul.mubr.bf16.gmra.mrb[0].mxu0 %v3797
        %v4193 = vpop.f32.mrb[0].mxu0
        %v4194 = vadd.f32 0.0, %v4193
        %v4195 = vpop.f32.mrb[0].mxu0
        %v4196 = vpop.f32.mrb[0].mxu0
        %v4197 = vadd.f32 0.0, %v4196
        %v4198 = vpop.f32.mrb[0].mxu0
        %4199 = vdwg.mxu0
        %v4200 = vadd.f32 %v4153, %v4194
        %v4201 = vadd.f32 %v4156, %v4197
        %4202 = vmatprep.subr.bf16.mxu0 0
        %4203 = vmatpush1.bf16.msra.mxu0 %v3731
        %4204 = vmatprep.subr.bf16.mxu0 0
        %4205 = vmatpush1.bf16.msra.mxu0 %v3732
        %4206 = vmatprep.subr.bf16.mxu0 0
        %4207 = vmatpush1.bf16.msra.mxu0 %v3733
        %4208 = vmatprep.subr.bf16.mxu0 0
        %4209 = vmatpush1.bf16.msra.mxu0 %v3734
        %4210 = vmatprep.subr.bf16.mxu0 0
        %4211 = vmatpush1.bf16.msra.mxu0 %v3735
        %4212 = vmatprep.subr.bf16.mxu0 0
        %4213 = vmatpush1.bf16.msra.mxu0 %v3736
        %4214 = vmatprep.subr.bf16.mxu0 0
        %4215 = vmatpush1.bf16.msra.mxu0 %v3737
        %4216 = vmatprep.subr.bf16.mxu0 0
        %4217 = vmatpush1.bf16.msra.mxu0 %v3738
        %4218 = vmatprep.subr.bf16.mxu0 0
        %4219 = vmatpush1.bf16.msra.mxu0 %v3739
        %4220 = vmatprep.subr.bf16.mxu0 0
        %4221 = vmatpush1.bf16.msra.mxu0 %v3740
        %4222 = vmatprep.subr.bf16.mxu0 0
        %4223 = vmatpush1.bf16.msra.mxu0 0
        %4224 = vmatprep.subr.bf16.mxu0 0
        %4225 = vmatpush1.bf16.msra.mxu0 0
        %4226 = vmatprep.subr.bf16.mxu0 0
        %4227 = vmatpush1.bf16.msra.mxu0 0
        %4228 = vmatprep.subr.bf16.mxu0 0
        %4229 = vmatpush1.bf16.msra.mxu0 0
        %4230 = vmatprep.subr.bf16.mxu0 0
        %4231 = vmatpush1.bf16.msra.mxu0 0
        %4232 = vmatprep.subr.bf16.mxu0 0
        %4233 = vmatpush1.bf16.msra.mxu0 0
        %4234 = vmatprep.mubr.bf16.mxu0 %v4010
        %4235 = vmatmul.mubr.bf16.gmra.mrb[0].mxu0 %v3926
        %v4236 = vpop.f32.mrb[0].mxu0
        %v4237 = vadd.f32 0.0, %v4236
        %v4238 = vpop.f32.mrb[0].mxu0
        %v4239 = vpop.f32.mrb[0].mxu0
        %v4240 = vadd.f32 0.0, %v4239
        %v4241 = vpop.f32.mrb[0].mxu0
        %4242 = vdwg.mxu0
        %v4243 = vadd.f32 %v4200, %v4237
        %v4244 = vadd.f32 %v4201, %v4240
        %v4245 = vld [vmem:[%s2180] sm:$0xff]
        %v4246 = vld [vmem:[%s2180 + $0x8] sm:$0xff]
        %v4248 = vsel %vm624, %v4246, 0
        %4250 = vmatprep.subr.bf16.mxu0 0
        %4251 = vmatpush1.bf16.msra.mxu0 %v3860
        %4252 = vmatprep.subr.bf16.mxu0 0
        %4253 = vmatpush1.bf16.msra.mxu0 %v3861
        %4254 = vmatprep.subr.bf16.mxu0 0
        %4255 = vmatpush1.bf16.msra.mxu0 %v3862
        %4256 = vmatprep.subr.bf16.mxu0 0
        %4257 = vmatpush1.bf16.msra.mxu0 %v3863
        %4258 = vmatprep.subr.bf16.mxu0 0
        %4259 = vmatpush1.bf16.msra.mxu0 %v3864
        %4260 = vmatprep.subr.bf16.mxu0 0
        %4261 = vmatpush1.bf16.msra.mxu0 %v3865
        %4262 = vmatprep.subr.bf16.mxu0 0
        %4263 = vmatpush1.bf16.msra.mxu0 %v3866
        %4264 = vmatprep.subr.bf16.mxu0 0
        %4265 = vmatpush1.bf16.msra.mxu0 %v3867
        %4266 = vmatprep.subr.bf16.mxu0 0
        %4267 = vmatpush1.bf16.msra.mxu0 %v3868
        %4268 = vmatprep.subr.bf16.mxu0 0
        %4269 = vmatpush1.bf16.msra.mxu0 %v3869
        %4270 = vmatprep.subr.bf16.mxu0 0
        %4271 = vmatpush1.bf16.msra.mxu0 0
        %4272 = vmatprep.subr.bf16.mxu0 0
        %4273 = vmatpush1.bf16.msra.mxu0 0
        %4274 = vmatprep.subr.bf16.mxu0 0
        %4275 = vmatpush1.bf16.msra.mxu0 0
        %4276 = vmatprep.subr.bf16.mxu0 0
        %4277 = vmatpush1.bf16.msra.mxu0 0
        %4278 = vmatprep.subr.bf16.mxu0 0
        %4279 = vmatpush1.bf16.msra.mxu0 0
        %4280 = vmatprep.subr.bf16.mxu0 0
        %4281 = vmatpush1.bf16.msra.mxu0 0
        %4282 = vmatprep.mubr.bf16.mxu0 %v4248
        %4283 = vmatmul.mubr.bf16.gmra.mrb[0].mxu0 %v4245
        %v4284 = vpop.f32.mrb[0].mxu0
        %v4285 = vadd.f32 0.0, %v4284
        %v4286 = vpop.f32.mrb[0].mxu0
        %v4287 = vpop.f32.mrb[0].mxu0
        %v4288 = vadd.f32 0.0, %v4287
        %v4289 = vpop.f32.mrb[0].mxu0
        %4290 = vdwg.mxu0
        %v4291 = vadd.f32 %v4243, %v4285
        %v4292 = vadd.f32 %v4244, %v4288
        %v4293 = vld [vmem:[%s2299] sm:$0xff]
        %v4294 = vld [vmem:[%s2299 + $0x8] sm:$0xff]
        %v4296 = vsel %vm624, %v4294, 0
        %4298 = vmatprep.subr.bf16.mxu0 0
        %4299 = vmatpush1.bf16.msra.mxu0 %v3989
        %4300 = vmatprep.subr.bf16.mxu0 0
        %4301 = vmatpush1.bf16.msra.mxu0 %v3990
        %4302 = vmatprep.subr.bf16.mxu0 0
        %4303 = vmatpush1.bf16.msra.mxu0 %v3991
        %4304 = vmatprep.subr.bf16.mxu0 0
        %4305 = vmatpush1.bf16.msra.mxu0 %v3992
        %4306 = vmatprep.subr.bf16.mxu0 0
        %4307 = vmatpush1.bf16.msra.mxu0 %v3993
        %4308 = vmatprep.subr.bf16.mxu0 0
        %4309 = vmatpush1.bf16.msra.mxu0 %v3994
        %4310 = vmatprep.subr.bf16.mxu0 0
        %4311 = vmatpush1.bf16.msra.mxu0 %v3995
        %4312 = vmatprep.subr.bf16.mxu0 0
        %4313 = vmatpush1.bf16.msra.mxu0 %v3996
        %4314 = vmatprep.subr.bf16.mxu0 0
        %4315 = vmatpush1.bf16.msra.mxu0 %v3997
        %4316 = vmatprep.subr.bf16.mxu0 0
        %4317 = vmatpush1.bf16.msra.mxu0 %v3998
        %4318 = vmatprep.subr.bf16.mxu0 0
        %4319 = vmatpush1.bf16.msra.mxu0 0
        %4320 = vmatprep.subr.bf16.mxu0 0
        %4321 = vmatpush1.bf16.msra.mxu0 0
        %4322 = vmatprep.subr.bf16.mxu0 0
        %4323 = vmatpush1.bf16.msra.mxu0 0
        %4324 = vmatprep.subr.bf16.mxu0 0
        %4325 = vmatpush1.bf16.msra.mxu0 0
        %4326 = vmatprep.subr.bf16.mxu0 0
        %4327 = vmatpush1.bf16.msra.mxu0 0
        %4328 = vmatprep.subr.bf16.mxu0 0
        %4329 = vmatpush1.bf16.msra.mxu0 0
        %4330 = vmatprep.mubr.bf16.mxu0 %v4296
        %4331 = vmatmul.mubr.bf16.gmra.mrb[0].mxu0 %v4293
        %v4332 = vpop.f32.mrb[0].mxu0
        %v4333 = vadd.f32 0.0, %v4332
        %v4334 = vpop.f32.mrb[0].mxu0
        %v4335 = vpop.f32.mrb[0].mxu0
        %v4336 = vadd.f32 0.0, %v4335
        %v4337 = vpop.f32.mrb[0].mxu0
        %4338 = vdwg.mxu0
        %v4339 = vadd.f32 %v4291, %v4333
        %v4340 = vadd.f32 %v4292, %v4336
        %4343 = vrot.lane.b32.xlu0 %v4339, 80
        %v4344 = vpop.permute.xlu0 %4343
        %4345 = vrot.lane.b32.xlu0 %v4340, 80
        %v4346 = vpop.permute.xlu0 %4345
        %v4349 = vmax.f32 %v4339, %v4344
        %v4350 = vmax.f32 %v4340, %v4346
        %v4353 = vrot.slane %v4349, 4
        %v4354 = vrot.slane %v4350, 4
        %v4357 = vmax.f32 %v4349, %v4353
        %v4358 = vmax.f32 %v4350, %v4354
        %v4359 = vadd.f32 %v4357, %v286
        %v4360 = vadd.f32 %v4358, %v286
        %v4361 = vmax.f32 %v4359, 0.0
        %v4362 = vmax.f32 %v4360, 0.0
        %4363 = vmatprep.subr.bf16.mxu0 0
        %4364 = vmatpush1.bf16.msra.mxu0 %v3371
        %4365 = vmatprep.subr.bf16.mxu0 0
        %4366 = vmatpush1.bf16.msra.mxu0 %v3372
        %4367 = vmatprep.subr.bf16.mxu0 0
        %4368 = vmatpush1.bf16.msra.mxu0 %v3373
        %4369 = vmatprep.subr.bf16.mxu0 0
        %4370 = vmatpush1.bf16.msra.mxu0 %v3374
        %4371 = vmatprep.subr.bf16.mxu0 0
        %4372 = vmatpush1.bf16.msra.mxu0 %v3375
        %4373 = vmatprep.subr.bf16.mxu0 0
        %4374 = vmatpush1.bf16.msra.mxu0 %v3376
        %4375 = vmatprep.subr.bf16.mxu0 0
        %4376 = vmatpush1.bf16.msra.mxu0 %v3377
        %4377 = vmatprep.subr.bf16.mxu0 0
        %4378 = vmatpush1.bf16.msra.mxu0 %v3378
        %4379 = vmatprep.subr.bf16.mxu0 0
        %4380 = vmatpush1.bf16.msra.mxu0 %v3379
        %4381 = vmatprep.subr.bf16.mxu0 0
        %4382 = vmatpush1.bf16.msra.mxu0 %v3380
        %4383 = vmatprep.subr.bf16.mxu0 0
        %4384 = vmatpush1.bf16.msra.mxu0 0
        %4385 = vmatprep.subr.bf16.mxu0 0
        %4386 = vmatpush1.bf16.msra.mxu0 0
        %4387 = vmatprep.subr.bf16.mxu0 0
        %4388 = vmatpush1.bf16.msra.mxu0 0
        %4389 = vmatprep.subr.bf16.mxu0 0
        %4390 = vmatpush1.bf16.msra.mxu0 0
        %4391 = vmatprep.subr.bf16.mxu0 0
        %4392 = vmatpush1.bf16.msra.mxu0 0
        %4393 = vmatprep.subr.bf16.mxu0 0
        %4394 = vmatpush1.bf16.msra.mxu0 0
        %4395 = vmatprep.mubr.bf16.mxu0 %v4010
        %4396 = vmatmul.mubr.bf16.gmra.mrb[0].mxu0 %v3926
        %v4397 = vpop.f32.mrb[0].mxu0
        %v4398 = vadd.f32 0.0, %v4397
        %v4399 = vpop.f32.mrb[0].mxu0
        %v4400 = vpop.f32.mrb[0].mxu0
        %v4401 = vadd.f32 0.0, %v4400
        %v4402 = vpop.f32.mrb[0].mxu0
        %4403 = vdwg.mxu0
        %4404 = vmatprep.subr.bf16.mxu0 0
        %4405 = vmatpush1.bf16.msra.mxu0 %v3475
        %4406 = vmatprep.subr.bf16.mxu0 0
        %4407 = vmatpush1.bf16.msra.mxu0 %v3476
        %4408 = vmatprep.subr.bf16.mxu0 0
        %4409 = vmatpush1.bf16.msra.mxu0 %v3477
        %4410 = vmatprep.subr.bf16.mxu0 0
        %4411 = vmatpush1.bf16.msra.mxu0 %v3478
        %4412 = vmatprep.subr.bf16.mxu0 0
        %4413 = vmatpush1.bf16.msra.mxu0 %v3479
        %4414 = vmatprep.subr.bf16.mxu0 0
        %4415 = vmatpush1.bf16.msra.mxu0 %v3480
        %4416 = vmatprep.subr.bf16.mxu0 0
        %4417 = vmatpush1.bf16.msra.mxu0 %v3481
        %4418 = vmatprep.subr.bf16.mxu0 0
        %4419 = vmatpush1.bf16.msra.mxu0 %v3482
        %4420 = vmatprep.subr.bf16.mxu0 0
        %4421 = vmatpush1.bf16.msra.mxu0 %v3483
        %4422 = vmatprep.subr.bf16.mxu0 0
        %4423 = vmatpush1.bf16.msra.mxu0 %v3484
        %4424 = vmatprep.subr.bf16.mxu0 0
        %4425 = vmatpush1.bf16.msra.mxu0 0
        %4426 = vmatprep.subr.bf16.mxu0 0
        %4427 = vmatpush1.bf16.msra.mxu0 0
        %4428 = vmatprep.subr.bf16.mxu0 0
        %4429 = vmatpush1.bf16.msra.mxu0 0
        %4430 = vmatprep.subr.bf16.mxu0 0
        %4431 = vmatpush1.bf16.msra.mxu0 0
        %4432 = vmatprep.subr.bf16.mxu0 0
        %4433 = vmatpush1.bf16.msra.mxu0 0
        %4434 = vmatprep.subr.bf16.mxu0 0
        %4435 = vmatpush1.bf16.msra.mxu0 0
        %4436 = vmatprep.mubr.bf16.mxu0 %v3881
        %4437 = vmatmul.mubr.bf16.gmra.mrb[0].mxu0 %v3797
        %v4438 = vpop.f32.mrb[0].mxu0
        %v4439 = vadd.f32 %v4398, %v4438
        %v4440 = vpop.f32.mrb[0].mxu0
        %v4441 = vpop.f32.mrb[0].mxu0
        %v4442 = vadd.f32 %v4401, %v4441
        %v4443 = vpop.f32.mrb[0].mxu0
        %4444 = vdwg.mxu0
        %4445 = vmatprep.subr.bf16.mxu0 0
        %4446 = vmatpush1.bf16.msra.mxu0 %v3602
        %4447 = vmatprep.subr.bf16.mxu0 0
        %4448 = vmatpush1.bf16.msra.mxu0 %v3603
        %4449 = vmatprep.subr.bf16.mxu0 0
        %4450 = vmatpush1.bf16.msra.mxu0 %v3604
        %4451 = vmatprep.subr.bf16.mxu0 0
        %4452 = vmatpush1.bf16.msra.mxu0 %v3605
        %4453 = vmatprep.subr.bf16.mxu0 0
        %4454 = vmatpush1.bf16.msra.mxu0 %v3606
        %4455 = vmatprep.subr.bf16.mxu0 0
        %4456 = vmatpush1.bf16.msra.mxu0 %v3607
        %4457 = vmatprep.subr.bf16.mxu0 0
        %4458 = vmatpush1.bf16.msra.mxu0 %v3608
        %4459 = vmatprep.subr.bf16.mxu0 0
        %4460 = vmatpush1.bf16.msra.mxu0 %v3609
        %4461 = vmatprep.subr.bf16.mxu0 0
        %4462 = vmatpush1.bf16.msra.mxu0 %v3610
        %4463 = vmatprep.subr.bf16.mxu0 0
        %4464 = vmatpush1.bf16.msra.mxu0 %v3611
        %4465 = vmatprep.subr.bf16.mxu0 0
        %4466 = vmatpush1.bf16.msra.mxu0 0
        %4467 = vmatprep.subr.bf16.mxu0 0
        %4468 = vmatpush1.bf16.msra.mxu0 0
        %4469 = vmatprep.subr.bf16.mxu0 0
        %4470 = vmatpush1.bf16.msra.mxu0 0
        %4471 = vmatprep.subr.bf16.mxu0 0
        %4472 = vmatpush1.bf16.msra.mxu0 0
        %4473 = vmatprep.subr.bf16.mxu0 0
        %4474 = vmatpush1.bf16.msra.mxu0 0
        %4475 = vmatprep.subr.bf16.mxu0 0
        %4476 = vmatpush1.bf16.msra.mxu0 0
        %4477 = vmatprep.mubr.bf16.mxu0 %v4248
        %4478 = vmatmul.mubr.bf16.gmra.mrb[0].mxu0 %v4245
        %v4479 = vpop.f32.mrb[0].mxu0
        %v4480 = vadd.f32 0.0, %v4479
        %v4481 = vpop.f32.mrb[0].mxu0
        %v4482 = vpop.f32.mrb[0].mxu0
        %v4483 = vadd.f32 0.0, %v4482
        %v4484 = vpop.f32.mrb[0].mxu0
        %4485 = vdwg.mxu0
        %v4486 = vadd.f32 %v4439, %v4480
        %v4487 = vadd.f32 %v4442, %v4483
        %4488 = vmatprep.subr.bf16.mxu0 0
        %4489 = vmatpush1.bf16.msra.mxu0 %v3731
        %4490 = vmatprep.subr.bf16.mxu0 0
        %4491 = vmatpush1.bf16.msra.mxu0 %v3732
        %4492 = vmatprep.subr.bf16.mxu0 0
        %4493 = vmatpush1.bf16.msra.mxu0 %v3733
        %4494 = vmatprep.subr.bf16.mxu0 0
        %4495 = vmatpush1.bf16.msra.mxu0 %v3734
        %4496 = vmatprep.subr.bf16.mxu0 0
        %4497 = vmatpush1.bf16.msra.mxu0 %v3735
        %4498 = vmatprep.subr.bf16.mxu0 0
        %4499 = vmatpush1.bf16.msra.mxu0 %v3736
        %4500 = vmatprep.subr.bf16.mxu0 0
        %4501 = vmatpush1.bf16.msra.mxu0 %v3737
        %4502 = vmatprep.subr.bf16.mxu0 0
        %4503 = vmatpush1.bf16.msra.mxu0 %v3738
        %4504 = vmatprep.subr.bf16.mxu0 0
        %4505 = vmatpush1.bf16.msra.mxu0 %v3739
        %4506 = vmatprep.subr.bf16.mxu0 0
        %4507 = vmatpush1.bf16.msra.mxu0 %v3740
        %4508 = vmatprep.subr.bf16.mxu0 0
        %4509 = vmatpush1.bf16.msra.mxu0 0
        %4510 = vmatprep.subr.bf16.mxu0 0
        %4511 = vmatpush1.bf16.msra.mxu0 0
        %4512 = vmatprep.subr.bf16.mxu0 0
        %4513 = vmatpush1.bf16.msra.mxu0 0
        %4514 = vmatprep.subr.bf16.mxu0 0
        %4515 = vmatpush1.bf16.msra.mxu0 0
        %4516 = vmatprep.subr.bf16.mxu0 0
        %4517 = vmatpush1.bf16.msra.mxu0 0
        %4518 = vmatprep.subr.bf16.mxu0 0
        %4519 = vmatpush1.bf16.msra.mxu0 0
        %4520 = vmatprep.mubr.bf16.mxu0 %v4296
        %4521 = vmatmul.mubr.bf16.gmra.mrb[0].mxu0 %v4293
        %v4522 = vpop.f32.mrb[0].mxu0
        %v4523 = vadd.f32 0.0, %v4522
        %v4524 = vpop.f32.mrb[0].mxu0
        %v4525 = vpop.f32.mrb[0].mxu0
        %v4526 = vadd.f32 0.0, %v4525
        %v4527 = vpop.f32.mrb[0].mxu0
        %4528 = vdwg.mxu0
        %v4529 = vadd.f32 %v4486, %v4523
        %v4530 = vadd.f32 %v4487, %v4526
        %v4531 = vld [vmem:[%s2672] sm:$0xff]
        %v4532 = vld [vmem:[%s2672 + $0x8] sm:$0xff]
        %v4534 = vsel %vm624, %v4532, 0
        %4536 = vmatprep.subr.bf16.mxu0 0
        %4537 = vmatpush1.bf16.msra.mxu0 %v3860
        %4538 = vmatprep.subr.bf16.mxu0 0
        %4539 = vmatpush1.bf16.msra.mxu0 %v3861
        %4540 = vmatprep.subr.bf16.mxu0 0
        %4541 = vmatpush1.bf16.msra.mxu0 %v3862
        %4542 = vmatprep.subr.bf16.mxu0 0
        %4543 = vmatpush1.bf16.msra.mxu0 %v3863
        %4544 = vmatprep.subr.bf16.mxu0 0
        %4545 = vmatpush1.bf16.msra.mxu0 %v3864
        %4546 = vmatprep.subr.bf16.mxu0 0
        %4547 = vmatpush1.bf16.msra.mxu0 %v3865
        %4548 = vmatprep.subr.bf16.mxu0 0
        %4549 = vmatpush1.bf16.msra.mxu0 %v3866
        %4550 = vmatprep.subr.bf16.mxu0 0
        %4551 = vmatpush1.bf16.msra.mxu0 %v3867
        %4552 = vmatprep.subr.bf16.mxu0 0
        %4553 = vmatpush1.bf16.msra.mxu0 %v3868
        %4554 = vmatprep.subr.bf16.mxu0 0
        %4555 = vmatpush1.bf16.msra.mxu0 %v3869
        %4556 = vmatprep.subr.bf16.mxu0 0
        %4557 = vmatpush1.bf16.msra.mxu0 0
        %4558 = vmatprep.subr.bf16.mxu0 0
        %4559 = vmatpush1.bf16.msra.mxu0 0
        %4560 = vmatprep.subr.bf16.mxu0 0
        %4561 = vmatpush1.bf16.msra.mxu0 0
        %4562 = vmatprep.subr.bf16.mxu0 0
        %4563 = vmatpush1.bf16.msra.mxu0 0
        %4564 = vmatprep.subr.bf16.mxu0 0
        %4565 = vmatpush1.bf16.msra.mxu0 0
        %4566 = vmatprep.subr.bf16.mxu0 0
        %4567 = vmatpush1.bf16.msra.mxu0 0
        %4568 = vmatprep.mubr.bf16.mxu0 %v4534
        %4569 = vmatmul.mubr.bf16.gmra.mrb[0].mxu0 %v4531
        %v4570 = vpop.f32.mrb[0].mxu0
        %v4571 = vadd.f32 0.0, %v4570
        %v4572 = vpop.f32.mrb[0].mxu0
        %v4573 = vpop.f32.mrb[0].mxu0
        %v4574 = vadd.f32 0.0, %v4573
        %v4575 = vpop.f32.mrb[0].mxu0
        %4576 = vdwg.mxu0
        %v4577 = vadd.f32 %v4529, %v4571
        %v4578 = vadd.f32 %v4530, %v4574
        %v4579 = vld [vmem:[%s2791] sm:$0xff]
        %v4580 = vld [vmem:[%s2791 + $0x8] sm:$0xff]
        %v4582 = vsel %vm624, %v4580, 0
        %4584 = vmatprep.subr.bf16.mxu0 0
        %4585 = vmatpush1.bf16.msra.mxu0 %v3989
        %4586 = vmatprep.subr.bf16.mxu0 0
        %4587 = vmatpush1.bf16.msra.mxu0 %v3990
        %4588 = vmatprep.subr.bf16.mxu0 0
        %4589 = vmatpush1.bf16.msra.mxu0 %v3991
        %4590 = vmatprep.subr.bf16.mxu0 0
        %4591 = vmatpush1.bf16.msra.mxu0 %v3992
        %4592 = vmatprep.subr.bf16.mxu0 0
        %4593 = vmatpush1.bf16.msra.mxu0 %v3993
        %4594 = vmatprep.subr.bf16.mxu0 0
        %4595 = vmatpush1.bf16.msra.mxu0 %v3994
        %4596 = vmatprep.subr.bf16.mxu0 0
        %4597 = vmatpush1.bf16.msra.mxu0 %v3995
        %4598 = vmatprep.subr.bf16.mxu0 0
        %4599 = vmatpush1.bf16.msra.mxu0 %v3996
        %4600 = vmatprep.subr.bf16.mxu0 0
        %4601 = vmatpush1.bf16.msra.mxu0 %v3997
        %4602 = vmatprep.subr.bf16.mxu0 0
        %4603 = vmatpush1.bf16.msra.mxu0 %v3998
        %4604 = vmatprep.subr.bf16.mxu0 0
        %4605 = vmatpush1.bf16.msra.mxu0 0
        %4606 = vmatprep.subr.bf16.mxu0 0
        %4607 = vmatpush1.bf16.msra.mxu0 0
        %4608 = vmatprep.subr.bf16.mxu0 0
        %4609 = vmatpush1.bf16.msra.mxu0 0
        %4610 = vmatprep.subr.bf16.mxu0 0
        %4611 = vmatpush1.bf16.msra.mxu0 0
        %4612 = vmatprep.subr.bf16.mxu0 0
        %4613 = vmatpush1.bf16.msra.mxu0 0
        %4614 = vmatprep.subr.bf16.mxu0 0
        %4615 = vmatpush1.bf16.msra.mxu0 0
        %4616 = vmatprep.mubr.bf16.mxu0 %v4582
        %4617 = vmatmul.mubr.bf16.gmra.mrb[0].mxu0 %v4579
        %v4618 = vpop.f32.mrb[0].mxu0
        %v4619 = vadd.f32 0.0, %v4618
        %v4620 = vpop.f32.mrb[0].mxu0
        %v4621 = vpop.f32.mrb[0].mxu0
        %v4622 = vadd.f32 0.0, %v4621
        %v4623 = vpop.f32.mrb[0].mxu0
        %4624 = vdwg.mxu0
        %v4625 = vadd.f32 %v4577, %v4619
        %v4626 = vadd.f32 %v4578, %v4622
        %4629 = vrot.lane.b32.xlu0 %v4625, 80
        %v4630 = vpop.permute.xlu0 %4629
        %4631 = vrot.lane.b32.xlu0 %v4626, 80
        %v4632 = vpop.permute.xlu0 %4631
        %v4635 = vmax.f32 %v4625, %v4630
        %v4636 = vmax.f32 %v4626, %v4632
        %v4639 = vrot.slane %v4635, 4
        %v4640 = vrot.slane %v4636, 4
        %v4643 = vmax.f32 %v4635, %v4639
        %v4644 = vmax.f32 %v4636, %v4640
        %v4645 = vadd.f32 %v4643, %v286
        %v4646 = vadd.f32 %v4644, %v286
        %v4647 = vmax.f32 %v4645, 0.0
        %v4648 = vmax.f32 %v4646, 0.0
        %4649 = vmatprep.subr.bf16.mxu0 0
        %4650 = vmatpush1.bf16.msra.mxu0 %v3371
        %4651 = vmatprep.subr.bf16.mxu0 0
        %4652 = vmatpush1.bf16.msra.mxu0 %v3372
        %4653 = vmatprep.subr.bf16.mxu0 0
        %4654 = vmatpush1.bf16.msra.mxu0 %v3373
        %4655 = vmatprep.subr.bf16.mxu0 0
        %4656 = vmatpush1.bf16.msra.mxu0 %v3374
        %4657 = vmatprep.subr.bf16.mxu0 0
        %4658 = vmatpush1.bf16.msra.mxu0 %v3375
        %4659 = vmatprep.subr.bf16.mxu0 0
        %4660 = vmatpush1.bf16.msra.mxu0 %v3376
        %4661 = vmatprep.subr.bf16.mxu0 0
        %4662 = vmatpush1.bf16.msra.mxu0 %v3377
        %4663 = vmatprep.subr.bf16.mxu0 0
        %4664 = vmatpush1.bf16.msra.mxu0 %v3378
        %4665 = vmatprep.subr.bf16.mxu0 0
        %4666 = vmatpush1.bf16.msra.mxu0 %v3379
        %4667 = vmatprep.subr.bf16.mxu0 0
        %4668 = vmatpush1.bf16.msra.mxu0 %v3380
        %4669 = vmatprep.subr.bf16.mxu0 0
        %4670 = vmatpush1.bf16.msra.mxu0 0
        %4671 = vmatprep.subr.bf16.mxu0 0
        %4672 = vmatpush1.bf16.msra.mxu0 0
        %4673 = vmatprep.subr.bf16.mxu0 0
        %4674 = vmatpush1.bf16.msra.mxu0 0
        %4675 = vmatprep.subr.bf16.mxu0 0
        %4676 = vmatpush1.bf16.msra.mxu0 0
        %4677 = vmatprep.subr.bf16.mxu0 0
        %4678 = vmatpush1.bf16.msra.mxu0 0
        %4679 = vmatprep.subr.bf16.mxu0 0
        %4680 = vmatpush1.bf16.msra.mxu0 0
        %4681 = vmatprep.mubr.bf16.mxu0 %v4296
        %4682 = vmatmul.mubr.bf16.gmra.mrb[0].mxu0 %v4293
        %v4683 = vpop.f32.mrb[0].mxu0
        %v4684 = vadd.f32 0.0, %v4683
        %v4685 = vpop.f32.mrb[0].mxu0
        %v4686 = vpop.f32.mrb[0].mxu0
        %v4687 = vadd.f32 0.0, %v4686
        %v4688 = vpop.f32.mrb[0].mxu0
        %4689 = vdwg.mxu0
        %4690 = vmatprep.subr.bf16.mxu0 0
        %4691 = vmatpush1.bf16.msra.mxu0 %v3475
        %4692 = vmatprep.subr.bf16.mxu0 0
        %4693 = vmatpush1.bf16.msra.mxu0 %v3476
        %4694 = vmatprep.subr.bf16.mxu0 0
        %4695 = vmatpush1.bf16.msra.mxu0 %v3477
        %4696 = vmatprep.subr.bf16.mxu0 0
        %4697 = vmatpush1.bf16.msra.mxu0 %v3478
        %4698 = vmatprep.subr.bf16.mxu0 0
        %4699 = vmatpush1.bf16.msra.mxu0 %v3479
        %4700 = vmatprep.subr.bf16.mxu0 0
        %4701 = vmatpush1.bf16.msra.mxu0 %v3480
        %4702 = vmatprep.subr.bf16.mxu0 0
        %4703 = vmatpush1.bf16.msra.mxu0 %v3481
        %4704 = vmatprep.subr.bf16.mxu0 0
        %4705 = vmatpush1.bf16.msra.mxu0 %v3482
        %4706 = vmatprep.subr.bf16.mxu0 0
        %4707 = vmatpush1.bf16.msra.mxu0 %v3483
        %4708 = vmatprep.subr.bf16.mxu0 0
        %4709 = vmatpush1.bf16.msra.mxu0 %v3484
        %4710 = vmatprep.subr.bf16.mxu0 0
        %4711 = vmatpush1.bf16.msra.mxu0 0
        %4712 = vmatprep.subr.bf16.mxu0 0
        %4713 = vmatpush1.bf16.msra.mxu0 0
        %4714 = vmatprep.subr.bf16.mxu0 0
        %4715 = vmatpush1.bf16.msra.mxu0 0
        %4716 = vmatprep.subr.bf16.mxu0 0
        %4717 = vmatpush1.bf16.msra.mxu0 0
        %4718 = vmatprep.subr.bf16.mxu0 0
        %4719 = vmatpush1.bf16.msra.mxu0 0
        %4720 = vmatprep.subr.bf16.mxu0 0
        %4721 = vmatpush1.bf16.msra.mxu0 0
        %4722 = vmatprep.mubr.bf16.mxu0 %v4248
        %4723 = vmatmul.mubr.bf16.gmra.mrb[0].mxu0 %v4245
        %v4724 = vpop.f32.mrb[0].mxu0
        %v4725 = vadd.f32 %v4684, %v4724
        %v4726 = vpop.f32.mrb[0].mxu0
        %v4727 = vpop.f32.mrb[0].mxu0
        %v4728 = vadd.f32 %v4687, %v4727
        %v4729 = vpop.f32.mrb[0].mxu0
        %4730 = vdwg.mxu0
        %4731 = vmatprep.subr.bf16.mxu0 0
        %4732 = vmatpush1.bf16.msra.mxu0 %v3602
        %4733 = vmatprep.subr.bf16.mxu0 0
        %4734 = vmatpush1.bf16.msra.mxu0 %v3603
        %4735 = vmatprep.subr.bf16.mxu0 0
        %4736 = vmatpush1.bf16.msra.mxu0 %v3604
        %4737 = vmatprep.subr.bf16.mxu0 0
        %4738 = vmatpush1.bf16.msra.mxu0 %v3605
        %4739 = vmatprep.subr.bf16.mxu0 0
        %4740 = vmatpush1.bf16.msra.mxu0 %v3606
        %4741 = vmatprep.subr.bf16.mxu0 0
        %4742 = vmatpush1.bf16.msra.mxu0 %v3607
        %4743 = vmatprep.subr.bf16.mxu0 0
        %4744 = vmatpush1.bf16.msra.mxu0 %v3608
        %4745 = vmatprep.subr.bf16.mxu0 0
        %4746 = vmatpush1.bf16.msra.mxu0 %v3609
        %4747 = vmatprep.subr.bf16.mxu0 0
        %4748 = vmatpush1.bf16.msra.mxu0 %v3610
        %4749 = vmatprep.subr.bf16.mxu0 0
        %4750 = vmatpush1.bf16.msra.mxu0 %v3611
        %4751 = vmatprep.subr.bf16.mxu0 0
        %4752 = vmatpush1.bf16.msra.mxu0 0
        %4753 = vmatprep.subr.bf16.mxu0 0
        %4754 = vmatpush1.bf16.msra.mxu0 0
        %4755 = vmatprep.subr.bf16.mxu0 0
        %4756 = vmatpush1.bf16.msra.mxu0 0
        %4757 = vmatprep.subr.bf16.mxu0 0
        %4758 = vmatpush1.bf16.msra.mxu0 0
        %4759 = vmatprep.subr.bf16.mxu0 0
        %4760 = vmatpush1.bf16.msra.mxu0 0
        %4761 = vmatprep.subr.bf16.mxu0 0
        %4762 = vmatpush1.bf16.msra.mxu0 0
        %4763 = vmatprep.mubr.bf16.mxu0 %v4534
        %4764 = vmatmul.mubr.bf16.gmra.mrb[0].mxu0 %v4531
        %v4765 = vpop.f32.mrb[0].mxu0
        %v4766 = vadd.f32 0.0, %v4765
        %v4767 = vpop.f32.mrb[0].mxu0
        %v4768 = vpop.f32.mrb[0].mxu0
        %v4769 = vadd.f32 0.0, %v4768
        %v4770 = vpop.f32.mrb[0].mxu0
        %4771 = vdwg.mxu0
        %v4772 = vadd.f32 %v4725, %v4766
        %v4773 = vadd.f32 %v4728, %v4769
        %4774 = vmatprep.subr.bf16.mxu0 0
        %4775 = vmatpush1.bf16.msra.mxu0 %v3731
        %4776 = vmatprep.subr.bf16.mxu0 0
        %4777 = vmatpush1.bf16.msra.mxu0 %v3732
        %4778 = vmatprep.subr.bf16.mxu0 0
        %4779 = vmatpush1.bf16.msra.mxu0 %v3733
        %4780 = vmatprep.subr.bf16.mxu0 0
        %4781 = vmatpush1.bf16.msra.mxu0 %v3734
        %4782 = vmatprep.subr.bf16.mxu0 0
        %4783 = vmatpush1.bf16.msra.mxu0 %v3735
        %4784 = vmatprep.subr.bf16.mxu0 0
        %4785 = vmatpush1.bf16.msra.mxu0 %v3736
        %4786 = vmatprep.subr.bf16.mxu0 0
        %4787 = vmatpush1.bf16.msra.mxu0 %v3737
        %4788 = vmatprep.subr.bf16.mxu0 0
        %4789 = vmatpush1.bf16.msra.mxu0 %v3738
        %4790 = vmatprep.subr.bf16.mxu0 0
        %4791 = vmatpush1.bf16.msra.mxu0 %v3739
        %4792 = vmatprep.subr.bf16.mxu0 0
        %4793 = vmatpush1.bf16.msra.mxu0 %v3740
        %4794 = vmatprep.subr.bf16.mxu0 0
        %4795 = vmatpush1.bf16.msra.mxu0 0
        %4796 = vmatprep.subr.bf16.mxu0 0
        %4797 = vmatpush1.bf16.msra.mxu0 0
        %4798 = vmatprep.subr.bf16.mxu0 0
        %4799 = vmatpush1.bf16.msra.mxu0 0
        %4800 = vmatprep.subr.bf16.mxu0 0
        %4801 = vmatpush1.bf16.msra.mxu0 0
        %4802 = vmatprep.subr.bf16.mxu0 0
        %4803 = vmatpush1.bf16.msra.mxu0 0
        %4804 = vmatprep.subr.bf16.mxu0 0
        %4805 = vmatpush1.bf16.msra.mxu0 0
        %4806 = vmatprep.mubr.bf16.mxu0 %v4582
        %4807 = vmatmul.mubr.bf16.gmra.mrb[0].mxu0 %v4579
        %v4808 = vpop.f32.mrb[0].mxu0
        %v4809 = vadd.f32 0.0, %v4808
        %v4810 = vpop.f32.mrb[0].mxu0
        %v4811 = vpop.f32.mrb[0].mxu0
        %v4812 = vadd.f32 0.0, %v4811
        %v4813 = vpop.f32.mrb[0].mxu0
        %4814 = vdwg.mxu0
        %v4815 = vadd.f32 %v4772, %v4809
        %v4816 = vadd.f32 %v4773, %v4812
        %v4817 = vld [vmem:[%s3164] sm:$0xff]
        %v4818 = vld [vmem:[%s3164 + $0x8] sm:$0xff]
        %v4820 = vsel %vm624, %v4818, 0
        %4822 = vmatprep.subr.bf16.mxu0 0
        %4823 = vmatpush1.bf16.msra.mxu0 %v3860
        %4824 = vmatprep.subr.bf16.mxu0 0
        %4825 = vmatpush1.bf16.msra.mxu0 %v3861
        %4826 = vmatprep.subr.bf16.mxu0 0
        %4827 = vmatpush1.bf16.msra.mxu0 %v3862
        %4828 = vmatprep.subr.bf16.mxu0 0
        %4829 = vmatpush1.bf16.msra.mxu0 %v3863
        %4830 = vmatprep.subr.bf16.mxu0 0
        %4831 = vmatpush1.bf16.msra.mxu0 %v3864
        %4832 = vmatprep.subr.bf16.mxu0 0
        %4833 = vmatpush1.bf16.msra.mxu0 %v3865
        %4834 = vmatprep.subr.bf16.mxu0 0
        %4835 = vmatpush1.bf16.msra.mxu0 %v3866
        %4836 = vmatprep.subr.bf16.mxu0 0
        %4837 = vmatpush1.bf16.msra.mxu0 %v3867
        %4838 = vmatprep.subr.bf16.mxu0 0
        %4839 = vmatpush1.bf16.msra.mxu0 %v3868
        %4840 = vmatprep.subr.bf16.mxu0 0
        %4841 = vmatpush1.bf16.msra.mxu0 %v3869
        %4842 = vmatprep.subr.bf16.mxu0 0
        %4843 = vmatpush1.bf16.msra.mxu0 0
        %4844 = vmatprep.subr.bf16.mxu0 0
        %4845 = vmatpush1.bf16.msra.mxu0 0
        %4846 = vmatprep.subr.bf16.mxu0 0
        %4847 = vmatpush1.bf16.msra.mxu0 0
        %4848 = vmatprep.subr.bf16.mxu0 0
        %4849 = vmatpush1.bf16.msra.mxu0 0
        %4850 = vmatprep.subr.bf16.mxu0 0
        %4851 = vmatpush1.bf16.msra.mxu0 0
        %4852 = vmatprep.subr.bf16.mxu0 0
        %4853 = vmatpush1.bf16.msra.mxu0 0
        %4854 = vmatprep.mubr.bf16.mxu0 %v4820
        %4855 = vmatmul.mubr.bf16.gmra.mrb[0].mxu0 %v4817
        %v4856 = vpop.f32.mrb[0].mxu0
        %v4857 = vadd.f32 0.0, %v4856
        %v4858 = vpop.f32.mrb[0].mxu0
        %v4859 = vpop.f32.mrb[0].mxu0
        %v4860 = vadd.f32 0.0, %v4859
        %v4861 = vpop.f32.mrb[0].mxu0
        %4862 = vdwg.mxu0
        %v4863 = vadd.f32 %v4815, %v4857
        %v4864 = vadd.f32 %v4816, %v4860
        %v4865 = vld [vmem:[%s3283] sm:$0xff]
        %v4866 = vld [vmem:[%s3283 + $0x8] sm:$0xff]
        %v4868 = vsel %vm624, %v4866, 0
        %4870 = vmatprep.subr.bf16.mxu0 0
        %4871 = vmatpush1.bf16.msra.mxu0 %v3989
        %4872 = vmatprep.subr.bf16.mxu0 0
        %4873 = vmatpush1.bf16.msra.mxu0 %v3990
        %4874 = vmatprep.subr.bf16.mxu0 0
        %4875 = vmatpush1.bf16.msra.mxu0 %v3991
        %4876 = vmatprep.subr.bf16.mxu0 0
        %4877 = vmatpush1.bf16.msra.mxu0 %v3992
        %4878 = vmatprep.subr.bf16.mxu0 0
        %4879 = vmatpush1.bf16.msra.mxu0 %v3993
        %4880 = vmatprep.subr.bf16.mxu0 0
        %4881 = vmatpush1.bf16.msra.mxu0 %v3994
        %4882 = vmatprep.subr.bf16.mxu0 0
        %4883 = vmatpush1.bf16.msra.mxu0 %v3995
        %4884 = vmatprep.subr.bf16.mxu0 0
        %4885 = vmatpush1.bf16.msra.mxu0 %v3996
        %4886 = vmatprep.subr.bf16.mxu0 0
        %4887 = vmatpush1.bf16.msra.mxu0 %v3997
        %4888 = vmatprep.subr.bf16.mxu0 0
        %4889 = vmatpush1.bf16.msra.mxu0 %v3998
        %4890 = vmatprep.subr.bf16.mxu0 0
        %4891 = vmatpush1.bf16.msra.mxu0 0
        %4892 = vmatprep.subr.bf16.mxu0 0
        %4893 = vmatpush1.bf16.msra.mxu0 0
        %4894 = vmatprep.subr.bf16.mxu0 0
        %4895 = vmatpush1.bf16.msra.mxu0 0
        %4896 = vmatprep.subr.bf16.mxu0 0
        %4897 = vmatpush1.bf16.msra.mxu0 0
        %4898 = vmatprep.subr.bf16.mxu0 0
        %4899 = vmatpush1.bf16.msra.mxu0 0
        %4900 = vmatprep.subr.bf16.mxu0 0
        %4901 = vmatpush1.bf16.msra.mxu0 0
        %4902 = vmatprep.mubr.bf16.mxu0 %v4868
        %4903 = vmatmul.mubr.bf16.gmra.mrb[0].mxu0 %v4865
        %v4904 = vpop.f32.mrb[0].mxu0
        %v4905 = vadd.f32 0.0, %v4904
        %v4906 = vpop.f32.mrb[0].mxu0
        %v4907 = vpop.f32.mrb[0].mxu0
        %v4908 = vadd.f32 0.0, %v4907
        %v4909 = vpop.f32.mrb[0].mxu0
        %4910 = vdwg.mxu0
        %v4911 = vadd.f32 %v4863, %v4905
        %v4912 = vadd.f32 %v4864, %v4908
        %4915 = vrot.lane.b32.xlu0 %v4911, 80
        %v4916 = vpop.permute.xlu0 %4915
        %4917 = vrot.lane.b32.xlu0 %v4912, 80
        %v4918 = vpop.permute.xlu0 %4917
        %v4921 = vmax.f32 %v4911, %v4916
        %v4922 = vmax.f32 %v4912, %v4918
        %v4925 = vrot.slane %v4921, 4
        %v4926 = vrot.slane %v4922, 4
        %v4929 = vmax.f32 %v4921, %v4925
        %v4930 = vmax.f32 %v4922, %v4926
        %v4931 = vadd.f32 %v4929, %v286
        %v4932 = vadd.f32 %v4930, %v286
        %v4933 = vmax.f32 %v4931, 0.0
        %v4934 = vmax.f32 %v4932, 0.0
        %v4937 = vrot.slane %v4361, 4
        %v4938 = vrot.slane %v4362, 4
        %v4943 = vrot.slane %v4933, 4
        %v4944 = vrot.slane %v4934, 4
        %v4947 = vsel %vm537, %v4075, %v4937
        %v4948 = vsel %vm537, %v4076, %v4938
        %v4949 = vsel %vm537, %v4647, %v4943
        %v4950 = vsel %vm537, %v4648, %v4944
        %vm4951 = vcmask 392192
        %4952 = vst.msk [vmem:[%s258] sm:$0xff] %vm4951, %v4947
        %4953 = vst.msk [vmem:[%s258 + $0x8] sm:$0xff] %vm4951, %v4949
        %4954 = vst.msk [vmem:[%s258 + $0x10] sm:$0xff] %vm4951, %v4948
        %4955 = vst.msk [vmem:[%s258 + $0x18] sm:$0xff] %vm4951, %v4950
        %s4956 = sand.u32 %s141, 1
        %s4957 = scalar_lea.sflag [#allocation5], %s4956
        %s4958 = sand.u32 %s141, 1
        %s4959 = smul.addr %s4958, 32
        %s4960 = scalar_lea.vmem [#allocation8], %s4959
        // Predicated region
        $region49: #{tpu_custom_call.1} parent=39 // pred_check
          %p4961 = pneg %p151
        $region50: #{tpu_custom_call.1} parent=39 // pred_check_branch
          %4963 = sbr.rel (%p4961) target = $region52
        $region51: #{tpu_custom_call.1} parent=39 // pred_region
          %s4964 = smul.u32 2, %s23
          %s4966 = ssub.s32 512, 512
          %4967 = vsyncadd %s4957, %s4966
          %s4968 = smul.addr %s4964, 2
          %s4969 = smul.addr %s4968, 128
          %s4970 = scalar_lea.hbm %s5, %s4969
          %s4971 = sshll.u32 %s4960, 4
          %s4972 = int_to_ptr.vmem [resolvable:$true] %s4971
          %4977 = dma.vmem_to_hbm [thread:$0]  %s4972, 512, %s4970, %s4957, 128, 128, 8
        $region52: #{tpu_custom_call.1} parent=39 // pred_fallthru
          _
      $region40: #{tpu_custom_call.1} parent=5 // pred_fallthru
        _
      %p4978 = scmp.le.s32.totalorder 2, %s18
      // Predicated region
      $region53: #{tpu_custom_call.1} parent=5 // pred_check
        %p4979 = pneg %p4978
      $region54: #{tpu_custom_call.1} parent=5 // pred_check_branch
        %4981 = sbr.rel (%p4979) target = $region56
      $region55: #{tpu_custom_call.1} parent=5 // pred_region
        %s4982 = ssub.s32 %s18, 2
        // Predicated region
        $region57: #{tpu_custom_call.1} parent=55 // pred_check
          %p4983 = pneg %p157
        $region58: #{tpu_custom_call.1} parent=55 // pred_check_branch
          %4985 = sbr.rel (%p4983) target = $region60
        $region59: #{tpu_custom_call.1} parent=55 // pred_region
          %s4986 = sand.u32 %s142, 1
          %s4987 = scalar_lea.sflag [#allocation5], %s4986
          %s4988 = sand.u32 %s142, 1
          %s4989 = smul.addr %s4988, 32
          %s4990 = scalar_lea.vmem [#allocation8], %s4989
          %4991 = dma.done %s4987, 512
        $region60: #{tpu_custom_call.1} parent=55 // pred_fallthru
          _
      $region56: #{tpu_custom_call.1} parent=5 // pred_fallthru
        _
    $region6: #{tpu_custom_call.1} parent=1 // loop_footer
      %s22 = sadd.s32 1, %s18
    $region7: #{tpu_custom_call.1} parent=1 // loop_footer_branch
      %17 = sbr.rel target = $region3
    $region8: #{tpu_custom_call.1} parent=1 // loop_exit
      _
    %4992 = vsyncpa [#allocation4], 1
    %s4993 = scalar_lea.sflag [#allocation4], 1
    %4994 = vsyncpa %s4993, 1
    %4995 = vsyncpa [#allocation7], 1
    %4996 = vsyncpa [#allocation5], 1
    %s4997 = scalar_lea.sflag [#allocation5], 1
    %4998 = vsyncpa %s4997, 1

</llo_original>
